<compile_context>
chip_gen: v7x
topology: tpu7x:2x2x1
jax: 0.10.0
libtpu: 0.0.40
codegen_flags: <defaults>
</compile_context>

<pallas_src>
import functools
import math

import jax
import jax.numpy as jnp
from jax.experimental import pallas as pl
from jax.experimental.pallas import tpu as pltpu

NEG_SLOPE = 0.01   # F.leaky_relu default negative_slope
BN_EPS = 1e-5      # nn.BatchNorm2d default eps


def _conv_out(size, k, s):
    return (size - (k - 1) - 1) // s + 1


def _leaky(x):
    # one mul + one max instead of compare+select+mul
    return jnp.maximum(x, NEG_SLOPE * x)


# ----------------------------------------------------------------------------
# Fused whole-network kernel. One grid step = TB samples.
# Activation row order everywhere is (spatial position major, sample minor),
# so every "(rows, TB, chans)" regroup is an aligned sublane split (TB % 8 == 0)
# and every conv patch is a lane-window read from a staged scratch ref.
# ----------------------------------------------------------------------------
def _dqn_fused_kernel(p1_ref, w1_ref, s1_ref, w2_ref, s2_ref, w3_ref, s3_ref,
                      wfc_ref, bfc_ref, wh_ref, bh_ref, o_ref,
                      x1_ref, x2_ref, pat2_ref, pat3_ref, ffc_ref,
                      *, tb, oh1, ow1, oh2, ow2, oh3, ow3,
                      c1, c2, c3, k2, st2, k3, st3):
    f32 = jnp.float32
    bf16 = jnp.bfloat16
    m2 = oh2 * ow2
    m3 = oh3 * ow3

    # ---- conv1 + BN + leaky: one big-M matmul over all TB samples -----------
    a1 = jnp.dot(p1_ref[...], w1_ref[...], preferred_element_type=f32)
    a1 = _leaky(a1 + s1_ref[...])                       # (oh1*ow1*tb, c1) f32
    a1v = a1.reshape(oh1, ow1, tb, c1).astype(bf16)     # aligned regroup + 1 cast
    # stage into (row, sample, width*chan) so conv2 windows are lane slices
    for ox in range(ow1):
        x1_ref[:, :, ox * c1:(ox + 1) * c1] = a1v[:, ox]

    # ---- conv2 + BN + leaky: full im2col patch matrix, one big-K matmul -----
    for oy in range(oh2):
        for ox in range(ow2):
            p = oy * ow2 + ox
            for ki in range(k2):
                pat2_ref[p * tb:(p + 1) * tb, ki * k2 * c1:(ki + 1) * k2 * c1] = (
                    x1_ref[st2 * oy + ki, :,
                           st2 * ox * c1:(st2 * ox + k2) * c1])
    a2 = jnp.dot(pat2_ref[...], w2_ref[...], preferred_element_type=f32)
    a2 = _leaky(a2 + s2_ref[...])                       # (m2*tb, c2) f32
    a2v = a2.reshape(m2, tb, c2).astype(bf16)
    for oy in range(oh2):
        for ox in range(ow2):
            x2_ref[oy, :, ox * c2:(ox + 1) * c2] = a2v[oy * ow2 + ox]

    # ---- conv3 + BN + leaky --------------------------------------------------
    for oy in range(oh3):
        for ox in range(ow3):
            p = oy * ow3 + ox
            for ki in range(k3):
                pat3_ref[p * tb:(p + 1) * tb, ki * k3 * c2:(ki + 1) * k3 * c2] = (
                    x2_ref[st3 * oy + ki, :,
                           st3 * ox * c2:(st3 * ox + k3) * c2])
    a3 = jnp.dot(pat3_ref[...], w3_ref[...], preferred_element_type=f32)
    a3 = _leaky(a3 + s3_ref[...])                       # (m3*tb, c3) f32
    a3v = a3.reshape(m3, tb, c3).astype(bf16)

    # ---- fc + leaky: flatten per-sample (NHWC order, fc rows pre-permuted) ---
    for p in range(m3):
        ffc_ref[:, p * c3:(p + 1) * c3] = a3v[p]
    h = jnp.dot(ffc_ref[...], wfc_ref[...], preferred_element_type=f32)
    h = _leaky(h + bfc_ref[...])                        # (tb, 512) f32

    # ---- head (lane-padded to 128 outputs) -----------------------------------
    out = jnp.dot(h.astype(bf16), wh_ref[...],
                  preferred_element_type=f32) + bh_ref[...]   # (tb, Np)
    o_ref[...] = out


# ----------------------------------------------------------------------------
# conv1 im2col done once in JAX on the raw input; feature order (ki, kj, ci)
# matches the pre-transposed conv1 weight matrix.
# ----------------------------------------------------------------------------
def _im2col_conv1(x_nhwc, kh, kw, stride):
    B, H, W, C = x_nhwc.shape
    oh = _conv_out(H, kh, stride)
    ow = _conv_out(W, kw, stride)
    cols = [x_nhwc[:, i:i + stride * oh:stride, j:j + stride * ow:stride, :]
            for i in range(kh) for j in range(kw)]
    patches = jnp.stack(cols, axis=3)                 # (B, oh, ow, kh*kw, C)
    return patches.reshape(B, oh * ow, kh * kw * C)


# ----------------------------------------------------------------------------
# The CNN module
# ----------------------------------------------------------------------------
class PallasCNN:
    def __init__(self, h, w, outputs, key, tile_b=8):
        assert tile_b % 8 == 0, "tile_b must be a multiple of 8 (sublane align)"
        self.tile_b = tile_b

        def u(k, shape, fan_in):
            lim = 1.0 / math.sqrt(float(fan_in))
            return jax.random.uniform(k, shape, jnp.float32, -lim, lim)

        ks = jax.random.split(key, 20)
        # conv1: 4->32 k=8 s=4 ; conv2: 32->64 k=4 s=2 ; conv3: 64->64 k=3 s=1
        self.w1 = u(ks[0], (32, 4, 8, 8), 4 * 8 * 8)
        self.b1 = u(ks[1], (32,), 4 * 8 * 8)
        self.w2 = u(ks[2], (64, 32, 4, 4), 32 * 4 * 4)
        self.b2 = u(ks[3], (64,), 32 * 4 * 4)
        self.w3 = u(ks[4], (64, 64, 3, 3), 64 * 3 * 3)
        self.b3 = u(ks[5], (64,), 64 * 3 * 3)

        def bn(kg, kb, km, kv, c):
            gamma = 1.0 + 0.1 * jax.random.normal(kg, (c,), jnp.float32)
            beta = 0.1 * jax.random.normal(kb, (c,), jnp.float32)
            mean = 0.1 * jax.random.normal(km, (c,), jnp.float32)
            var = jax.random.uniform(kv, (c,), jnp.float32, 0.5, 1.5)
            return gamma, beta, mean, var

        self.bn1 = bn(ks[6], ks[7], ks[8], ks[9], 32)
        self.bn2 = bn(ks[10], ks[11], ks[12], ks[13], 64)
        self.bn3 = bn(ks[14], ks[15], ks[16], ks[17], 64)

        oh1, ow1 = _conv_out(h, 8, 4), _conv_out(w, 8, 4)
        oh2, ow2 = _conv_out(oh1, 4, 2), _conv_out(ow1, 4, 2)
        oh3, ow3 = _conv_out(oh2, 3, 1), _conv_out(ow2, 3, 1)
        self.spatial = (oh1, ow1, oh2, ow2, oh3, ow3)
        lin_in = oh3 * ow3 * 64
        self.outputs = outputs

        kfcw, kfcb, khw, khb = jax.random.split(jax.random.fold_in(key, 77), 4)
        self.fc_w_pt = u(kfcw, (512, lin_in), lin_in)   # PyTorch layout (out, in)
        self.fc_b = u(kfcb, (512,), lin_in)
        self.head_w_pt = u(khw, (outputs, 512), 512)
        self.head_b = u(khb, (outputs,), 512)

        self._prepare_kernel_params()

    # One-time weight preprocessing: fold BN scale, transpose to (K, N),
    # permute fc rows to NHWC-flatten order, pad head to 128 lanes, cast bf16.
    def _prepare_kernel_params(self):
        oh1, ow1, oh2, ow2, oh3, ow3 = self.spatial
        f32, bf16 = jnp.float32, jnp.bfloat16

        def fold_conv(w_oihw, bias, bn_params):
            gamma, beta, mean, var = bn_params
            scale = gamma / jnp.sqrt(var + BN_EPS)               # (Cout,)
            cout, cin, kh, kw = w_oihw.shape
            wmat = jnp.transpose(w_oihw, (2, 3, 1, 0)).reshape(kh * kw * cin, cout)
            wmat = (wmat * scale[None, :]).astype(bf16)
            shift = (scale * (bias - mean) + beta).reshape(1, cout).astype(f32)
            return wmat, shift

        self.w1m, self.s1 = fold_conv(self.w1, self.b1, self.bn1)
        self.w2m, self.s2 = fold_conv(self.w2, self.b2, self.bn2)
        self.w3m, self.s3 = fold_conv(self.w3, self.b3, self.bn3)

        # fc: permute input dim from NCHW-flatten (c, p) to NHWC-flatten (p, c)
        m3, c3 = oh3 * ow3, 64
        wfc = self.fc_w_pt.reshape(512, c3, m3)
        self.wfc_k = jnp.transpose(wfc, (2, 1, 0)).reshape(m3 * c3, 512).astype(bf16)
        self.bfc_k = self.fc_b.reshape(1, 512).astype(f32)

        n_out = self.outputs
        n_pad = ((n_out + 127) // 128) * 128
        self.n_pad = n_pad
        wh = jnp.zeros((512, n_pad), f32).at[:, :n_out].set(self.head_w_pt.T)
        self.wh_k = wh.astype(bf16)
        self.bh_k = jnp.zeros((1, n_pad), f32).at[:, :n_out].set(self.head_b)

    def __call__(self, x_nchw):
        oh1, ow1, oh2, ow2, oh3, ow3 = self.spatial
        c1, c2, c3 = 32, 64, 64
        k2, st2, k3, st3 = 4, 2, 3, 1
        m2, m3 = oh2 * ow2, oh3 * ow3
        M1, K1 = oh1 * ow1, 8 * 8 * 4
        K2, K3 = k2 * k2 * c1, k3 * k3 * c2
        Np = self.n_pad
        TB = self.tile_b

        B = x_nchw.shape[0]
        B_pad = ((B + TB - 1) // TB) * TB
        ntiles = B_pad // TB

        # NCHW (PyTorch) -> NHWC, pad batch, conv1 im2col directly on raw input.
        x = jnp.transpose(x_nchw.astype(jnp.float32), (0, 2, 3, 1))
        if B_pad != B:
            x = jnp.pad(x, ((0, B_pad - B), (0, 0), (0, 0), (0, 0)))
        p1 = _im2col_conv1(x, 8, 8, 4)                       # (B_pad, M1, K1)
        # per-tile row order = (spatial position major, sample minor)
        p1 = p1.reshape(ntiles, TB, M1, K1).transpose(0, 2, 1, 3)
        p1 = p1.reshape(ntiles * M1 * TB, K1).astype(jnp.bfloat16)

        kernel = functools.partial(
            _dqn_fused_kernel,
            tb=TB, oh1=oh1, ow1=ow1, oh2=oh2, ow2=ow2, oh3=oh3, ow3=ow3,
            c1=c1, c2=c2, c3=c3, k2=k2, st2=st2, k3=k3, st3=st3)

        weight_args = (self.w1m, self.s1, self.w2m, self.s2, self.w3m, self.s3,
                       self.wfc_k, self.bfc_k, self.wh_k, self.bh_k)
        w_bytes = sum(int(a.size) * a.dtype.itemsize for a in weight_args)

        flops = 2 * B_pad * (M1 * K1 * c1
                             + m2 * K2 * c2
                             + m3 * K3 * c3
                             + (m3 * c3) * 512
                             + 512 * Np)
        bytes_accessed = int(p1.size) * 2 + w_bytes + B_pad * Np * 4

        scratch_bytes = 2 * (oh1 * TB * ow1 * c1 + oh2 * TB * ow2 * c2
                             + m2 * TB * K2 + m3 * TB * K3 + TB * m3 * c3)
        block_bytes = 2 * (TB * M1 * K1 * 2 + TB * Np * 4)   # double-buffered I/O
        vmem_limit = int(min(48 * 2 ** 20,
                             max(8 * 2 ** 20,
                                 4 * (block_bytes + 2 * w_bytes + scratch_bytes))))

        def const_spec(arr):
            return pl.BlockSpec(arr.shape, lambda t: (0,) * arr.ndim)

        out = pl.pallas_call(
            kernel,
            out_shape=jax.ShapeDtypeStruct((B_pad, Np), jnp.float32),
            grid=(ntiles,),
            in_specs=[
                pl.BlockSpec((TB * M1, K1), lambda t: (t, 0)),
                const_spec(self.w1m), const_spec(self.s1),
                const_spec(self.w2m), const_spec(self.s2),
                const_spec(self.w3m), const_spec(self.s3),
                const_spec(self.wfc_k), const_spec(self.bfc_k),
                const_spec(self.wh_k), const_spec(self.bh_k),
            ],
            out_specs=pl.BlockSpec((TB, Np), lambda t: (t, 0)),
            scratch_shapes=[
                pltpu.VMEM((oh1, TB, ow1 * c1), jnp.bfloat16),   # staged conv1 act
                pltpu.VMEM((oh2, TB, ow2 * c2), jnp.bfloat16),   # staged conv2 act
                pltpu.VMEM((m2 * TB, K2), jnp.bfloat16),         # conv2 patch matrix
                pltpu.VMEM((m3 * TB, K3), jnp.bfloat16),         # conv3 patch matrix
                pltpu.VMEM((TB, m3 * c3), jnp.bfloat16),         # fc input
            ],
            compiler_params=pltpu.CompilerParams(
                dimension_semantics=("parallel",),
                vmem_limit_bytes=vmem_limit),
            cost_estimate=pl.CostEstimate(
                flops=int(flops), transcendentals=0,
                bytes_accessed=int(bytes_accessed)),
        )(p1, *weight_args)
        return out[:B, :self.outputs]


# ----------------------------------------------------------------------------
# Pure-JAX (f32) reference, mirroring the PyTorch forward, for validation.
# ----------------------------------------------------------------------------
def _reference_forward(x_nchw, m):
    f32 = jnp.float32

    def conv_bn(x, w, b, bn_params, stride):
        gamma, beta, mean, var = bn_params
        y = jax.lax.conv_general_dilated(
            x, w.astype(f32), window_strides=(stride, stride), padding="VALID",
            dimension_numbers=("NCHW", "OIHW", "NCHW"),
            precision=jax.lax.Precision.HIGHEST)
        y = y + b[None, :, None, None]
        y = (y - mean[None, :, None, None]) / jnp.sqrt(var[None, :, None, None] + BN_EPS)
        y = gamma[None, :, None, None] * y + beta[None, :, None, None]
        return jnp.where(y >= 0, y, NEG_SLOPE * y)

    x = conv_bn(x_nchw.astype(f32), m.w1, m.b1, m.bn1, 4)
    x = conv_bn(x, m.w2, m.b2, m.bn2, 2)
    x = conv_bn(x, m.w3, m.b3, m.bn3, 1)
    flat = x.reshape(x.shape[0], -1)                      # NCHW flatten
    h = flat @ m.fc_w_pt.T + m.fc_b
    h = jnp.where(h >= 0, h, NEG_SLOPE * h)
    return h @ m.head_w_pt.T + m.head_b


if __name__ == "__main__":
    key = jax.random.PRNGKey(0)
    B, C, H, W = 10, 4, 36, 36      # 36 -> 8 -> 3 -> 1 spatial through the convs
    outputs = 6

    model = PallasCNN(H, W, outputs, key)
    x = jax.random.normal(jax.random.fold_in(key, 999), (B, C, H, W), jnp.float32)

    fwd = jax.jit(model.__call__)
    y = jax.block_until_ready(fwd(x))
    assert y.shape == (B, outputs), y.shape
    assert bool(jnp.all(jnp.isfinite(y)))

    y_ref = jax.block_until_ready(_reference_forward(x, model))
    # bf16 MXU inputs vs f32 reference -> loose-but-meaningful tolerance.
    assert bool(jnp.allclose(y, y_ref, rtol=5e-2, atol=5e-2)), (
        float(jnp.max(jnp.abs(y - y_ref))))

    print("KERNEL_OK")
</pallas_src>

<mosaic_0001>
module attributes {stable_mosaic.version = 11 : i64} {
  func.func @_dqn_fused_kernel(%arg0: i32, %arg1: memref<512x256xbf16, #tpu.memory_space<vmem>>, %arg2: memref<256x32xbf16, #tpu.memory_space<vmem>>, %arg3: memref<1x32xf32, #tpu.memory_space<vmem>>, %arg4: memref<512x64xbf16, #tpu.memory_space<vmem>>, %arg5: memref<1x64xf32, #tpu.memory_space<vmem>>, %arg6: memref<576x64xbf16, #tpu.memory_space<vmem>>, %arg7: memref<1x64xf32, #tpu.memory_space<vmem>>, %arg8: memref<64x512xbf16, #tpu.memory_space<vmem>>, %arg9: memref<1x512xf32, #tpu.memory_space<vmem>>, %arg10: memref<512x128xbf16, #tpu.memory_space<vmem>>, %arg11: memref<1x128xf32, #tpu.memory_space<vmem>>, %arg12: memref<8x128xf32, #tpu.memory_space<vmem>>, %arg13: memref<8x8x256xbf16, #tpu.memory_space<vmem>>, %arg14: memref<3x8x192xbf16, #tpu.memory_space<vmem>>, %arg15: memref<72x512xbf16, #tpu.memory_space<vmem>>, %arg16: memref<8x576xbf16, #tpu.memory_space<vmem>>, %arg17: memref<8x64xbf16, #tpu.memory_space<vmem>>) attributes {dimension_semantics = [#tpu.dimension_semantics<parallel>], iteration_bounds = array<i64: 2>, scalar_prefetch = 0 : i64, scratch_operands = 5 : i64, tpu.core_type = #tpu.core_type<tc>, window_params = [{transform_indices = @transform_0, window_bounds = array<i64: 512, 256>}, {pipeline_mode = #tpu.pipeline_mode<synchronous>, transform_indices = @transform_1, window_bounds = array<i64: 256, 32>}, {pipeline_mode = #tpu.pipeline_mode<synchronous>, transform_indices = @transform_2, window_bounds = array<i64: 1, 32>}, {pipeline_mode = #tpu.pipeline_mode<synchronous>, transform_indices = @transform_3, window_bounds = array<i64: 512, 64>}, {pipeline_mode = #tpu.pipeline_mode<synchronous>, transform_indices = @transform_4, window_bounds = array<i64: 1, 64>}, {pipeline_mode = #tpu.pipeline_mode<synchronous>, transform_indices = @transform_5, window_bounds = array<i64: 576, 64>}, {pipeline_mode = #tpu.pipeline_mode<synchronous>, transform_indices = @transform_6, window_bounds = array<i64: 1, 64>}, {pipeline_mode = #tpu.pipeline_mode<synchronous>, transform_indices = @transform_7, window_bounds = array<i64: 64, 512>}, {pipeline_mode = #tpu.pipeline_mode<synchronous>, transform_indices = @transform_8, window_bounds = array<i64: 1, 512>}, {pipeline_mode = #tpu.pipeline_mode<synchronous>, transform_indices = @transform_9, window_bounds = array<i64: 512, 128>}, {pipeline_mode = #tpu.pipeline_mode<synchronous>, transform_indices = @transform_10, window_bounds = array<i64: 1, 128>}, {transform_indices = @transform_11, window_bounds = array<i64: 8, 128>}]} {
    %c0 = arith.constant 0 : index
    %c0_0 = arith.constant 0 : index
    %0 = vector.load %arg1[%c0, %c0_0] : memref<512x256xbf16, #tpu.memory_space<vmem>>, vector<512x256xbf16>
    %c0_1 = arith.constant 0 : index
    %c0_2 = arith.constant 0 : index
    %1 = vector.load %arg2[%c0_1, %c0_2] : memref<256x32xbf16, #tpu.memory_space<vmem>>, vector<256x32xbf16>
    %cst = arith.constant dense<0.000000e+00> : vector<512x32xf32>
    %2 = tpu.matmul %0, %1, %cst {dimension_numbers = #tpu.dot_dimension_numbers<[1], [0], [0], [1], [0, 0, 1, 1], [], []>} : vector<512x256xbf16>, vector<256x32xbf16>, vector<512x32xf32> -> vector<512x32xf32>
    %c0_3 = arith.constant 0 : index
    %c0_4 = arith.constant 0 : index
    %3 = vector.load %arg3[%c0_3, %c0_4] : memref<1x32xf32, #tpu.memory_space<vmem>>, vector<1x32xf32>
    %4 = vector.broadcast %3 : vector<1x32xf32> to vector<512x32xf32>
    %5 = arith.addf %2, %4 : vector<512x32xf32>
    %cst_5 = arith.constant 0.00999999977 : f32
    %6 = vector.broadcast %cst_5 : f32 to vector<512x32xf32>
    %7 = arith.mulf %6, %5 : vector<512x32xf32>
    %8 = arith.maximumf %5, %7 : vector<512x32xf32>
    %9 = vector.shape_cast %8 : vector<512x32xf32> to vector<8x8x8x32xf32>
    %10 = arith.truncf %9 : vector<8x8x8x32xf32> to vector<8x8x8x32xbf16>
    %11 = vector.extract_strided_slice %10 {offsets = [0, 0, 0, 0], sizes = [8, 1, 8, 32], strides = [1, 1, 1, 1]} : vector<8x8x8x32xbf16> to vector<8x1x8x32xbf16>
    %12 = vector.shape_cast %11 : vector<8x1x8x32xbf16> to vector<8x8x32xbf16>
    %c0_6 = arith.constant 0 : index
    %c0_7 = arith.constant 0 : index
    %c0_8 = arith.constant 0 : index
    %13 = vector.load %arg13[%c0_6, %c0_7, %c0_8] : memref<8x8x256xbf16, #tpu.memory_space<vmem>>, vector<8x8x32xbf16>
    tpu.vector_store %arg13[%c0_6, %c0_7, %c0_8], %12 {strides = array<i32>} : memref<8x8x256xbf16, #tpu.memory_space<vmem>>, vector<8x8x32xbf16>,
    %14 = vector.extract_strided_slice %10 {offsets = [0, 1, 0, 0], sizes = [8, 1, 8, 32], strides = [1, 1, 1, 1]} : vector<8x8x8x32xbf16> to vector<8x1x8x32xbf16>
    %15 = vector.shape_cast %14 : vector<8x1x8x32xbf16> to vector<8x8x32xbf16>
    %c0_9 = arith.constant 0 : index
    %c0_10 = arith.constant 0 : index
    %c32 = arith.constant 32 : index
    %16 = vector.load %arg13[%c0_9, %c0_10, %c32] : memref<8x8x256xbf16, #tpu.memory_space<vmem>>, vector<8x8x32xbf16>
    tpu.vector_store %arg13[%c0_9, %c0_10, %c32], %15 {strides = array<i32>} : memref<8x8x256xbf16, #tpu.memory_space<vmem>>, vector<8x8x32xbf16>,
    %17 = vector.extract_strided_slice %10 {offsets = [0, 2, 0, 0], sizes = [8, 1, 8, 32], strides = [1, 1, 1, 1]} : vector<8x8x8x32xbf16> to vector<8x1x8x32xbf16>
    %18 = vector.shape_cast %17 : vector<8x1x8x32xbf16> to vector<8x8x32xbf16>
    %c0_11 = arith.constant 0 : index
    %c0_12 = arith.constant 0 : index
    %c64 = arith.constant 64 : index
    %19 = vector.load %arg13[%c0_11, %c0_12, %c64] : memref<8x8x256xbf16, #tpu.memory_space<vmem>>, vector<8x8x32xbf16>
    tpu.vector_store %arg13[%c0_11, %c0_12, %c64], %18 {strides = array<i32>} : memref<8x8x256xbf16, #tpu.memory_space<vmem>>, vector<8x8x32xbf16>,
    %20 = vector.extract_strided_slice %10 {offsets = [0, 3, 0, 0], sizes = [8, 1, 8, 32], strides = [1, 1, 1, 1]} : vector<8x8x8x32xbf16> to vector<8x1x8x32xbf16>
    %21 = vector.shape_cast %20 : vector<8x1x8x32xbf16> to vector<8x8x32xbf16>
    %c0_13 = arith.constant 0 : index
    %c0_14 = arith.constant 0 : index
    %c96 = arith.constant 96 : index
    %22 = vector.load %arg13[%c0_13, %c0_14, %c96] : memref<8x8x256xbf16, #tpu.memory_space<vmem>>, vector<8x8x32xbf16>
    tpu.vector_store %arg13[%c0_13, %c0_14, %c96], %21 {strides = array<i32>} : memref<8x8x256xbf16, #tpu.memory_space<vmem>>, vector<8x8x32xbf16>,
    %23 = vector.extract_strided_slice %10 {offsets = [0, 4, 0, 0], sizes = [8, 1, 8, 32], strides = [1, 1, 1, 1]} : vector<8x8x8x32xbf16> to vector<8x1x8x32xbf16>
    %24 = vector.shape_cast %23 : vector<8x1x8x32xbf16> to vector<8x8x32xbf16>
    %c0_15 = arith.constant 0 : index
    %c0_16 = arith.constant 0 : index
    %c128 = arith.constant 128 : index
    %25 = vector.load %arg13[%c0_15, %c0_16, %c128] : memref<8x8x256xbf16, #tpu.memory_space<vmem>>, vector<8x8x32xbf16>
    tpu.vector_store %arg13[%c0_15, %c0_16, %c128], %24 {strides = array<i32>} : memref<8x8x256xbf16, #tpu.memory_space<vmem>>, vector<8x8x32xbf16>,
    %26 = vector.extract_strided_slice %10 {offsets = [0, 5, 0, 0], sizes = [8, 1, 8, 32], strides = [1, 1, 1, 1]} : vector<8x8x8x32xbf16> to vector<8x1x8x32xbf16>
    %27 = vector.shape_cast %26 : vector<8x1x8x32xbf16> to vector<8x8x32xbf16>
    %c0_17 = arith.constant 0 : index
    %c0_18 = arith.constant 0 : index
    %c160 = arith.constant 160 : index
    %28 = vector.load %arg13[%c0_17, %c0_18, %c160] : memref<8x8x256xbf16, #tpu.memory_space<vmem>>, vector<8x8x32xbf16>
    tpu.vector_store %arg13[%c0_17, %c0_18, %c160], %27 {strides = array<i32>} : memref<8x8x256xbf16, #tpu.memory_space<vmem>>, vector<8x8x32xbf16>,
    %29 = vector.extract_strided_slice %10 {offsets = [0, 6, 0, 0], sizes = [8, 1, 8, 32], strides = [1, 1, 1, 1]} : vector<8x8x8x32xbf16> to vector<8x1x8x32xbf16>
    %30 = vector.shape_cast %29 : vector<8x1x8x32xbf16> to vector<8x8x32xbf16>
    %c0_19 = arith.constant 0 : index
    %c0_20 = arith.constant 0 : index
    %c192 = arith.constant 192 : index
    %31 = vector.load %arg13[%c0_19, %c0_20, %c192] : memref<8x8x256xbf16, #tpu.memory_space<vmem>>, vector<8x8x32xbf16>
    tpu.vector_store %arg13[%c0_19, %c0_20, %c192], %30 {strides = array<i32>} : memref<8x8x256xbf16, #tpu.memory_space<vmem>>, vector<8x8x32xbf16>,
    %32 = vector.extract_strided_slice %10 {offsets = [0, 7, 0, 0], sizes = [8, 1, 8, 32], strides = [1, 1, 1, 1]} : vector<8x8x8x32xbf16> to vector<8x1x8x32xbf16>
    %33 = vector.shape_cast %32 : vector<8x1x8x32xbf16> to vector<8x8x32xbf16>
    %c0_21 = arith.constant 0 : index
    %c0_22 = arith.constant 0 : index
    %c224 = arith.constant 224 : index
    %34 = vector.load %arg13[%c0_21, %c0_22, %c224] : memref<8x8x256xbf16, #tpu.memory_space<vmem>>, vector<8x8x32xbf16>
    tpu.vector_store %arg13[%c0_21, %c0_22, %c224], %33 {strides = array<i32>} : memref<8x8x256xbf16, #tpu.memory_space<vmem>>, vector<8x8x32xbf16>,
    %c0_23 = arith.constant 0 : index
    %c0_24 = arith.constant 0 : index
    %c0_25 = arith.constant 0 : index
    %35 = vector.load %arg13[%c0_23, %c0_24, %c0_25] : memref<8x8x256xbf16, #tpu.memory_space<vmem>>, vector<1x8x128xbf16>
    %36 = vector.shape_cast %35 : vector<1x8x128xbf16> to vector<8x128xbf16>
    %c0_26 = arith.constant 0 : index
    %c0_27 = arith.constant 0 : index
    %37 = vector.load %arg15[%c0_26, %c0_27] : memref<72x512xbf16, #tpu.memory_space<vmem>>, vector<8x128xbf16>
    tpu.vector_store %arg15[%c0_26, %c0_27], %36 {strides = array<i32>} : memref<72x512xbf16, #tpu.memory_space<vmem>>, vector<8x128xbf16>,
    %c1 = arith.constant 1 : index
    %c0_28 = arith.constant 0 : index
    %c0_29 = arith.constant 0 : index
    %38 = vector.load %arg13[%c1, %c0_28, %c0_29] : memref<8x8x256xbf16, #tpu.memory_space<vmem>>, vector<1x8x128xbf16>
    %39 = vector.shape_cast %38 : vector<1x8x128xbf16> to vector<8x128xbf16>
    %c0_30 = arith.constant 0 : index
    %c128_31 = arith.constant 128 : index
    %40 = vector.load %arg15[%c0_30, %c128_31] : memref<72x512xbf16, #tpu.memory_space<vmem>>, vector<8x128xbf16>
    tpu.vector_store %arg15[%c0_30, %c128_31], %39 {strides = array<i32>} : memref<72x512xbf16, #tpu.memory_space<vmem>>, vector<8x128xbf16>,
    %c2 = arith.constant 2 : index
    %c0_32 = arith.constant 0 : index
    %c0_33 = arith.constant 0 : index
    %41 = vector.load %arg13[%c2, %c0_32, %c0_33] : memref<8x8x256xbf16, #tpu.memory_space<vmem>>, vector<1x8x128xbf16>
    %42 = vector.shape_cast %41 : vector<1x8x128xbf16> to vector<8x128xbf16>
    %c0_34 = arith.constant 0 : index
    %c256 = arith.constant 256 : index
    %43 = vector.load %arg15[%c0_34, %c256] : memref<72x512xbf16, #tpu.memory_space<vmem>>, vector<8x128xbf16>
    tpu.vector_store %arg15[%c0_34, %c256], %42 {strides = array<i32>} : memref<72x512xbf16, #tpu.memory_space<vmem>>, vector<8x128xbf16>,
    %c3 = arith.constant 3 : index
    %c0_35 = arith.constant 0 : index
    %c0_36 = arith.constant 0 : index
    %44 = vector.load %arg13[%c3, %c0_35, %c0_36] : memref<8x8x256xbf16, #tpu.memory_space<vmem>>, vector<1x8x128xbf16>
    %45 = vector.shape_cast %44 : vector<1x8x128xbf16> to vector<8x128xbf16>
    %c0_37 = arith.constant 0 : index
    %c384 = arith.constant 384 : index
    %46 = vector.load %arg15[%c0_37, %c384] : memref<72x512xbf16, #tpu.memory_space<vmem>>, vector<8x128xbf16>
    tpu.vector_store %arg15[%c0_37, %c384], %45 {strides = array<i32>} : memref<72x512xbf16, #tpu.memory_space<vmem>>, vector<8x128xbf16>,
    %c0_38 = arith.constant 0 : index
    %c0_39 = arith.constant 0 : index
    %c64_40 = arith.constant 64 : index
    %47 = vector.load %arg13[%c0_38, %c0_39, %c64_40] : memref<8x8x256xbf16, #tpu.memory_space<vmem>>, vector<1x8x128xbf16>
    %48 = vector.shape_cast %47 : vector<1x8x128xbf16> to vector<8x128xbf16>
    %c8 = arith.constant 8 : index
    %c0_41 = arith.constant 0 : index
    %49 = vector.load %arg15[%c8, %c0_41] : memref<72x512xbf16, #tpu.memory_space<vmem>>, vector<8x128xbf16>
    tpu.vector_store %arg15[%c8, %c0_41], %48 {strides = array<i32>} : memref<72x512xbf16, #tpu.memory_space<vmem>>, vector<8x128xbf16>,
    %c1_42 = arith.constant 1 : index
    %c0_43 = arith.constant 0 : index
    %c64_44 = arith.constant 64 : index
    %50 = vector.load %arg13[%c1_42, %c0_43, %c64_44] : memref<8x8x256xbf16, #tpu.memory_space<vmem>>, vector<1x8x128xbf16>
    %51 = vector.shape_cast %50 : vector<1x8x128xbf16> to vector<8x128xbf16>
    %c8_45 = arith.constant 8 : index
    %c128_46 = arith.constant 128 : index
    %52 = vector.load %arg15[%c8_45, %c128_46] : memref<72x512xbf16, #tpu.memory_space<vmem>>, vector<8x128xbf16>
    tpu.vector_store %arg15[%c8_45, %c128_46], %51 {strides = array<i32>} : memref<72x512xbf16, #tpu.memory_space<vmem>>, vector<8x128xbf16>,
    %c2_47 = arith.constant 2 : index
    %c0_48 = arith.constant 0 : index
    %c64_49 = arith.constant 64 : index
    %53 = vector.load %arg13[%c2_47, %c0_48, %c64_49] : memref<8x8x256xbf16, #tpu.memory_space<vmem>>, vector<1x8x128xbf16>
    %54 = vector.shape_cast %53 : vector<1x8x128xbf16> to vector<8x128xbf16>
    %c8_50 = arith.constant 8 : index
    %c256_51 = arith.constant 256 : index
    %55 = vector.load %arg15[%c8_50, %c256_51] : memref<72x512xbf16, #tpu.memory_space<vmem>>, vector<8x128xbf16>
    tpu.vector_store %arg15[%c8_50, %c256_51], %54 {strides = array<i32>} : memref<72x512xbf16, #tpu.memory_space<vmem>>, vector<8x128xbf16>,
    %c3_52 = arith.constant 3 : index
    %c0_53 = arith.constant 0 : index
    %c64_54 = arith.constant 64 : index
    %56 = vector.load %arg13[%c3_52, %c0_53, %c64_54] : memref<8x8x256xbf16, #tpu.memory_space<vmem>>, vector<1x8x128xbf16>
    %57 = vector.shape_cast %56 : vector<1x8x128xbf16> to vector<8x128xbf16>
    %c8_55 = arith.constant 8 : index
    %c384_56 = arith.constant 384 : index
    %58 = vector.load %arg15[%c8_55, %c384_56] : memref<72x512xbf16, #tpu.memory_space<vmem>>, vector<8x128xbf16>
    tpu.vector_store %arg15[%c8_55, %c384_56], %57 {strides = array<i32>} : memref<72x512xbf16, #tpu.memory_space<vmem>>, vector<8x128xbf16>,
    %c0_57 = arith.constant 0 : index
    %c0_58 = arith.constant 0 : index
    %c128_59 = arith.constant 128 : index
    %59 = vector.load %arg13[%c0_57, %c0_58, %c128_59] : memref<8x8x256xbf16, #tpu.memory_space<vmem>>, vector<1x8x128xbf16>
    %60 = vector.shape_cast %59 : vector<1x8x128xbf16> to vector<8x128xbf16>
    %c16 = arith.constant 16 : index
    %c0_60 = arith.constant 0 : index
    %61 = vector.load %arg15[%c16, %c0_60] : memref<72x512xbf16, #tpu.memory_space<vmem>>, vector<8x128xbf16>
    tpu.vector_store %arg15[%c16, %c0_60], %60 {strides = array<i32>} : memref<72x512xbf16, #tpu.memory_space<vmem>>, vector<8x128xbf16>,
    %c1_61 = arith.constant 1 : index
    %c0_62 = arith.constant 0 : index
    %c128_63 = arith.constant 128 : index
    %62 = vector.load %arg13[%c1_61, %c0_62, %c128_63] : memref<8x8x256xbf16, #tpu.memory_space<vmem>>, vector<1x8x128xbf16>
    %63 = vector.shape_cast %62 : vector<1x8x128xbf16> to vector<8x128xbf16>
    %c16_64 = arith.constant 16 : index
    %c128_65 = arith.constant 128 : index
    %64 = vector.load %arg15[%c16_64, %c128_65] : memref<72x512xbf16, #tpu.memory_space<vmem>>, vector<8x128xbf16>
    tpu.vector_store %arg15[%c16_64, %c128_65], %63 {strides = array<i32>} : memref<72x512xbf16, #tpu.memory_space<vmem>>, vector<8x128xbf16>,
    %c2_66 = arith.constant 2 : index
    %c0_67 = arith.constant 0 : index
    %c128_68 = arith.constant 128 : index
    %65 = vector.load %arg13[%c2_66, %c0_67, %c128_68] : memref<8x8x256xbf16, #tpu.memory_space<vmem>>, vector<1x8x128xbf16>
    %66 = vector.shape_cast %65 : vector<1x8x128xbf16> to vector<8x128xbf16>
    %c16_69 = arith.constant 16 : index
    %c256_70 = arith.constant 256 : index
    %67 = vector.load %arg15[%c16_69, %c256_70] : memref<72x512xbf16, #tpu.memory_space<vmem>>, vector<8x128xbf16>
    tpu.vector_store %arg15[%c16_69, %c256_70], %66 {strides = array<i32>} : memref<72x512xbf16, #tpu.memory_space<vmem>>, vector<8x128xbf16>,
    %c3_71 = arith.constant 3 : index
    %c0_72 = arith.constant 0 : index
    %c128_73 = arith.constant 128 : index
    %68 = vector.load %arg13[%c3_71, %c0_72, %c128_73] : memref<8x8x256xbf16, #tpu.memory_space<vmem>>, vector<1x8x128xbf16>
    %69 = vector.shape_cast %68 : vector<1x8x128xbf16> to vector<8x128xbf16>
    %c16_74 = arith.constant 16 : index
    %c384_75 = arith.constant 384 : index
    %70 = vector.load %arg15[%c16_74, %c384_75] : memref<72x512xbf16, #tpu.memory_space<vmem>>, vector<8x128xbf16>
    tpu.vector_store %arg15[%c16_74, %c384_75], %69 {strides = array<i32>} : memref<72x512xbf16, #tpu.memory_space<vmem>>, vector<8x128xbf16>,
    %c2_76 = arith.constant 2 : index
    %c0_77 = arith.constant 0 : index
    %c0_78 = arith.constant 0 : index
    %71 = vector.load %arg13[%c2_76, %c0_77, %c0_78] : memref<8x8x256xbf16, #tpu.memory_space<vmem>>, vector<1x8x128xbf16>
    %72 = vector.shape_cast %71 : vector<1x8x128xbf16> to vector<8x128xbf16>
    %c24 = arith.constant 24 : index
    %c0_79 = arith.constant 0 : index
    %73 = vector.load %arg15[%c24, %c0_79] : memref<72x512xbf16, #tpu.memory_space<vmem>>, vector<8x128xbf16>
    tpu.vector_store %arg15[%c24, %c0_79], %72 {strides = array<i32>} : memref<72x512xbf16, #tpu.memory_space<vmem>>, vector<8x128xbf16>,
    %c3_80 = arith.constant 3 : index
    %c0_81 = arith.constant 0 : index
    %c0_82 = arith.constant 0 : index
    %74 = vector.load %arg13[%c3_80, %c0_81, %c0_82] : memref<8x8x256xbf16, #tpu.memory_space<vmem>>, vector<1x8x128xbf16>
    %75 = vector.shape_cast %74 : vector<1x8x128xbf16> to vector<8x128xbf16>
    %c24_83 = arith.constant 24 : index
    %c128_84 = arith.constant 128 : index
    %76 = vector.load %arg15[%c24_83, %c128_84] : memref<72x512xbf16, #tpu.memory_space<vmem>>, vector<8x128xbf16>
    tpu.vector_store %arg15[%c24_83, %c128_84], %75 {strides = array<i32>} : memref<72x512xbf16, #tpu.memory_space<vmem>>, vector<8x128xbf16>,
    %c4 = arith.constant 4 : index
    %c0_85 = arith.constant 0 : index
    %c0_86 = arith.constant 0 : index
    %77 = vector.load %arg13[%c4, %c0_85, %c0_86] : memref<8x8x256xbf16, #tpu.memory_space<vmem>>, vector<1x8x128xbf16>
    %78 = vector.shape_cast %77 : vector<1x8x128xbf16> to vector<8x128xbf16>
    %c24_87 = arith.constant 24 : index
    %c256_88 = arith.constant 256 : index
    %79 = vector.load %arg15[%c24_87, %c256_88] : memref<72x512xbf16, #tpu.memory_space<vmem>>, vector<8x128xbf16>
    tpu.vector_store %arg15[%c24_87, %c256_88], %78 {strides = array<i32>} : memref<72x512xbf16, #tpu.memory_space<vmem>>, vector<8x128xbf16>,
    %c5 = arith.constant 5 : index
    %c0_89 = arith.constant 0 : index
    %c0_90 = arith.constant 0 : index
    %80 = vector.load %arg13[%c5, %c0_89, %c0_90] : memref<8x8x256xbf16, #tpu.memory_space<vmem>>, vector<1x8x128xbf16>
    %81 = vector.shape_cast %80 : vector<1x8x128xbf16> to vector<8x128xbf16>
    %c24_91 = arith.constant 24 : index
    %c384_92 = arith.constant 384 : index
    %82 = vector.load %arg15[%c24_91, %c384_92] : memref<72x512xbf16, #tpu.memory_space<vmem>>, vector<8x128xbf16>
    tpu.vector_store %arg15[%c24_91, %c384_92], %81 {strides = array<i32>} : memref<72x512xbf16, #tpu.memory_space<vmem>>, vector<8x128xbf16>,
    %c2_93 = arith.constant 2 : index
    %c0_94 = arith.constant 0 : index
    %c64_95 = arith.constant 64 : index
    %83 = vector.load %arg13[%c2_93, %c0_94, %c64_95] : memref<8x8x256xbf16, #tpu.memory_space<vmem>>, vector<1x8x128xbf16>
    %84 = vector.shape_cast %83 : vector<1x8x128xbf16> to vector<8x128xbf16>
    %c32_96 = arith.constant 32 : index
    %c0_97 = arith.constant 0 : index
    %85 = vector.load %arg15[%c32_96, %c0_97] : memref<72x512xbf16, #tpu.memory_space<vmem>>, vector<8x128xbf16>
    tpu.vector_store %arg15[%c32_96, %c0_97], %84 {strides = array<i32>} : memref<72x512xbf16, #tpu.memory_space<vmem>>, vector<8x128xbf16>,
    %c3_98 = arith.constant 3 : index
    %c0_99 = arith.constant 0 : index
    %c64_100 = arith.constant 64 : index
    %86 = vector.load %arg13[%c3_98, %c0_99, %c64_100] : memref<8x8x256xbf16, #tpu.memory_space<vmem>>, vector<1x8x128xbf16>
    %87 = vector.shape_cast %86 : vector<1x8x128xbf16> to vector<8x128xbf16>
    %c32_101 = arith.constant 32 : index
    %c128_102 = arith.constant 128 : index
    %88 = vector.load %arg15[%c32_101, %c128_102] : memref<72x512xbf16, #tpu.memory_space<vmem>>, vector<8x128xbf16>
    tpu.vector_store %arg15[%c32_101, %c128_102], %87 {strides = array<i32>} : memref<72x512xbf16, #tpu.memory_space<vmem>>, vector<8x128xbf16>,
    %c4_103 = arith.constant 4 : index
    %c0_104 = arith.constant 0 : index
    %c64_105 = arith.constant 64 : index
    %89 = vector.load %arg13[%c4_103, %c0_104, %c64_105] : memref<8x8x256xbf16, #tpu.memory_space<vmem>>, vector<1x8x128xbf16>
    %90 = vector.shape_cast %89 : vector<1x8x128xbf16> to vector<8x128xbf16>
    %c32_106 = arith.constant 32 : index
    %c256_107 = arith.constant 256 : index
    %91 = vector.load %arg15[%c32_106, %c256_107] : memref<72x512xbf16, #tpu.memory_space<vmem>>, vector<8x128xbf16>
    tpu.vector_store %arg15[%c32_106, %c256_107], %90 {strides = array<i32>} : memref<72x512xbf16, #tpu.memory_space<vmem>>, vector<8x128xbf16>,
    %c5_108 = arith.constant 5 : index
    %c0_109 = arith.constant 0 : index
    %c64_110 = arith.constant 64 : index
    %92 = vector.load %arg13[%c5_108, %c0_109, %c64_110] : memref<8x8x256xbf16, #tpu.memory_space<vmem>>, vector<1x8x128xbf16>
    %93 = vector.shape_cast %92 : vector<1x8x128xbf16> to vector<8x128xbf16>
    %c32_111 = arith.constant 32 : index
    %c384_112 = arith.constant 384 : index
    %94 = vector.load %arg15[%c32_111, %c384_112] : memref<72x512xbf16, #tpu.memory_space<vmem>>, vector<8x128xbf16>
    tpu.vector_store %arg15[%c32_111, %c384_112], %93 {strides = array<i32>} : memref<72x512xbf16, #tpu.memory_space<vmem>>, vector<8x128xbf16>,
    %c2_113 = arith.constant 2 : index
    %c0_114 = arith.constant 0 : index
    %c128_115 = arith.constant 128 : index
    %95 = vector.load %arg13[%c2_113, %c0_114, %c128_115] : memref<8x8x256xbf16, #tpu.memory_space<vmem>>, vector<1x8x128xbf16>
    %96 = vector.shape_cast %95 : vector<1x8x128xbf16> to vector<8x128xbf16>
    %c40 = arith.constant 40 : index
    %c0_116 = arith.constant 0 : index
    %97 = vector.load %arg15[%c40, %c0_116] : memref<72x512xbf16, #tpu.memory_space<vmem>>, vector<8x128xbf16>
    tpu.vector_store %arg15[%c40, %c0_116], %96 {strides = array<i32>} : memref<72x512xbf16, #tpu.memory_space<vmem>>, vector<8x128xbf16>,
    %c3_117 = arith.constant 3 : index
    %c0_118 = arith.constant 0 : index
    %c128_119 = arith.constant 128 : index
    %98 = vector.load %arg13[%c3_117, %c0_118, %c128_119] : memref<8x8x256xbf16, #tpu.memory_space<vmem>>, vector<1x8x128xbf16>
    %99 = vector.shape_cast %98 : vector<1x8x128xbf16> to vector<8x128xbf16>
    %c40_120 = arith.constant 40 : index
    %c128_121 = arith.constant 128 : index
    %100 = vector.load %arg15[%c40_120, %c128_121] : memref<72x512xbf16, #tpu.memory_space<vmem>>, vector<8x128xbf16>
    tpu.vector_store %arg15[%c40_120, %c128_121], %99 {strides = array<i32>} : memref<72x512xbf16, #tpu.memory_space<vmem>>, vector<8x128xbf16>,
    %c4_122 = arith.constant 4 : index
    %c0_123 = arith.constant 0 : index
    %c128_124 = arith.constant 128 : index
    %101 = vector.load %arg13[%c4_122, %c0_123, %c128_124] : memref<8x8x256xbf16, #tpu.memory_space<vmem>>, vector<1x8x128xbf16>
    %102 = vector.shape_cast %101 : vector<1x8x128xbf16> to vector<8x128xbf16>
    %c40_125 = arith.constant 40 : index
    %c256_126 = arith.constant 256 : index
    %103 = vector.load %arg15[%c40_125, %c256_126] : memref<72x512xbf16, #tpu.memory_space<vmem>>, vector<8x128xbf16>
    tpu.vector_store %arg15[%c40_125, %c256_126], %102 {strides = array<i32>} : memref<72x512xbf16, #tpu.memory_space<vmem>>, vector<8x128xbf16>,
    %c5_127 = arith.constant 5 : index
    %c0_128 = arith.constant 0 : index
    %c128_129 = arith.constant 128 : index
    %104 = vector.load %arg13[%c5_127, %c0_128, %c128_129] : memref<8x8x256xbf16, #tpu.memory_space<vmem>>, vector<1x8x128xbf16>
    %105 = vector.shape_cast %104 : vector<1x8x128xbf16> to vector<8x128xbf16>
    %c40_130 = arith.constant 40 : index
    %c384_131 = arith.constant 384 : index
    %106 = vector.load %arg15[%c40_130, %c384_131] : memref<72x512xbf16, #tpu.memory_space<vmem>>, vector<8x128xbf16>
    tpu.vector_store %arg15[%c40_130, %c384_131], %105 {strides = array<i32>} : memref<72x512xbf16, #tpu.memory_space<vmem>>, vector<8x128xbf16>,
    %c4_132 = arith.constant 4 : index
    %c0_133 = arith.constant 0 : index
    %c0_134 = arith.constant 0 : index
    %107 = vector.load %arg13[%c4_132, %c0_133, %c0_134] : memref<8x8x256xbf16, #tpu.memory_space<vmem>>, vector<1x8x128xbf16>
    %108 = vector.shape_cast %107 : vector<1x8x128xbf16> to vector<8x128xbf16>
    %c48 = arith.constant 48 : index
    %c0_135 = arith.constant 0 : index
    %109 = vector.load %arg15[%c48, %c0_135] : memref<72x512xbf16, #tpu.memory_space<vmem>>, vector<8x128xbf16>
    tpu.vector_store %arg15[%c48, %c0_135], %108 {strides = array<i32>} : memref<72x512xbf16, #tpu.memory_space<vmem>>, vector<8x128xbf16>,
    %c5_136 = arith.constant 5 : index
    %c0_137 = arith.constant 0 : index
    %c0_138 = arith.constant 0 : index
    %110 = vector.load %arg13[%c5_136, %c0_137, %c0_138] : memref<8x8x256xbf16, #tpu.memory_space<vmem>>, vector<1x8x128xbf16>
    %111 = vector.shape_cast %110 : vector<1x8x128xbf16> to vector<8x128xbf16>
    %c48_139 = arith.constant 48 : index
    %c128_140 = arith.constant 128 : index
    %112 = vector.load %arg15[%c48_139, %c128_140] : memref<72x512xbf16, #tpu.memory_space<vmem>>, vector<8x128xbf16>
    tpu.vector_store %arg15[%c48_139, %c128_140], %111 {strides = array<i32>} : memref<72x512xbf16, #tpu.memory_space<vmem>>, vector<8x128xbf16>,
    %c6 = arith.constant 6 : index
    %c0_141 = arith.constant 0 : index
    %c0_142 = arith.constant 0 : index
    %113 = vector.load %arg13[%c6, %c0_141, %c0_142] : memref<8x8x256xbf16, #tpu.memory_space<vmem>>, vector<1x8x128xbf16>
    %114 = vector.shape_cast %113 : vector<1x8x128xbf16> to vector<8x128xbf16>
    %c48_143 = arith.constant 48 : index
    %c256_144 = arith.constant 256 : index
    %115 = vector.load %arg15[%c48_143, %c256_144] : memref<72x512xbf16, #tpu.memory_space<vmem>>, vector<8x128xbf16>
    tpu.vector_store %arg15[%c48_143, %c256_144], %114 {strides = array<i32>} : memref<72x512xbf16, #tpu.memory_space<vmem>>, vector<8x128xbf16>,
    %c7 = arith.constant 7 : index
    %c0_145 = arith.constant 0 : index
    %c0_146 = arith.constant 0 : index
    %116 = vector.load %arg13[%c7, %c0_145, %c0_146] : memref<8x8x256xbf16, #tpu.memory_space<vmem>>, vector<1x8x128xbf16>
    %117 = vector.shape_cast %116 : vector<1x8x128xbf16> to vector<8x128xbf16>
    %c48_147 = arith.constant 48 : index
    %c384_148 = arith.constant 384 : index
    %118 = vector.load %arg15[%c48_147, %c384_148] : memref<72x512xbf16, #tpu.memory_space<vmem>>, vector<8x128xbf16>
    tpu.vector_store %arg15[%c48_147, %c384_148], %117 {strides = array<i32>} : memref<72x512xbf16, #tpu.memory_space<vmem>>, vector<8x128xbf16>,
    %c4_149 = arith.constant 4 : index
    %c0_150 = arith.constant 0 : index
    %c64_151 = arith.constant 64 : index
    %119 = vector.load %arg13[%c4_149, %c0_150, %c64_151] : memref<8x8x256xbf16, #tpu.memory_space<vmem>>, vector<1x8x128xbf16>
    %120 = vector.shape_cast %119 : vector<1x8x128xbf16> to vector<8x128xbf16>
    %c56 = arith.constant 56 : index
    %c0_152 = arith.constant 0 : index
    %121 = vector.load %arg15[%c56, %c0_152] : memref<72x512xbf16, #tpu.memory_space<vmem>>, vector<8x128xbf16>
    tpu.vector_store %arg15[%c56, %c0_152], %120 {strides = array<i32>} : memref<72x512xbf16, #tpu.memory_space<vmem>>, vector<8x128xbf16>,
    %c5_153 = arith.constant 5 : index
    %c0_154 = arith.constant 0 : index
    %c64_155 = arith.constant 64 : index
    %122 = vector.load %arg13[%c5_153, %c0_154, %c64_155] : memref<8x8x256xbf16, #tpu.memory_space<vmem>>, vector<1x8x128xbf16>
    %123 = vector.shape_cast %122 : vector<1x8x128xbf16> to vector<8x128xbf16>
    %c56_156 = arith.constant 56 : index
    %c128_157 = arith.constant 128 : index
    %124 = vector.load %arg15[%c56_156, %c128_157] : memref<72x512xbf16, #tpu.memory_space<vmem>>, vector<8x128xbf16>
    tpu.vector_store %arg15[%c56_156, %c128_157], %123 {strides = array<i32>} : memref<72x512xbf16, #tpu.memory_space<vmem>>, vector<8x128xbf16>,
    %c6_158 = arith.constant 6 : index
    %c0_159 = arith.constant 0 : index
    %c64_160 = arith.constant 64 : index
    %125 = vector.load %arg13[%c6_158, %c0_159, %c64_160] : memref<8x8x256xbf16, #tpu.memory_space<vmem>>, vector<1x8x128xbf16>
    %126 = vector.shape_cast %125 : vector<1x8x128xbf16> to vector<8x128xbf16>
    %c56_161 = arith.constant 56 : index
    %c256_162 = arith.constant 256 : index
    %127 = vector.load %arg15[%c56_161, %c256_162] : memref<72x512xbf16, #tpu.memory_space<vmem>>, vector<8x128xbf16>
    tpu.vector_store %arg15[%c56_161, %c256_162], %126 {strides = array<i32>} : memref<72x512xbf16, #tpu.memory_space<vmem>>, vector<8x128xbf16>,
    %c7_163 = arith.constant 7 : index
    %c0_164 = arith.constant 0 : index
    %c64_165 = arith.constant 64 : index
    %128 = vector.load %arg13[%c7_163, %c0_164, %c64_165] : memref<8x8x256xbf16, #tpu.memory_space<vmem>>, vector<1x8x128xbf16>
    %129 = vector.shape_cast %128 : vector<1x8x128xbf16> to vector<8x128xbf16>
    %c56_166 = arith.constant 56 : index
    %c384_167 = arith.constant 384 : index
    %130 = vector.load %arg15[%c56_166, %c384_167] : memref<72x512xbf16, #tpu.memory_space<vmem>>, vector<8x128xbf16>
    tpu.vector_store %arg15[%c56_166, %c384_167], %129 {strides = array<i32>} : memref<72x512xbf16, #tpu.memory_space<vmem>>, vector<8x128xbf16>,
    %c4_168 = arith.constant 4 : index
    %c0_169 = arith.constant 0 : index
    %c128_170 = arith.constant 128 : index
    %131 = vector.load %arg13[%c4_168, %c0_169, %c128_170] : memref<8x8x256xbf16, #tpu.memory_space<vmem>>, vector<1x8x128xbf16>
    %132 = vector.shape_cast %131 : vector<1x8x128xbf16> to vector<8x128xbf16>
    %c64_171 = arith.constant 64 : index
    %c0_172 = arith.constant 0 : index
    %133 = vector.load %arg15[%c64_171, %c0_172] : memref<72x512xbf16, #tpu.memory_space<vmem>>, vector<8x128xbf16>
    tpu.vector_store %arg15[%c64_171, %c0_172], %132 {strides = array<i32>} : memref<72x512xbf16, #tpu.memory_space<vmem>>, vector<8x128xbf16>,
    %c5_173 = arith.constant 5 : index
    %c0_174 = arith.constant 0 : index
    %c128_175 = arith.constant 128 : index
    %134 = vector.load %arg13[%c5_173, %c0_174, %c128_175] : memref<8x8x256xbf16, #tpu.memory_space<vmem>>, vector<1x8x128xbf16>
    %135 = vector.shape_cast %134 : vector<1x8x128xbf16> to vector<8x128xbf16>
    %c64_176 = arith.constant 64 : index
    %c128_177 = arith.constant 128 : index
    %136 = vector.load %arg15[%c64_176, %c128_177] : memref<72x512xbf16, #tpu.memory_space<vmem>>, vector<8x128xbf16>
    tpu.vector_store %arg15[%c64_176, %c128_177], %135 {strides = array<i32>} : memref<72x512xbf16, #tpu.memory_space<vmem>>, vector<8x128xbf16>,
    %c6_178 = arith.constant 6 : index
    %c0_179 = arith.constant 0 : index
    %c128_180 = arith.constant 128 : index
    %137 = vector.load %arg13[%c6_178, %c0_179, %c128_180] : memref<8x8x256xbf16, #tpu.memory_space<vmem>>, vector<1x8x128xbf16>
    %138 = vector.shape_cast %137 : vector<1x8x128xbf16> to vector<8x128xbf16>
    %c64_181 = arith.constant 64 : index
    %c256_182 = arith.constant 256 : index
    %139 = vector.load %arg15[%c64_181, %c256_182] : memref<72x512xbf16, #tpu.memory_space<vmem>>, vector<8x128xbf16>
    tpu.vector_store %arg15[%c64_181, %c256_182], %138 {strides = array<i32>} : memref<72x512xbf16, #tpu.memory_space<vmem>>, vector<8x128xbf16>,
    %c7_183 = arith.constant 7 : index
    %c0_184 = arith.constant 0 : index
    %c128_185 = arith.constant 128 : index
    %140 = vector.load %arg13[%c7_183, %c0_184, %c128_185] : memref<8x8x256xbf16, #tpu.memory_space<vmem>>, vector<1x8x128xbf16>
    %141 = vector.shape_cast %140 : vector<1x8x128xbf16> to vector<8x128xbf16>
    %c64_186 = arith.constant 64 : index
    %c384_187 = arith.constant 384 : index
    %142 = vector.load %arg15[%c64_186, %c384_187] : memref<72x512xbf16, #tpu.memory_space<vmem>>, vector<8x128xbf16>
    tpu.vector_store %arg15[%c64_186, %c384_187], %141 {strides = array<i32>} : memref<72x512xbf16, #tpu.memory_space<vmem>>, vector<8x128xbf16>,
    %c0_188 = arith.constant 0 : index
    %c0_189 = arith.constant 0 : index
    %143 = vector.load %arg15[%c0_188, %c0_189] : memref<72x512xbf16, #tpu.memory_space<vmem>>, vector<72x512xbf16>
    %c0_190 = arith.constant 0 : index
    %c0_191 = arith.constant 0 : index
    %144 = vector.load %arg4[%c0_190, %c0_191] : memref<512x64xbf16, #tpu.memory_space<vmem>>, vector<512x64xbf16>
    %cst_192 = arith.constant dense<0.000000e+00> : vector<72x64xf32>
    %145 = tpu.matmul %143, %144, %cst_192 {dimension_numbers = #tpu.dot_dimension_numbers<[1], [0], [0], [1], [0, 0, 1, 1], [], []>} : vector<72x512xbf16>, vector<512x64xbf16>, vector<72x64xf32> -> vector<72x64xf32>
    %c0_193 = arith.constant 0 : index
    %c0_194 = arith.constant 0 : index
    %146 = vector.load %arg5[%c0_193, %c0_194] : memref<1x64xf32, #tpu.memory_space<vmem>>, vector<1x64xf32>
    %147 = vector.broadcast %146 : vector<1x64xf32> to vector<72x64xf32>
    %148 = arith.addf %145, %147 : vector<72x64xf32>
    %cst_195 = arith.constant 0.00999999977 : f32
    %149 = vector.broadcast %cst_195 : f32 to vector<72x64xf32>
    %150 = arith.mulf %149, %148 : vector<72x64xf32>
    %151 = arith.maximumf %148, %150 : vector<72x64xf32>
    %152 = vector.shape_cast %151 : vector<72x64xf32> to vector<9x8x64xf32>
    %153 = arith.truncf %152 : vector<9x8x64xf32> to vector<9x8x64xbf16>
    %154 = vector.extract_strided_slice %153 {offsets = [0, 0, 0], sizes = [1, 8, 64], strides = [1, 1, 1]} : vector<9x8x64xbf16> to vector<1x8x64xbf16>
    %155 = vector.shape_cast %154 : vector<1x8x64xbf16> to vector<8x64xbf16>
    %c0_196 = arith.constant 0 : index
    %c0_197 = arith.constant 0 : index
    %c0_198 = arith.constant 0 : index
    %156 = vector.load %arg14[%c0_196, %c0_197, %c0_198] : memref<3x8x192xbf16, #tpu.memory_space<vmem>>, vector<1x8x64xbf16>
    %157 = vector.shape_cast %156 : vector<1x8x64xbf16> to vector<8x64xbf16>
    %158 = vector.shape_cast %155 : vector<8x64xbf16> to vector<1x8x64xbf16>
    tpu.vector_store %arg14[%c0_196, %c0_197, %c0_198], %158 {strides = array<i32>} : memref<3x8x192xbf16, #tpu.memory_space<vmem>>, vector<1x8x64xbf16>,
    %159 = vector.extract_strided_slice %153 {offsets = [1, 0, 0], sizes = [1, 8, 64], strides = [1, 1, 1]} : vector<9x8x64xbf16> to vector<1x8x64xbf16>
    %160 = vector.shape_cast %159 : vector<1x8x64xbf16> to vector<8x64xbf16>
    %c0_199 = arith.constant 0 : index
    %c0_200 = arith.constant 0 : index
    %c64_201 = arith.constant 64 : index
    %161 = vector.load %arg14[%c0_199, %c0_200, %c64_201] : memref<3x8x192xbf16, #tpu.memory_space<vmem>>, vector<1x8x64xbf16>
    %162 = vector.shape_cast %161 : vector<1x8x64xbf16> to vector<8x64xbf16>
    %163 = vector.shape_cast %160 : vector<8x64xbf16> to vector<1x8x64xbf16>
    tpu.vector_store %arg14[%c0_199, %c0_200, %c64_201], %163 {strides = array<i32>} : memref<3x8x192xbf16, #tpu.memory_space<vmem>>, vector<1x8x64xbf16>,
    %164 = vector.extract_strided_slice %153 {offsets = [2, 0, 0], sizes = [1, 8, 64], strides = [1, 1, 1]} : vector<9x8x64xbf16> to vector<1x8x64xbf16>
    %165 = vector.shape_cast %164 : vector<1x8x64xbf16> to vector<8x64xbf16>
    %c0_202 = arith.constant 0 : index
    %c0_203 = arith.constant 0 : index
    %c128_204 = arith.constant 128 : index
    %166 = vector.load %arg14[%c0_202, %c0_203, %c128_204] : memref<3x8x192xbf16, #tpu.memory_space<vmem>>, vector<1x8x64xbf16>
    %167 = vector.shape_cast %166 : vector<1x8x64xbf16> to vector<8x64xbf16>
    %168 = vector.shape_cast %165 : vector<8x64xbf16> to vector<1x8x64xbf16>
    tpu.vector_store %arg14[%c0_202, %c0_203, %c128_204], %168 {strides = array<i32>} : memref<3x8x192xbf16, #tpu.memory_space<vmem>>, vector<1x8x64xbf16>,
    %169 = vector.extract_strided_slice %153 {offsets = [3, 0, 0], sizes = [1, 8, 64], strides = [1, 1, 1]} : vector<9x8x64xbf16> to vector<1x8x64xbf16>
    %170 = vector.shape_cast %169 : vector<1x8x64xbf16> to vector<8x64xbf16>
    %c1_205 = arith.constant 1 : index
    %c0_206 = arith.constant 0 : index
    %c0_207 = arith.constant 0 : index
    %171 = vector.load %arg14[%c1_205, %c0_206, %c0_207] : memref<3x8x192xbf16, #tpu.memory_space<vmem>>, vector<1x8x64xbf16>
    %172 = vector.shape_cast %171 : vector<1x8x64xbf16> to vector<8x64xbf16>
    %173 = vector.shape_cast %170 : vector<8x64xbf16> to vector<1x8x64xbf16>
    tpu.vector_store %arg14[%c1_205, %c0_206, %c0_207], %173 {strides = array<i32>} : memref<3x8x192xbf16, #tpu.memory_space<vmem>>, vector<1x8x64xbf16>,
    %174 = vector.extract_strided_slice %153 {offsets = [4, 0, 0], sizes = [1, 8, 64], strides = [1, 1, 1]} : vector<9x8x64xbf16> to vector<1x8x64xbf16>
    %175 = vector.shape_cast %174 : vector<1x8x64xbf16> to vector<8x64xbf16>
    %c1_208 = arith.constant 1 : index
    %c0_209 = arith.constant 0 : index
    %c64_210 = arith.constant 64 : index
    %176 = vector.load %arg14[%c1_208, %c0_209, %c64_210] : memref<3x8x192xbf16, #tpu.memory_space<vmem>>, vector<1x8x64xbf16>
    %177 = vector.shape_cast %176 : vector<1x8x64xbf16> to vector<8x64xbf16>
    %178 = vector.shape_cast %175 : vector<8x64xbf16> to vector<1x8x64xbf16>
    tpu.vector_store %arg14[%c1_208, %c0_209, %c64_210], %178 {strides = array<i32>} : memref<3x8x192xbf16, #tpu.memory_space<vmem>>, vector<1x8x64xbf16>,
    %179 = vector.extract_strided_slice %153 {offsets = [5, 0, 0], sizes = [1, 8, 64], strides = [1, 1, 1]} : vector<9x8x64xbf16> to vector<1x8x64xbf16>
    %180 = vector.shape_cast %179 : vector<1x8x64xbf16> to vector<8x64xbf16>
    %c1_211 = arith.constant 1 : index
    %c0_212 = arith.constant 0 : index
    %c128_213 = arith.constant 128 : index
    %181 = vector.load %arg14[%c1_211, %c0_212, %c128_213] : memref<3x8x192xbf16, #tpu.memory_space<vmem>>, vector<1x8x64xbf16>
    %182 = vector.shape_cast %181 : vector<1x8x64xbf16> to vector<8x64xbf16>
    %183 = vector.shape_cast %180 : vector<8x64xbf16> to vector<1x8x64xbf16>
    tpu.vector_store %arg14[%c1_211, %c0_212, %c128_213], %183 {strides = array<i32>} : memref<3x8x192xbf16, #tpu.memory_space<vmem>>, vector<1x8x64xbf16>,
    %184 = vector.extract_strided_slice %153 {offsets = [6, 0, 0], sizes = [1, 8, 64], strides = [1, 1, 1]} : vector<9x8x64xbf16> to vector<1x8x64xbf16>
    %185 = vector.shape_cast %184 : vector<1x8x64xbf16> to vector<8x64xbf16>
    %c2_214 = arith.constant 2 : index
    %c0_215 = arith.constant 0 : index
    %c0_216 = arith.constant 0 : index
    %186 = vector.load %arg14[%c2_214, %c0_215, %c0_216] : memref<3x8x192xbf16, #tpu.memory_space<vmem>>, vector<1x8x64xbf16>
    %187 = vector.shape_cast %186 : vector<1x8x64xbf16> to vector<8x64xbf16>
    %188 = vector.shape_cast %185 : vector<8x64xbf16> to vector<1x8x64xbf16>
    tpu.vector_store %arg14[%c2_214, %c0_215, %c0_216], %188 {strides = array<i32>} : memref<3x8x192xbf16, #tpu.memory_space<vmem>>, vector<1x8x64xbf16>,
    %189 = vector.extract_strided_slice %153 {offsets = [7, 0, 0], sizes = [1, 8, 64], strides = [1, 1, 1]} : vector<9x8x64xbf16> to vector<1x8x64xbf16>
    %190 = vector.shape_cast %189 : vector<1x8x64xbf16> to vector<8x64xbf16>
    %c2_217 = arith.constant 2 : index
    %c0_218 = arith.constant 0 : index
    %c64_219 = arith.constant 64 : index
    %191 = vector.load %arg14[%c2_217, %c0_218, %c64_219] : memref<3x8x192xbf16, #tpu.memory_space<vmem>>, vector<1x8x64xbf16>
    %192 = vector.shape_cast %191 : vector<1x8x64xbf16> to vector<8x64xbf16>
    %193 = vector.shape_cast %190 : vector<8x64xbf16> to vector<1x8x64xbf16>
    tpu.vector_store %arg14[%c2_217, %c0_218, %c64_219], %193 {strides = array<i32>} : memref<3x8x192xbf16, #tpu.memory_space<vmem>>, vector<1x8x64xbf16>,
    %194 = vector.extract_strided_slice %153 {offsets = [8, 0, 0], sizes = [1, 8, 64], strides = [1, 1, 1]} : vector<9x8x64xbf16> to vector<1x8x64xbf16>
    %195 = vector.shape_cast %194 : vector<1x8x64xbf16> to vector<8x64xbf16>
    %c2_220 = arith.constant 2 : index
    %c0_221 = arith.constant 0 : index
    %c128_222 = arith.constant 128 : index
    %196 = vector.load %arg14[%c2_220, %c0_221, %c128_222] : memref<3x8x192xbf16, #tpu.memory_space<vmem>>, vector<1x8x64xbf16>
    %197 = vector.shape_cast %196 : vector<1x8x64xbf16> to vector<8x64xbf16>
    %198 = vector.shape_cast %195 : vector<8x64xbf16> to vector<1x8x64xbf16>
    tpu.vector_store %arg14[%c2_220, %c0_221, %c128_222], %198 {strides = array<i32>} : memref<3x8x192xbf16, #tpu.memory_space<vmem>>, vector<1x8x64xbf16>,
    %c0_223 = arith.constant 0 : index
    %c0_224 = arith.constant 0 : index
    %c0_225 = arith.constant 0 : index
    %199 = vector.load %arg14[%c0_223, %c0_224, %c0_225] : memref<3x8x192xbf16, #tpu.memory_space<vmem>>, vector<1x8x192xbf16>
    %200 = vector.shape_cast %199 : vector<1x8x192xbf16> to vector<8x192xbf16>
    %c0_226 = arith.constant 0 : index
    %c0_227 = arith.constant 0 : index
    %201 = vector.load %arg16[%c0_226, %c0_227] : memref<8x576xbf16, #tpu.memory_space<vmem>>, vector<8x192xbf16>
    tpu.vector_store %arg16[%c0_226, %c0_227], %200 {strides = array<i32>} : memref<8x576xbf16, #tpu.memory_space<vmem>>, vector<8x192xbf16>,
    %c1_228 = arith.constant 1 : index
    %c0_229 = arith.constant 0 : index
    %c0_230 = arith.constant 0 : index
    %202 = vector.load %arg14[%c1_228, %c0_229, %c0_230] : memref<3x8x192xbf16, #tpu.memory_space<vmem>>, vector<1x8x192xbf16>
    %203 = vector.shape_cast %202 : vector<1x8x192xbf16> to vector<8x192xbf16>
    %c0_231 = arith.constant 0 : index
    %c192_232 = arith.constant 192 : index
    %204 = vector.load %arg16[%c0_231, %c192_232] : memref<8x576xbf16, #tpu.memory_space<vmem>>, vector<8x192xbf16>
    tpu.vector_store %arg16[%c0_231, %c192_232], %203 {strides = array<i32>} : memref<8x576xbf16, #tpu.memory_space<vmem>>, vector<8x192xbf16>,
    %c2_233 = arith.constant 2 : index
    %c0_234 = arith.constant 0 : index
    %c0_235 = arith.constant 0 : index
    %205 = vector.load %arg14[%c2_233, %c0_234, %c0_235] : memref<3x8x192xbf16, #tpu.memory_space<vmem>>, vector<1x8x192xbf16>
    %206 = vector.shape_cast %205 : vector<1x8x192xbf16> to vector<8x192xbf16>
    %c0_236 = arith.constant 0 : index
    %c384_237 = arith.constant 384 : index
    %207 = vector.load %arg16[%c0_236, %c384_237] : memref<8x576xbf16, #tpu.memory_space<vmem>>, vector<8x192xbf16>
    tpu.vector_store %arg16[%c0_236, %c384_237], %206 {strides = array<i32>} : memref<8x576xbf16, #tpu.memory_space<vmem>>, vector<8x192xbf16>,
    %c0_238 = arith.constant 0 : index
    %c0_239 = arith.constant 0 : index
    %208 = vector.load %arg16[%c0_238, %c0_239] : memref<8x576xbf16, #tpu.memory_space<vmem>>, vector<8x576xbf16>
    %c0_240 = arith.constant 0 : index
    %c0_241 = arith.constant 0 : index
    %209 = vector.load %arg6[%c0_240, %c0_241] : memref<576x64xbf16, #tpu.memory_space<vmem>>, vector<576x64xbf16>
    %cst_242 = arith.constant dense<0.000000e+00> : vector<8x64xf32>
    %210 = tpu.matmul %208, %209, %cst_242 {dimension_numbers = #tpu.dot_dimension_numbers<[1], [0], [0], [1], [0, 0, 1, 1], [], []>} : vector<8x576xbf16>, vector<576x64xbf16>, vector<8x64xf32> -> vector<8x64xf32>
    %c0_243 = arith.constant 0 : index
    %c0_244 = arith.constant 0 : index
    %211 = vector.load %arg7[%c0_243, %c0_244] : memref<1x64xf32, #tpu.memory_space<vmem>>, vector<1x64xf32>
    %212 = vector.broadcast %211 : vector<1x64xf32> to vector<8x64xf32>
    %213 = arith.addf %210, %212 : vector<8x64xf32>
    %cst_245 = arith.constant 0.00999999977 : f32
    %214 = vector.broadcast %cst_245 : f32 to vector<8x64xf32>
    %215 = arith.mulf %214, %213 : vector<8x64xf32>
    %216 = arith.maximumf %213, %215 : vector<8x64xf32>
    %217 = vector.shape_cast %216 : vector<8x64xf32> to vector<1x8x64xf32>
    %218 = arith.truncf %217 : vector<1x8x64xf32> to vector<1x8x64xbf16>
    %219 = vector.shape_cast %218 : vector<1x8x64xbf16> to vector<8x64xbf16>
    %c0_246 = arith.constant 0 : index
    %c0_247 = arith.constant 0 : index
    %220 = vector.load %arg17[%c0_246, %c0_247] : memref<8x64xbf16, #tpu.memory_space<vmem>>, vector<8x64xbf16>
    tpu.vector_store %arg17[%c0_246, %c0_247], %219 {strides = array<i32>} : memref<8x64xbf16, #tpu.memory_space<vmem>>, vector<8x64xbf16>,
    %c0_248 = arith.constant 0 : index
    %c0_249 = arith.constant 0 : index
    %221 = vector.load %arg17[%c0_248, %c0_249] : memref<8x64xbf16, #tpu.memory_space<vmem>>, vector<8x64xbf16>
    %c0_250 = arith.constant 0 : index
    %c0_251 = arith.constant 0 : index
    %222 = vector.load %arg8[%c0_250, %c0_251] : memref<64x512xbf16, #tpu.memory_space<vmem>>, vector<64x512xbf16>
    %cst_252 = arith.constant dense<0.000000e+00> : vector<8x512xf32>
    %223 = tpu.matmul %221, %222, %cst_252 {dimension_numbers = #tpu.dot_dimension_numbers<[1], [0], [0], [1], [0, 0, 1, 1], [], []>} : vector<8x64xbf16>, vector<64x512xbf16>, vector<8x512xf32> -> vector<8x512xf32>
    %c0_253 = arith.constant 0 : index
    %c0_254 = arith.constant 0 : index
    %224 = vector.load %arg9[%c0_253, %c0_254] : memref<1x512xf32, #tpu.memory_space<vmem>>, vector<1x512xf32>
    %225 = vector.broadcast %224 : vector<1x512xf32> to vector<8x512xf32>
    %226 = arith.addf %223, %225 : vector<8x512xf32>
    %cst_255 = arith.constant 0.00999999977 : f32
    %227 = vector.broadcast %cst_255 : f32 to vector<8x512xf32>
    %228 = arith.mulf %227, %226 : vector<8x512xf32>
    %229 = arith.maximumf %226, %228 : vector<8x512xf32>
    %230 = arith.truncf %229 : vector<8x512xf32> to vector<8x512xbf16>
    %c0_256 = arith.constant 0 : index
    %c0_257 = arith.constant 0 : index
    %231 = vector.load %arg10[%c0_256, %c0_257] : memref<512x128xbf16, #tpu.memory_space<vmem>>, vector<512x128xbf16>
    %cst_258 = arith.constant dense<0.000000e+00> : vector<8x128xf32>
    %232 = tpu.matmul %230, %231, %cst_258 {dimension_numbers = #tpu.dot_dimension_numbers<[1], [0], [0], [1], [0, 0, 1, 1], [], []>} : vector<8x512xbf16>, vector<512x128xbf16>, vector<8x128xf32> -> vector<8x128xf32>
    %c0_259 = arith.constant 0 : index
    %c0_260 = arith.constant 0 : index
    %233 = vector.load %arg11[%c0_259, %c0_260] : memref<1x128xf32, #tpu.memory_space<vmem>>, vector<1x128xf32>
    %234 = vector.broadcast %233 : vector<1x128xf32> to vector<8x128xf32>
    %235 = arith.addf %232, %234 : vector<8x128xf32>
    %c0_261 = arith.constant 0 : index
    %c0_262 = arith.constant 0 : index
    %236 = vector.load %arg12[%c0_261, %c0_262] : memref<8x128xf32, #tpu.memory_space<vmem>>, vector<8x128xf32>
    tpu.vector_store %arg12[%c0_261, %c0_262], %235 {strides = array<i32>} : memref<8x128xf32, #tpu.memory_space<vmem>>, vector<8x128xf32>,
    return
  }
  func.func @transform_0(%arg0: i32) -> (i32, i32) {
    %c0_i32 = arith.constant 0 : i32
    %c0_i32_0 = arith.constant 0 : i32
    return %arg0, %c0_i32 : i32, i32
  }
  func.func @transform_1(%arg0: i32) -> (i32, i32) {
    %c0_i32 = arith.constant 0 : i32
    %c0_i32_0 = arith.constant 0 : i32
    %c0_i32_1 = arith.constant 0 : i32
    return %c0_i32, %c0_i32_0 : i32, i32
  }
  func.func @transform_2(%arg0: i32) -> (i32, i32) {
    %c0_i32 = arith.constant 0 : i32
    %c0_i32_0 = arith.constant 0 : i32
    %c0_i32_1 = arith.constant 0 : i32
    return %c0_i32, %c0_i32_0 : i32, i32
  }
  func.func @transform_3(%arg0: i32) -> (i32, i32) {
    %c0_i32 = arith.constant 0 : i32
    %c0_i32_0 = arith.constant 0 : i32
    %c0_i32_1 = arith.constant 0 : i32
    return %c0_i32, %c0_i32_0 : i32, i32
  }
  func.func @transform_4(%arg0: i32) -> (i32, i32) {
    %c0_i32 = arith.constant 0 : i32
    %c0_i32_0 = arith.constant 0 : i32
    %c0_i32_1 = arith.constant 0 : i32
    return %c0_i32, %c0_i32_0 : i32, i32
  }
  func.func @transform_5(%arg0: i32) -> (i32, i32) {
    %c0_i32 = arith.constant 0 : i32
    %c0_i32_0 = arith.constant 0 : i32
    %c0_i32_1 = arith.constant 0 : i32
    return %c0_i32, %c0_i32_0 : i32, i32
  }
  func.func @transform_6(%arg0: i32) -> (i32, i32) {
    %c0_i32 = arith.constant 0 : i32
    %c0_i32_0 = arith.constant 0 : i32
    %c0_i32_1 = arith.constant 0 : i32
    return %c0_i32, %c0_i32_0 : i32, i32
  }
  func.func @transform_7(%arg0: i32) -> (i32, i32) {
    %c0_i32 = arith.constant 0 : i32
    %c0_i32_0 = arith.constant 0 : i32
    %c0_i32_1 = arith.constant 0 : i32
    return %c0_i32, %c0_i32_0 : i32, i32
  }
  func.func @transform_8(%arg0: i32) -> (i32, i32) {
    %c0_i32 = arith.constant 0 : i32
    %c0_i32_0 = arith.constant 0 : i32
    %c0_i32_1 = arith.constant 0 : i32
    return %c0_i32, %c0_i32_0 : i32, i32
  }
  func.func @transform_9(%arg0: i32) -> (i32, i32) {
    %c0_i32 = arith.constant 0 : i32
    %c0_i32_0 = arith.constant 0 : i32
    %c0_i32_1 = arith.constant 0 : i32
    return %c0_i32, %c0_i32_0 : i32, i32
  }
  func.func @transform_10(%arg0: i32) -> (i32, i32) {
    %c0_i32 = arith.constant 0 : i32
    %c0_i32_0 = arith.constant 0 : i32
    %c0_i32_1 = arith.constant 0 : i32
    return %c0_i32, %c0_i32_0 : i32, i32
  }
  func.func @transform_11(%arg0: i32) -> (i32, i32) {
    %c0_i32 = arith.constant 0 : i32
    %c0_i32_0 = arith.constant 0 : i32
    return %arg0, %c0_i32 : i32, i32
  }
}

</mosaic_0001>

<llo_original>
// kernel: a_call__.1
$region0: #{a_call__.1}
  #allocation0 [shape = 'u32[]', space=smem, size = 0x4, offset = 0x4, fixed_abs, tag = 'smem constant byte address 0x4 - core index']
  #allocation1 [shape = 'u32[144,128]{1,0:T(1,128)}', space=vmem, size = 0x12000, scoped, tag = 'internal scratch']
  #allocation2 [shape = 'bf16[8,8,256]{2,1,0:T(8,128)(2,1)}', space=vmem, size = 0x8000, scoped, tag = 'scratch operand']
  #allocation3 [shape = 'bf16[3,8,192]{2,1,0:T(8,128)(2,1)}', space=vmem, size = 0x3000, scoped, tag = 'scratch operand']
  #allocation4 [shape = 'bf16[72,512]{1,0:T(8,128)(2,1)}', space=vmem, size = 0x12000, scoped, tag = 'scratch operand']
  #allocation5 [shape = 'bf16[8,576]{1,0:T(8,128)(2,1)}', space=vmem, size = 0x2800, scoped, tag = 'scratch operand']
  #allocation6 [shape = 'bf16[8,64]{1,0:T(8,128)(2,1)}', space=vmem, size = 0x800, scoped, tag = 'scratch operand']
  %s0 = inlined_call_operand.vmem [shape: bf16[1024,256], index: 0, kind: input, shape index: {}]
  %s1 = inlined_call_operand.vmem [shape: bf16[256,32], index: 1, kind: input, shape index: {}]
  %s2 = inlined_call_operand.vmem [shape: f32[1,32], index: 2, kind: input, shape index: {}]
  %s3 = inlined_call_operand.vmem [shape: bf16[512,64], index: 3, kind: input, shape index: {}]
  %s4 = inlined_call_operand.vmem [shape: f32[1,64], index: 4, kind: input, shape index: {}]
  %s5 = inlined_call_operand.vmem [shape: bf16[576,64], index: 5, kind: input, shape index: {}]
  %s6 = inlined_call_operand.vmem [shape: f32[1,64], index: 6, kind: input, shape index: {}]
  %s7 = inlined_call_operand.vmem [shape: bf16[64,512], index: 7, kind: input, shape index: {}]
  %s8 = inlined_call_operand.vmem [shape: f32[1,512], index: 8, kind: input, shape index: {}]
  %s9 = inlined_call_operand.vmem [shape: bf16[512,128], index: 9, kind: input, shape index: {}]
  %s10 = inlined_call_operand.vmem [shape: f32[1,128], index: 10, kind: input, shape index: {}]
  %s11 = inlined_call_operand.vmem [shape: f32[16,128], index: 11, kind: output, shape index: {}]
  %s12 = sld [smem:[#allocation0]]
  $region77: #{a_call__.1} parent=0
    _
  %s14 = ssub.s32 1, %s12
  %s15 = scalar_select 0, %s14, %s12
  loop: start=0, step=1, limit=4
  $region2: #{a_call__.1} parent=0 // loop_pre_header
    _
  $region3: #{a_call__.1} parent=0 // loop_header
    %s17 = sphi 0, %s21
    %p18 = scmp.ge.s32.totalorder %s17, 4
    %s27 = sphi 0, %s29
    %s30 = sphi 0, %s27
    %s31 = sphi 0, %s30
    %s47 = sphi 0, %s31
    %s51 = sphi 0, %s51
    %s53 = sphi 0, %s51
    %s54 = sphi 0, %s53
    %s68 = sphi 0, %s54
    %s72 = sphi 0, %s72
    %s74 = sphi 0, %s72
    %s75 = sphi 0, %s74
    %s89 = sphi 0, %s75
    %s93 = sphi 0, %s93
    %s95 = sphi 0, %s93
    %s96 = sphi 0, %s95
    %s110 = sphi 0, %s96
    %s114 = sphi 0, %s114
    %s116 = sphi 0, %s114
    %s117 = sphi 0, %s116
    %s131 = sphi 0, %s117
    %s135 = sphi 0, %s135
    %s137 = sphi 0, %s135
    %s138 = sphi 0, %s137
    %s152 = sphi 0, %s138
    %s156 = sphi 0, %s156
    %s158 = sphi 0, %s156
    %s159 = sphi 0, %s158
    %s173 = sphi 0, %s159
    %s177 = sphi 0, %s177
    %s179 = sphi 0, %s177
    %s180 = sphi 0, %s179
    %s194 = sphi 0, %s180
    %s198 = sphi 0, %s198
    %s200 = sphi 0, %s198
    %s201 = sphi 0, %s200
    %s215 = sphi 0, %s201
    %s219 = sphi 0, %s219
    %s221 = sphi 0, %s219
    %s222 = sphi 0, %s221
    %s236 = sphi 0, %s222
    %s240 = sphi 0, %s240
    %s242 = sphi 0, %s240
    %s243 = sphi 0, %s242
    %s257 = sphi 0, %s243
    %s263 = sphi 0, %s265
    %s266 = sphi 0, %s263
    %s267 = sphi 0, %s266
    %s283 = sphi 0, %s267
  $region4: #{a_call__.1} parent=0 // loop_header_branch
    %20 = sbr.rel (%p18) target = $region8
  $region5: #{a_call__.1} parent=0 // loop_body
    %s22 = ssub.s32 %s17, 1
    %s23 = ssub.s32 %s17, 2
    %s24 = sadd.s32 %s17, 1
    %s25 = ssub.s32 %s17, %s24
    %p26 = scmp.eq.s32.totalorder %s25, 0
    %s28 = sadd.s32 %s27, 1
    %s29 = scalar_select %p26, %s27, %s28
    %p32 = pneg %p26
    %p33 = scmp.eq.s32.totalorder %s17, 1
    %p34 = por %p32, %p33
    %p35 = scmp.ne.s32.totalorder %s27, %s30
    %p36 = scmp.eq.s32.totalorder %s17, 0
    %p37 = por %p35, %p36
    %p38 = scmp.ne.s32.totalorder %s27, %s30
    %p39 = scmp.eq.s32.totalorder %s22, 1
    %p40 = por %p38, %p39
    %p41 = scmp.ne.s32.totalorder %s30, %s31
    %p42 = scmp.eq.s32.totalorder %s22, 0
    %p43 = por %p41, %p42
    %p44 = scmp.ne.s32.totalorder %s30, %s31
    %p45 = scmp.eq.s32.totalorder %s23, 1
    %p46 = por %p44, %p45
    %p48 = scmp.ne.s32.totalorder %s31, %s47
    %p49 = scmp.eq.s32.totalorder %s23, 0
    %p50 = por %p48, %p49
    %s52 = sadd.s32 %s51, 1
    %p55 = scmp.eq.s32.totalorder %s17, 1
    %p56 = scmp.ne.s32.totalorder %s51, %s53
    %p57 = scmp.eq.s32.totalorder %s17, 0
    %p58 = por %p56, %p57
    %p59 = scmp.ne.s32.totalorder %s51, %s53
    %p60 = scmp.eq.s32.totalorder %s22, 1
    %p61 = por %p59, %p60
    %p62 = scmp.ne.s32.totalorder %s53, %s54
    %p63 = scmp.eq.s32.totalorder %s22, 0
    %p64 = por %p62, %p63
    %p65 = scmp.ne.s32.totalorder %s53, %s54
    %p66 = scmp.eq.s32.totalorder %s23, 1
    %p67 = por %p65, %p66
    %p69 = scmp.ne.s32.totalorder %s54, %s68
    %p70 = scmp.eq.s32.totalorder %s23, 0
    %p71 = por %p69, %p70
    %s73 = sadd.s32 %s72, 1
    %p76 = scmp.eq.s32.totalorder %s17, 1
    %p77 = scmp.ne.s32.totalorder %s72, %s74
    %p78 = scmp.eq.s32.totalorder %s17, 0
    %p79 = por %p77, %p78
    %p80 = scmp.ne.s32.totalorder %s72, %s74
    %p81 = scmp.eq.s32.totalorder %s22, 1
    %p82 = por %p80, %p81
    %p83 = scmp.ne.s32.totalorder %s74, %s75
    %p84 = scmp.eq.s32.totalorder %s22, 0
    %p85 = por %p83, %p84
    %p86 = scmp.ne.s32.totalorder %s74, %s75
    %p87 = scmp.eq.s32.totalorder %s23, 1
    %p88 = por %p86, %p87
    %p90 = scmp.ne.s32.totalorder %s75, %s89
    %p91 = scmp.eq.s32.totalorder %s23, 0
    %p92 = por %p90, %p91
    %s94 = sadd.s32 %s93, 1
    %p97 = scmp.eq.s32.totalorder %s17, 1
    %p98 = scmp.ne.s32.totalorder %s93, %s95
    %p99 = scmp.eq.s32.totalorder %s17, 0
    %p100 = por %p98, %p99
    %p101 = scmp.ne.s32.totalorder %s93, %s95
    %p102 = scmp.eq.s32.totalorder %s22, 1
    %p103 = por %p101, %p102
    %p104 = scmp.ne.s32.totalorder %s95, %s96
    %p105 = scmp.eq.s32.totalorder %s22, 0
    %p106 = por %p104, %p105
    %p107 = scmp.ne.s32.totalorder %s95, %s96
    %p108 = scmp.eq.s32.totalorder %s23, 1
    %p109 = por %p107, %p108
    %p111 = scmp.ne.s32.totalorder %s96, %s110
    %p112 = scmp.eq.s32.totalorder %s23, 0
    %p113 = por %p111, %p112
    %s115 = sadd.s32 %s114, 1
    %p118 = scmp.eq.s32.totalorder %s17, 1
    %p119 = scmp.ne.s32.totalorder %s114, %s116
    %p120 = scmp.eq.s32.totalorder %s17, 0
    %p121 = por %p119, %p120
    %p122 = scmp.ne.s32.totalorder %s114, %s116
    %p123 = scmp.eq.s32.totalorder %s22, 1
    %p124 = por %p122, %p123
    %p125 = scmp.ne.s32.totalorder %s116, %s117
    %p126 = scmp.eq.s32.totalorder %s22, 0
    %p127 = por %p125, %p126
    %p128 = scmp.ne.s32.totalorder %s116, %s117
    %p129 = scmp.eq.s32.totalorder %s23, 1
    %p130 = por %p128, %p129
    %p132 = scmp.ne.s32.totalorder %s117, %s131
    %p133 = scmp.eq.s32.totalorder %s23, 0
    %p134 = por %p132, %p133
    %s136 = sadd.s32 %s135, 1
    %p139 = scmp.eq.s32.totalorder %s17, 1
    %p140 = scmp.ne.s32.totalorder %s135, %s137
    %p141 = scmp.eq.s32.totalorder %s17, 0
    %p142 = por %p140, %p141
    %p143 = scmp.ne.s32.totalorder %s135, %s137
    %p144 = scmp.eq.s32.totalorder %s22, 1
    %p145 = por %p143, %p144
    %p146 = scmp.ne.s32.totalorder %s137, %s138
    %p147 = scmp.eq.s32.totalorder %s22, 0
    %p148 = por %p146, %p147
    %p149 = scmp.ne.s32.totalorder %s137, %s138
    %p150 = scmp.eq.s32.totalorder %s23, 1
    %p151 = por %p149, %p150
    %p153 = scmp.ne.s32.totalorder %s138, %s152
    %p154 = scmp.eq.s32.totalorder %s23, 0
    %p155 = por %p153, %p154
    %s157 = sadd.s32 %s156, 1
    %p160 = scmp.eq.s32.totalorder %s17, 1
    %p161 = scmp.ne.s32.totalorder %s156, %s158
    %p162 = scmp.eq.s32.totalorder %s17, 0
    %p163 = por %p161, %p162
    %p164 = scmp.ne.s32.totalorder %s156, %s158
    %p165 = scmp.eq.s32.totalorder %s22, 1
    %p166 = por %p164, %p165
    %p167 = scmp.ne.s32.totalorder %s158, %s159
    %p168 = scmp.eq.s32.totalorder %s22, 0
    %p169 = por %p167, %p168
    %p170 = scmp.ne.s32.totalorder %s158, %s159
    %p171 = scmp.eq.s32.totalorder %s23, 1
    %p172 = por %p170, %p171
    %p174 = scmp.ne.s32.totalorder %s159, %s173
    %p175 = scmp.eq.s32.totalorder %s23, 0
    %p176 = por %p174, %p175
    %s178 = sadd.s32 %s177, 1
    %p181 = scmp.eq.s32.totalorder %s17, 1
    %p182 = scmp.ne.s32.totalorder %s177, %s179
    %p183 = scmp.eq.s32.totalorder %s17, 0
    %p184 = por %p182, %p183
    %p185 = scmp.ne.s32.totalorder %s177, %s179
    %p186 = scmp.eq.s32.totalorder %s22, 1
    %p187 = por %p185, %p186
    %p188 = scmp.ne.s32.totalorder %s179, %s180
    %p189 = scmp.eq.s32.totalorder %s22, 0
    %p190 = por %p188, %p189
    %p191 = scmp.ne.s32.totalorder %s179, %s180
    %p192 = scmp.eq.s32.totalorder %s23, 1
    %p193 = por %p191, %p192
    %p195 = scmp.ne.s32.totalorder %s180, %s194
    %p196 = scmp.eq.s32.totalorder %s23, 0
    %p197 = por %p195, %p196
    %s199 = sadd.s32 %s198, 1
    %p202 = scmp.eq.s32.totalorder %s17, 1
    %p203 = scmp.ne.s32.totalorder %s198, %s200
    %p204 = scmp.eq.s32.totalorder %s17, 0
    %p205 = por %p203, %p204
    %p206 = scmp.ne.s32.totalorder %s198, %s200
    %p207 = scmp.eq.s32.totalorder %s22, 1
    %p208 = por %p206, %p207
    %p209 = scmp.ne.s32.totalorder %s200, %s201
    %p210 = scmp.eq.s32.totalorder %s22, 0
    %p211 = por %p209, %p210
    %p212 = scmp.ne.s32.totalorder %s200, %s201
    %p213 = scmp.eq.s32.totalorder %s23, 1
    %p214 = por %p212, %p213
    %p216 = scmp.ne.s32.totalorder %s201, %s215
    %p217 = scmp.eq.s32.totalorder %s23, 0
    %p218 = por %p216, %p217
    %s220 = sadd.s32 %s219, 1
    %p223 = scmp.eq.s32.totalorder %s17, 1
    %p224 = scmp.ne.s32.totalorder %s219, %s221
    %p225 = scmp.eq.s32.totalorder %s17, 0
    %p226 = por %p224, %p225
    %p227 = scmp.ne.s32.totalorder %s219, %s221
    %p228 = scmp.eq.s32.totalorder %s22, 1
    %p229 = por %p227, %p228
    %p230 = scmp.ne.s32.totalorder %s221, %s222
    %p231 = scmp.eq.s32.totalorder %s22, 0
    %p232 = por %p230, %p231
    %p233 = scmp.ne.s32.totalorder %s221, %s222
    %p234 = scmp.eq.s32.totalorder %s23, 1
    %p235 = por %p233, %p234
    %p237 = scmp.ne.s32.totalorder %s222, %s236
    %p238 = scmp.eq.s32.totalorder %s23, 0
    %p239 = por %p237, %p238
    %s241 = sadd.s32 %s240, 1
    %p244 = scmp.eq.s32.totalorder %s17, 1
    %p245 = scmp.ne.s32.totalorder %s240, %s242
    %p246 = scmp.eq.s32.totalorder %s17, 0
    %p247 = por %p245, %p246
    %p248 = scmp.ne.s32.totalorder %s240, %s242
    %p249 = scmp.eq.s32.totalorder %s22, 1
    %p250 = por %p248, %p249
    %p251 = scmp.ne.s32.totalorder %s242, %s243
    %p252 = scmp.eq.s32.totalorder %s22, 0
    %p253 = por %p251, %p252
    %p254 = scmp.ne.s32.totalorder %s242, %s243
    %p255 = scmp.eq.s32.totalorder %s23, 1
    %p256 = por %p254, %p255
    %p258 = scmp.ne.s32.totalorder %s243, %s257
    %p259 = scmp.eq.s32.totalorder %s23, 0
    %p260 = por %p258, %p259
    %s261 = ssub.s32 %s17, %s24
    %p262 = scmp.eq.s32.totalorder %s261, 0
    %s264 = sadd.s32 %s263, 1
    %s265 = scalar_select %p262, %s263, %s264
    %p268 = pneg %p262
    %p269 = scmp.eq.s32.totalorder %s17, 1
    %p270 = por %p268, %p269
    %p271 = scmp.ne.s32.totalorder %s263, %s266
    %p272 = scmp.eq.s32.totalorder %s17, 0
    %p273 = por %p271, %p272
    %p274 = scmp.ne.s32.totalorder %s263, %s266
    %p275 = scmp.eq.s32.totalorder %s22, 1
    %p276 = por %p274, %p275
    %p277 = scmp.ne.s32.totalorder %s266, %s267
    %p278 = scmp.eq.s32.totalorder %s22, 0
    %p279 = por %p277, %p278
    %p280 = scmp.ne.s32.totalorder %s266, %s267
    %p281 = scmp.eq.s32.totalorder %s23, 1
    %p282 = por %p280, %p281
    %p284 = scmp.ne.s32.totalorder %s267, %s283
    %p285 = scmp.eq.s32.totalorder %s23, 0
    %p286 = por %p284, %p285
    %p287 = scmp.le.s32.totalorder 1, %s17
    %p288 = scmp.lt.s32.totalorder %s17, 3
    %p289 = pnand %p287, %p288
    %p290 = pneg %p289
    // Predicated region
    $region9: #{a_call__.1} parent=5 // pred_check
      _
    $region10: #{a_call__.1} parent=5 // pred_check_branch
      %292 = sbr.rel (%p289) target = $region12
    $region11: #{a_call__.1} parent=5 // pred_region
      %s293 = ssub.s32 %s17, 1
      // Predicated region
      $region13: #{a_call__.1} parent=11 // pred_check
        %p294 = pneg %p64
      $region14: #{a_call__.1} parent=11 // pred_check_branch
        %296 = sbr.rel (%p294) target = $region16
      $region15: #{a_call__.1} parent=11 // pred_region
        _
      $region16: #{a_call__.1} parent=11 // pred_fallthru
        _
      // Predicated region
      $region17: #{a_call__.1} parent=11 // pred_check
        %p297 = pneg %p85
      $region18: #{a_call__.1} parent=11 // pred_check_branch
        %299 = sbr.rel (%p297) target = $region20
      $region19: #{a_call__.1} parent=11 // pred_region
        _
      $region20: #{a_call__.1} parent=11 // pred_fallthru
        _
      // Predicated region
      $region21: #{a_call__.1} parent=11 // pred_check
        %p300 = pneg %p106
      $region22: #{a_call__.1} parent=11 // pred_check_branch
        %302 = sbr.rel (%p300) target = $region24
      $region23: #{a_call__.1} parent=11 // pred_region
        _
      $region24: #{a_call__.1} parent=11 // pred_fallthru
        _
      // Predicated region
      $region25: #{a_call__.1} parent=11 // pred_check
        %p303 = pneg %p127
      $region26: #{a_call__.1} parent=11 // pred_check_branch
        %305 = sbr.rel (%p303) target = $region28
      $region27: #{a_call__.1} parent=11 // pred_region
        _
      $region28: #{a_call__.1} parent=11 // pred_fallthru
        _
      // Predicated region
      $region29: #{a_call__.1} parent=11 // pred_check
        %p306 = pneg %p148
      $region30: #{a_call__.1} parent=11 // pred_check_branch
        %308 = sbr.rel (%p306) target = $region32
      $region31: #{a_call__.1} parent=11 // pred_region
        _
      $region32: #{a_call__.1} parent=11 // pred_fallthru
        _
      // Predicated region
      $region33: #{a_call__.1} parent=11 // pred_check
        %p309 = pneg %p169
      $region34: #{a_call__.1} parent=11 // pred_check_branch
        %311 = sbr.rel (%p309) target = $region36
      $region35: #{a_call__.1} parent=11 // pred_region
        _
      $region36: #{a_call__.1} parent=11 // pred_fallthru
        _
      // Predicated region
      $region37: #{a_call__.1} parent=11 // pred_check
        %p312 = pneg %p190
      $region38: #{a_call__.1} parent=11 // pred_check_branch
        %314 = sbr.rel (%p312) target = $region40
      $region39: #{a_call__.1} parent=11 // pred_region
        _
      $region40: #{a_call__.1} parent=11 // pred_fallthru
        _
      // Predicated region
      $region41: #{a_call__.1} parent=11 // pred_check
        %p315 = pneg %p211
      $region42: #{a_call__.1} parent=11 // pred_check_branch
        %317 = sbr.rel (%p315) target = $region44
      $region43: #{a_call__.1} parent=11 // pred_region
        _
      $region44: #{a_call__.1} parent=11 // pred_fallthru
        _
      // Predicated region
      $region45: #{a_call__.1} parent=11 // pred_check
        %p318 = pneg %p232
      $region46: #{a_call__.1} parent=11 // pred_check_branch
        %320 = sbr.rel (%p318) target = $region48
      $region47: #{a_call__.1} parent=11 // pred_region
        _
      $region48: #{a_call__.1} parent=11 // pred_fallthru
        _
      // Predicated region
      $region49: #{a_call__.1} parent=11 // pred_check
        %p321 = pneg %p253
      $region50: #{a_call__.1} parent=11 // pred_check_branch
        %323 = sbr.rel (%p321) target = $region52
      $region51: #{a_call__.1} parent=11 // pred_region
        _
      $region52: #{a_call__.1} parent=11 // pred_fallthru
        _
    $region12: #{a_call__.1} parent=5 // pred_fallthru
      _
    %p324 = scmp.lt.s32.totalorder %s17, 2
    // Predicated region
    $region53: #{a_call__.1} parent=5 // pred_check
      %p325 = pneg %p324
    $region54: #{a_call__.1} parent=5 // pred_check_branch
      %327 = sbr.rel (%p325) target = $region56
    $region55: #{a_call__.1} parent=5 // pred_region
      // Predicated region
      $region57: #{a_call__.1} parent=55 // pred_check
        %p328 = pneg %p37
      $region58: #{a_call__.1} parent=55 // pred_check_branch
        %330 = sbr.rel (%p328) target = $region60
      $region59: #{a_call__.1} parent=55 // pred_region
        %s331 = smul.u32 64, %s17
        %p332 = scmp.lt.s32.totalorder %s331, 127
        %s333 = scalar_select %p332, %s331, 127
        %s334 = smul.addr %s333, 2
        %s335 = smul.addr %s334, 4
        %s336 = scalar_lea.vmem %s0, %s335
        %s337 = smul.u32 64, %s17
      $region60: #{a_call__.1} parent=55 // pred_fallthru
        _
    $region56: #{a_call__.1} parent=5 // pred_fallthru
      _
    %p338 = scmp.le.s32.totalorder 1, %s17
    %p339 = scmp.lt.s32.totalorder %s17, 3
    %p340 = pnand %p338, %p339
    %p341 = pneg %p340
    // Predicated region
    $region61: #{a_call__.1} parent=5 // pred_check
      _
    $region62: #{a_call__.1} parent=5 // pred_check_branch
      %343 = sbr.rel (%p340) target = $region64
    $region63: #{a_call__.1} parent=5 // pred_region
      %s344 = ssub.s32 %s17, 1
      %s345 = smul.u32 64, %s22
      %p346 = scmp.lt.s32.totalorder %s345, 127
      %s347 = scalar_select %p346, %s345, 127
      %s348 = smul.addr %s347, 2
      %s349 = smul.addr %s348, 4
      %s350 = scalar_lea.vmem %s0, %s349
      %p351 = pneg %p43
      %p352 = pneg %p40
      %p353 = pneg %p64
      %p354 = pneg %p61
      %p355 = pneg %p85
      %p356 = pneg %p82
      %p357 = pneg %p106
      %p358 = pneg %p103
      %p359 = pneg %p127
      %p360 = pneg %p124
      %p361 = pneg %p148
      %p362 = pneg %p145
      %p363 = pneg %p169
      %p364 = pneg %p166
      %p365 = pneg %p190
      %p366 = pneg %p187
      %p367 = pneg %p211
      %p368 = pneg %p208
      %p369 = pneg %p232
      %p370 = pneg %p229
      %p371 = pneg %p253
      %p372 = pneg %p250
      %p373 = pneg %p279
      %p374 = pneg %p276
      %p375 = scmp.lt.s32.totalorder %s22, 1
      %s376 = scalar_select %p375, %s22, 1
      %s377 = smul.addr %s376, 8
      %s378 = scalar_lea.vmem %s11, %s377
      %s379 = smul.u32 64, %s22
      %p380 = scmp.lt.s32.totalorder %s379, 127
      %s381 = scalar_select %p380, %s379, 127
      %s382 = smul.addr %s381, 2
      %s383 = smul.addr %s382, 4
      %s384 = scalar_lea.vmem %s0, %s383
      %s385 = smul.u32 64, %s22
      %p386 = scmp.lt.s32.totalorder %s22, 1
      %s387 = scalar_select %p386, %s22, 1
      %s388 = smul.addr %s387, 8
      %s389 = scalar_lea.vmem %s11, %s388
      %v391 = vld [vmem:[%s384] sm:$0xff]
      %v392 = vld [vmem:[%s384 + $0x8] sm:$0xff]
      %v393 = vld [vmem:[%s384 + $0x10] sm:$0xff]
      %v394 = vld [vmem:[%s384 + $0x18] sm:$0xff]
      %v395 = vld [vmem:[%s384 + $0x20] sm:$0xff]
      %v396 = vld [vmem:[%s384 + $0x28] sm:$0xff]
      %v397 = vld [vmem:[%s384 + $0x30] sm:$0xff]
      %v398 = vld [vmem:[%s384 + $0x38] sm:$0xff]
      %v399 = vld [vmem:[%s384 + $0x40] sm:$0xff]
      %v400 = vld [vmem:[%s384 + $0x48] sm:$0xff]
      %v401 = vld [vmem:[%s384 + $0x50] sm:$0xff]
      %v402 = vld [vmem:[%s384 + $0x58] sm:$0xff]
      %v403 = vld [vmem:[%s384 + $0x60] sm:$0xff]
      %v404 = vld [vmem:[%s384 + $0x68] sm:$0xff]
      %v405 = vld [vmem:[%s384 + $0x70] sm:$0xff]
      %v406 = vld [vmem:[%s384 + $0x78] sm:$0xff]
      %v407 = vld [vmem:[%s384 + $0x80] sm:$0xff]
      %v408 = vld [vmem:[%s384 + $0x88] sm:$0xff]
      %v409 = vld [vmem:[%s384 + $0x90] sm:$0xff]
      %v410 = vld [vmem:[%s384 + $0x98] sm:$0xff]
      %v411 = vld [vmem:[%s384 + $0xa0] sm:$0xff]
      %v412 = vld [vmem:[%s384 + $0xa8] sm:$0xff]
      %v413 = vld [vmem:[%s384 + $0xb0] sm:$0xff]
      %v414 = vld [vmem:[%s384 + $0xb8] sm:$0xff]
      %v415 = vld [vmem:[%s384 + $0xc0] sm:$0xff]
      %v416 = vld [vmem:[%s384 + $0xc8] sm:$0xff]
      %v417 = vld [vmem:[%s384 + $0xd0] sm:$0xff]
      %v418 = vld [vmem:[%s384 + $0xd8] sm:$0xff]
      %v419 = vld [vmem:[%s384 + $0xe0] sm:$0xff]
      %v420 = vld [vmem:[%s384 + $0xe8] sm:$0xff]
      %v421 = vld [vmem:[%s384 + $0xf0] sm:$0xff]
      %v422 = vld [vmem:[%s384 + $0xf8] sm:$0xff]
      %v423 = vld [vmem:[%s384 + $0x100] sm:$0xff]
      %v424 = vld [vmem:[%s384 + $0x108] sm:$0xff]
      %v425 = vld [vmem:[%s384 + $0x110] sm:$0xff]
      %v426 = vld [vmem:[%s384 + $0x118] sm:$0xff]
      %v427 = vld [vmem:[%s384 + $0x120] sm:$0xff]
      %v428 = vld [vmem:[%s384 + $0x128] sm:$0xff]
      %v429 = vld [vmem:[%s384 + $0x130] sm:$0xff]
      %v430 = vld [vmem:[%s384 + $0x138] sm:$0xff]
      %v431 = vld [vmem:[%s384 + $0x140] sm:$0xff]
      %v432 = vld [vmem:[%s384 + $0x148] sm:$0xff]
      %v433 = vld [vmem:[%s384 + $0x150] sm:$0xff]
      %v434 = vld [vmem:[%s384 + $0x158] sm:$0xff]
      %v435 = vld [vmem:[%s384 + $0x160] sm:$0xff]
      %v436 = vld [vmem:[%s384 + $0x168] sm:$0xff]
      %v437 = vld [vmem:[%s384 + $0x170] sm:$0xff]
      %v438 = vld [vmem:[%s384 + $0x178] sm:$0xff]
      %v439 = vld [vmem:[%s384 + $0x180] sm:$0xff]
      %v440 = vld [vmem:[%s384 + $0x188] sm:$0xff]
      %v441 = vld [vmem:[%s384 + $0x190] sm:$0xff]
      %v442 = vld [vmem:[%s384 + $0x198] sm:$0xff]
      %v443 = vld [vmem:[%s384 + $0x1a0] sm:$0xff]
      %v444 = vld [vmem:[%s384 + $0x1a8] sm:$0xff]
      %v445 = vld [vmem:[%s384 + $0x1b0] sm:$0xff]
      %v446 = vld [vmem:[%s384 + $0x1b8] sm:$0xff]
      %v447 = vld [vmem:[%s384 + $0x1c0] sm:$0xff]
      %v448 = vld [vmem:[%s384 + $0x1c8] sm:$0xff]
      %v449 = vld [vmem:[%s384 + $0x1d0] sm:$0xff]
      %v450 = vld [vmem:[%s384 + $0x1d8] sm:$0xff]
      %v451 = vld [vmem:[%s384 + $0x1e0] sm:$0xff]
      %v452 = vld [vmem:[%s384 + $0x1e8] sm:$0xff]
      %v453 = vld [vmem:[%s384 + $0x1f0] sm:$0xff]
      %v454 = vld [vmem:[%s384 + $0x1f8] sm:$0xff]
      %v455 = vld [vmem:[%s1] sm:$0xf]
      %v456 = vld [vmem:[%s1 + $0x4] sm:$0xf]
      %v457 = vld [vmem:[%s1 + $0x8] sm:$0xf]
      %v458 = vld [vmem:[%s1 + $0xc] sm:$0xf]
      %v459 = vld [vmem:[%s1 + $0x10] sm:$0xf]
      %v460 = vld [vmem:[%s1 + $0x14] sm:$0xf]
      %v461 = vld [vmem:[%s1 + $0x18] sm:$0xf]
      %v462 = vld [vmem:[%s1 + $0x1c] sm:$0xf]
      %v463 = vld [vmem:[%s1 + $0x20] sm:$0xf]
      %v464 = vld [vmem:[%s1 + $0x24] sm:$0xf]
      %v465 = vld [vmem:[%s1 + $0x28] sm:$0xf]
      %v466 = vld [vmem:[%s1 + $0x2c] sm:$0xf]
      %v467 = vld [vmem:[%s1 + $0x30] sm:$0xf]
      %v468 = vld [vmem:[%s1 + $0x34] sm:$0xf]
      %v469 = vld [vmem:[%s1 + $0x38] sm:$0xf]
      %v470 = vld [vmem:[%s1 + $0x3c] sm:$0xf]
      %v471 = vld [vmem:[%s1 + $0x40] sm:$0xf]
      %v472 = vld [vmem:[%s1 + $0x44] sm:$0xf]
      %v473 = vld [vmem:[%s1 + $0x48] sm:$0xf]
      %v474 = vld [vmem:[%s1 + $0x4c] sm:$0xf]
      %v475 = vld [vmem:[%s1 + $0x50] sm:$0xf]
      %v476 = vld [vmem:[%s1 + $0x54] sm:$0xf]
      %v477 = vld [vmem:[%s1 + $0x58] sm:$0xf]
      %v478 = vld [vmem:[%s1 + $0x5c] sm:$0xf]
      %v479 = vld [vmem:[%s1 + $0x60] sm:$0xf]
      %v480 = vld [vmem:[%s1 + $0x64] sm:$0xf]
      %v481 = vld [vmem:[%s1 + $0x68] sm:$0xf]
      %v482 = vld [vmem:[%s1 + $0x6c] sm:$0xf]
      %v483 = vld [vmem:[%s1 + $0x70] sm:$0xf]
      %v484 = vld [vmem:[%s1 + $0x74] sm:$0xf]
      %v485 = vld [vmem:[%s1 + $0x78] sm:$0xf]
      %v486 = vld [vmem:[%s1 + $0x7c] sm:$0xf]
      %v487 = vld [vmem:[%s2] sm:$0x1]
      %v489 = vlaneseq
      %v490 = vshrl.u32 %v489, 7
      %v491 = vsub.s32 0, %v490
      %v492 = vrot.slane %v487, %v491
      %v558 = vunpack.c.l.b16 %v391
      %v559 = vunpack.c.h.b16 %v391
      %v560 = vunpack.c.l.b16 %v392
      %v561 = vunpack.c.h.b16 %v392
      %v562 = vunpack.c.l.b16 %v393
      %v563 = vunpack.c.h.b16 %v393
      %v564 = vunpack.c.l.b16 %v394
      %v565 = vunpack.c.h.b16 %v394
      %v566 = vunpack.c.l.b16 %v395
      %v567 = vunpack.c.h.b16 %v395
      %v568 = vunpack.c.l.b16 %v396
      %v569 = vunpack.c.h.b16 %v396
      %v570 = vunpack.c.l.b16 %v397
      %v571 = vunpack.c.h.b16 %v397
      %v572 = vunpack.c.l.b16 %v398
      %v573 = vunpack.c.h.b16 %v398
      %v574 = vunpack.c.l.b16 %v399
      %v575 = vunpack.c.h.b16 %v399
      %v576 = vunpack.c.l.b16 %v400
      %v577 = vunpack.c.h.b16 %v400
      %v578 = vunpack.c.l.b16 %v401
      %v579 = vunpack.c.h.b16 %v401
      %v580 = vunpack.c.l.b16 %v402
      %v581 = vunpack.c.h.b16 %v402
      %v582 = vunpack.c.l.b16 %v403
      %v583 = vunpack.c.h.b16 %v403
      %v584 = vunpack.c.l.b16 %v404
      %v585 = vunpack.c.h.b16 %v404
      %v586 = vunpack.c.l.b16 %v405
      %v587 = vunpack.c.h.b16 %v405
      %v588 = vunpack.c.l.b16 %v406
      %v589 = vunpack.c.h.b16 %v406
      %v590 = vunpack.c.l.b16 %v407
      %v591 = vunpack.c.h.b16 %v407
      %v592 = vunpack.c.l.b16 %v408
      %v593 = vunpack.c.h.b16 %v408
      %v594 = vunpack.c.l.b16 %v409
      %v595 = vunpack.c.h.b16 %v409
      %v596 = vunpack.c.l.b16 %v410
      %v597 = vunpack.c.h.b16 %v410
      %v598 = vunpack.c.l.b16 %v411
      %v599 = vunpack.c.h.b16 %v411
      %v600 = vunpack.c.l.b16 %v412
      %v601 = vunpack.c.h.b16 %v412
      %v602 = vunpack.c.l.b16 %v413
      %v603 = vunpack.c.h.b16 %v413
      %v604 = vunpack.c.l.b16 %v414
      %v605 = vunpack.c.h.b16 %v414
      %v606 = vunpack.c.l.b16 %v415
      %v607 = vunpack.c.h.b16 %v415
      %v608 = vunpack.c.l.b16 %v416
      %v609 = vunpack.c.h.b16 %v416
      %v610 = vunpack.c.l.b16 %v417
      %v611 = vunpack.c.h.b16 %v417
      %v612 = vunpack.c.l.b16 %v418
      %v613 = vunpack.c.h.b16 %v418
      %v614 = vunpack.c.l.b16 %v419
      %v615 = vunpack.c.h.b16 %v419
      %v616 = vunpack.c.l.b16 %v420
      %v617 = vunpack.c.h.b16 %v420
      %v618 = vunpack.c.l.b16 %v421
      %v619 = vunpack.c.h.b16 %v421
      %v620 = vunpack.c.l.b16 %v422
      %v621 = vunpack.c.h.b16 %v422
      %v622 = vunpack.c.l.b16 %v423
      %v623 = vunpack.c.h.b16 %v423
      %v624 = vunpack.c.l.b16 %v424
      %v625 = vunpack.c.h.b16 %v424
      %v626 = vunpack.c.l.b16 %v425
      %v627 = vunpack.c.h.b16 %v425
      %v628 = vunpack.c.l.b16 %v426
      %v629 = vunpack.c.h.b16 %v426
      %v630 = vunpack.c.l.b16 %v427
      %v631 = vunpack.c.h.b16 %v427
      %v632 = vunpack.c.l.b16 %v428
      %v633 = vunpack.c.h.b16 %v428
      %v634 = vunpack.c.l.b16 %v429
      %v635 = vunpack.c.h.b16 %v429
      %v636 = vunpack.c.l.b16 %v430
      %v637 = vunpack.c.h.b16 %v430
      %v638 = vunpack.c.l.b16 %v431
      %v639 = vunpack.c.h.b16 %v431
      %v640 = vunpack.c.l.b16 %v432
      %v641 = vunpack.c.h.b16 %v432
      %v642 = vunpack.c.l.b16 %v433
      %v643 = vunpack.c.h.b16 %v433
      %v644 = vunpack.c.l.b16 %v434
      %v645 = vunpack.c.h.b16 %v434
      %v646 = vunpack.c.l.b16 %v435
      %v647 = vunpack.c.h.b16 %v435
      %v648 = vunpack.c.l.b16 %v436
      %v649 = vunpack.c.h.b16 %v436
      %v650 = vunpack.c.l.b16 %v437
      %v651 = vunpack.c.h.b16 %v437
      %v652 = vunpack.c.l.b16 %v438
      %v653 = vunpack.c.h.b16 %v438
      %v654 = vunpack.c.l.b16 %v439
      %v655 = vunpack.c.h.b16 %v439
      %v656 = vunpack.c.l.b16 %v440
      %v657 = vunpack.c.h.b16 %v440
      %v658 = vunpack.c.l.b16 %v441
      %v659 = vunpack.c.h.b16 %v441
      %v660 = vunpack.c.l.b16 %v442
      %v661 = vunpack.c.h.b16 %v442
      %v662 = vunpack.c.l.b16 %v443
      %v663 = vunpack.c.h.b16 %v443
      %v664 = vunpack.c.l.b16 %v444
      %v665 = vunpack.c.h.b16 %v444
      %v666 = vunpack.c.l.b16 %v445
      %v667 = vunpack.c.h.b16 %v445
      %v668 = vunpack.c.l.b16 %v446
      %v669 = vunpack.c.h.b16 %v446
      %v670 = vunpack.c.l.b16 %v447
      %v671 = vunpack.c.h.b16 %v447
      %v672 = vunpack.c.l.b16 %v448
      %v673 = vunpack.c.h.b16 %v448
      %v674 = vunpack.c.l.b16 %v449
      %v675 = vunpack.c.h.b16 %v449
      %v676 = vunpack.c.l.b16 %v450
      %v677 = vunpack.c.h.b16 %v450
      %v678 = vunpack.c.l.b16 %v451
      %v679 = vunpack.c.h.b16 %v451
      %v680 = vunpack.c.l.b16 %v452
      %v681 = vunpack.c.h.b16 %v452
      %v682 = vunpack.c.l.b16 %v453
      %v683 = vunpack.c.h.b16 %v453
      %v684 = vunpack.c.l.b16 %v454
      %v685 = vunpack.c.h.b16 %v454
      %v686 = vpack.c.b16 %v560, %v558
      %v687 = vpack.c.b16 %v561, %v559
      %v688 = vpack.c.b16 %v564, %v562
      %v689 = vpack.c.b16 %v565, %v563
      %v690 = vpack.c.b16 %v568, %v566
      %v691 = vpack.c.b16 %v569, %v567
      %v692 = vpack.c.b16 %v572, %v570
      %v693 = vpack.c.b16 %v573, %v571
      %v694 = vpack.c.b16 %v576, %v574
      %v695 = vpack.c.b16 %v577, %v575
      %v696 = vpack.c.b16 %v580, %v578
      %v697 = vpack.c.b16 %v581, %v579
      %v698 = vpack.c.b16 %v584, %v582
      %v699 = vpack.c.b16 %v585, %v583
      %v700 = vpack.c.b16 %v588, %v586
      %v701 = vpack.c.b16 %v589, %v587
      %v702 = vpack.c.b16 %v592, %v590
      %v703 = vpack.c.b16 %v593, %v591
      %v704 = vpack.c.b16 %v596, %v594
      %v705 = vpack.c.b16 %v597, %v595
      %v706 = vpack.c.b16 %v600, %v598
      %v707 = vpack.c.b16 %v601, %v599
      %v708 = vpack.c.b16 %v604, %v602
      %v709 = vpack.c.b16 %v605, %v603
      %v710 = vpack.c.b16 %v608, %v606
      %v711 = vpack.c.b16 %v609, %v607
      %v712 = vpack.c.b16 %v612, %v610
      %v713 = vpack.c.b16 %v613, %v611
      %v714 = vpack.c.b16 %v616, %v614
      %v715 = vpack.c.b16 %v617, %v615
      %v716 = vpack.c.b16 %v620, %v618
      %v717 = vpack.c.b16 %v621, %v619
      %v718 = vpack.c.b16 %v624, %v622
      %v719 = vpack.c.b16 %v625, %v623
      %v720 = vpack.c.b16 %v628, %v626
      %v721 = vpack.c.b16 %v629, %v627
      %v722 = vpack.c.b16 %v632, %v630
      %v723 = vpack.c.b16 %v633, %v631
      %v724 = vpack.c.b16 %v636, %v634
      %v725 = vpack.c.b16 %v637, %v635
      %v726 = vpack.c.b16 %v640, %v638
      %v727 = vpack.c.b16 %v641, %v639
      %v728 = vpack.c.b16 %v644, %v642
      %v729 = vpack.c.b16 %v645, %v643
      %v730 = vpack.c.b16 %v648, %v646
      %v731 = vpack.c.b16 %v649, %v647
      %v732 = vpack.c.b16 %v652, %v650
      %v733 = vpack.c.b16 %v653, %v651
      %v734 = vpack.c.b16 %v656, %v654
      %v735 = vpack.c.b16 %v657, %v655
      %v736 = vpack.c.b16 %v660, %v658
      %v737 = vpack.c.b16 %v661, %v659
      %v738 = vpack.c.b16 %v664, %v662
      %v739 = vpack.c.b16 %v665, %v663
      %v740 = vpack.c.b16 %v668, %v666
      %v741 = vpack.c.b16 %v669, %v667
      %v742 = vpack.c.b16 %v672, %v670
      %v743 = vpack.c.b16 %v673, %v671
      %v744 = vpack.c.b16 %v676, %v674
      %v745 = vpack.c.b16 %v677, %v675
      %v746 = vpack.c.b16 %v680, %v678
      %v747 = vpack.c.b16 %v681, %v679
      %v748 = vpack.c.b16 %v684, %v682
      %v749 = vpack.c.b16 %v685, %v683
      %v846 = vunpack.c.l.b16 %v455
      %v847 = vunpack.c.l.b16 %v456
      %v848 = vunpack.c.l.b16 %v457
      %v849 = vunpack.c.l.b16 %v458
      %v850 = vunpack.c.l.b16 %v459
      %v851 = vunpack.c.l.b16 %v460
      %v852 = vunpack.c.l.b16 %v461
      %v853 = vunpack.c.l.b16 %v462
      %v854 = vunpack.c.l.b16 %v463
      %v855 = vunpack.c.l.b16 %v464
      %v856 = vunpack.c.l.b16 %v465
      %v857 = vunpack.c.l.b16 %v466
      %v858 = vunpack.c.l.b16 %v467
      %v859 = vunpack.c.l.b16 %v468
      %v860 = vunpack.c.l.b16 %v469
      %v861 = vunpack.c.l.b16 %v470
      %v862 = vunpack.c.l.b16 %v471
      %v863 = vunpack.c.l.b16 %v472
      %v864 = vunpack.c.l.b16 %v473
      %v865 = vunpack.c.l.b16 %v474
      %v866 = vunpack.c.l.b16 %v475
      %v867 = vunpack.c.l.b16 %v476
      %v868 = vunpack.c.l.b16 %v477
      %v869 = vunpack.c.l.b16 %v478
      %v870 = vunpack.c.l.b16 %v479
      %v871 = vunpack.c.l.b16 %v480
      %v872 = vunpack.c.l.b16 %v481
      %v873 = vunpack.c.l.b16 %v482
      %v874 = vunpack.c.l.b16 %v483
      %v875 = vunpack.c.l.b16 %v484
      %v876 = vunpack.c.l.b16 %v485
      %v877 = vunpack.c.l.b16 %v486
      %v878 = vpack.c.b16 %v847, %v846
      %v879 = vpack.c.b16 %v849, %v848
      %v880 = vpack.c.b16 %v851, %v850
      %v881 = vpack.c.b16 %v853, %v852
      %v882 = vpack.c.b16 %v855, %v854
      %v883 = vpack.c.b16 %v857, %v856
      %v884 = vpack.c.b16 %v859, %v858
      %v885 = vpack.c.b16 %v861, %v860
      %v886 = vpack.c.b16 %v863, %v862
      %v887 = vpack.c.b16 %v865, %v864
      %v888 = vpack.c.b16 %v867, %v866
      %v889 = vpack.c.b16 %v869, %v868
      %v890 = vpack.c.b16 %v871, %v870
      %v891 = vpack.c.b16 %v873, %v872
      %v892 = vpack.c.b16 %v875, %v874
      %v893 = vpack.c.b16 %v877, %v876
      %910 = vmatprep.subr.bf16.mxu0 0
      %911 = vmatpush1.bf16.msra.mxu0 %v878
      %912 = vmatprep.subr.bf16.mxu0 0
      %913 = vmatpush1.bf16.msra.mxu0 %v879
      %914 = vmatprep.subr.bf16.mxu0 0
      %915 = vmatpush1.bf16.msra.mxu0 %v880
      %916 = vmatprep.subr.bf16.mxu0 0
      %917 = vmatpush1.bf16.msra.mxu0 %v881
      %918 = vmatprep.subr.bf16.mxu0 0
      %919 = vmatpush1.bf16.msra.mxu0 %v882
      %920 = vmatprep.subr.bf16.mxu0 0
      %921 = vmatpush1.bf16.msra.mxu0 %v883
      %922 = vmatprep.subr.bf16.mxu0 0
      %923 = vmatpush1.bf16.msra.mxu0 %v884
      %924 = vmatprep.subr.bf16.mxu0 0
      %925 = vmatpush1.bf16.msra.mxu0 %v885
      %926 = vmatprep.subr.bf16.mxu0 0
      %927 = vmatpush1.bf16.msra.mxu0 %v886
      %928 = vmatprep.subr.bf16.mxu0 0
      %929 = vmatpush1.bf16.msra.mxu0 %v887
      %930 = vmatprep.subr.bf16.mxu0 0
      %931 = vmatpush1.bf16.msra.mxu0 %v888
      %932 = vmatprep.subr.bf16.mxu0 0
      %933 = vmatpush1.bf16.msra.mxu0 %v889
      %934 = vmatprep.subr.bf16.mxu0 0
      %935 = vmatpush1.bf16.msra.mxu0 %v890
      %936 = vmatprep.subr.bf16.mxu0 0
      %937 = vmatpush1.bf16.msra.mxu0 %v891
      %938 = vmatprep.subr.bf16.mxu0 0
      %939 = vmatpush1.bf16.msra.mxu0 %v892
      %940 = vmatprep.subr.bf16.mxu0 0
      %941 = vmatpush1.bf16.msra.mxu0 %v893
      %942 = vmatprep.mubr.bf16.mxu0 %v687
      %943 = vmatmul.mubr.bf16.gmra.mrb[0].mxu0 %v686
      %v944 = vpop.f32.mrb[0].mxu0
      %v945 = vadd.f32 %v492, %v944
      %v946 = vpop.f32.mrb[0].mxu0
      %v947 = vpop.f32.mrb[0].mxu0
      %v948 = vadd.f32 %v492, %v947
      %v949 = vpop.f32.mrb[0].mxu0
      %950 = vmatprep.mubr.bf16.mxu0 %v689
      %951 = vmatmul.mubr.bf16.gmra.mrb[0].mxu0 %v688
      %v952 = vpop.f32.mrb[0].mxu0
      %v953 = vadd.f32 %v492, %v952
      %v954 = vpop.f32.mrb[0].mxu0
      %v955 = vpop.f32.mrb[0].mxu0
      %v956 = vadd.f32 %v492, %v955
      %v957 = vpop.f32.mrb[0].mxu0
      %958 = vmatprep.mubr.bf16.mxu0 %v691
      %959 = vmatmul.mubr.bf16.gmra.mrb[0].mxu0 %v690
      %v960 = vpop.f32.mrb[0].mxu0
      %v961 = vadd.f32 %v492, %v960
      %v962 = vpop.f32.mrb[0].mxu0
      %v963 = vpop.f32.mrb[0].mxu0
      %v964 = vadd.f32 %v492, %v963
      %v965 = vpop.f32.mrb[0].mxu0
      %966 = vmatprep.mubr.bf16.mxu0 %v693
      %967 = vmatmul.mubr.bf16.gmra.mrb[0].mxu0 %v692
      %v968 = vpop.f32.mrb[0].mxu0
      %v969 = vadd.f32 %v492, %v968
      %v970 = vpop.f32.mrb[0].mxu0
      %v971 = vpop.f32.mrb[0].mxu0
      %v972 = vadd.f32 %v492, %v971
      %v973 = vpop.f32.mrb[0].mxu0
      %974 = vmatprep.mubr.bf16.mxu0 %v695
      %975 = vmatmul.mubr.bf16.gmra.mrb[0].mxu0 %v694
      %v976 = vpop.f32.mrb[0].mxu0
      %v977 = vadd.f32 %v492, %v976
      %v978 = vpop.f32.mrb[0].mxu0
      %v979 = vpop.f32.mrb[0].mxu0
      %v980 = vadd.f32 %v492, %v979
      %v981 = vpop.f32.mrb[0].mxu0
      %982 = vmatprep.mubr.bf16.mxu0 %v697
      %983 = vmatmul.mubr.bf16.gmra.mrb[0].mxu0 %v696
      %v984 = vpop.f32.mrb[0].mxu0
      %v985 = vadd.f32 %v492, %v984
      %v986 = vpop.f32.mrb[0].mxu0
      %v987 = vpop.f32.mrb[0].mxu0
      %v988 = vadd.f32 %v492, %v987
      %v989 = vpop.f32.mrb[0].mxu0
      %990 = vmatprep.mubr.bf16.mxu0 %v699
      %991 = vmatmul.mubr.bf16.gmra.mrb[0].mxu0 %v698
      %v992 = vpop.f32.mrb[0].mxu0
      %v993 = vadd.f32 %v492, %v992
      %v994 = vpop.f32.mrb[0].mxu0
      %v995 = vpop.f32.mrb[0].mxu0
      %v996 = vadd.f32 %v492, %v995
      %v997 = vpop.f32.mrb[0].mxu0
      %998 = vmatprep.mubr.bf16.mxu0 %v701
      %999 = vmatmul.mubr.bf16.gmra.mrb[0].mxu0 %v700
      %v1000 = vpop.f32.mrb[0].mxu0
      %v1001 = vadd.f32 %v492, %v1000
      %v1002 = vpop.f32.mrb[0].mxu0
      %v1003 = vpop.f32.mrb[0].mxu0
      %v1004 = vadd.f32 %v492, %v1003
      %v1005 = vpop.f32.mrb[0].mxu0
      %1006 = vmatprep.mubr.bf16.mxu0 %v703
      %1007 = vmatmul.mubr.bf16.gmra.mrb[0].mxu0 %v702
      %v1008 = vpop.f32.mrb[0].mxu0
      %v1009 = vadd.f32 %v492, %v1008
      %v1010 = vpop.f32.mrb[0].mxu0
      %v1011 = vpop.f32.mrb[0].mxu0
      %v1012 = vadd.f32 %v492, %v1011
      %v1013 = vpop.f32.mrb[0].mxu0
      %1014 = vmatprep.mubr.bf16.mxu0 %v705
      %1015 = vmatmul.mubr.bf16.gmra.mrb[0].mxu0 %v704
      %v1016 = vpop.f32.mrb[0].mxu0
      %v1017 = vadd.f32 %v492, %v1016
      %v1018 = vpop.f32.mrb[0].mxu0
      %v1019 = vpop.f32.mrb[0].mxu0
      %v1020 = vadd.f32 %v492, %v1019
      %v1021 = vpop.f32.mrb[0].mxu0
      %1022 = vmatprep.mubr.bf16.mxu0 %v707
      %1023 = vmatmul.mubr.bf16.gmra.mrb[0].mxu0 %v706
      %v1024 = vpop.f32.mrb[0].mxu0
      %v1025 = vadd.f32 %v492, %v1024
      %v1026 = vpop.f32.mrb[0].mxu0
      %v1027 = vpop.f32.mrb[0].mxu0
      %v1028 = vadd.f32 %v492, %v1027
      %v1029 = vpop.f32.mrb[0].mxu0
      %1030 = vmatprep.mubr.bf16.mxu0 %v709
      %1031 = vmatmul.mubr.bf16.gmra.mrb[0].mxu0 %v708
      %v1032 = vpop.f32.mrb[0].mxu0
      %v1033 = vadd.f32 %v492, %v1032
      %v1034 = vpop.f32.mrb[0].mxu0
      %v1035 = vpop.f32.mrb[0].mxu0
      %v1036 = vadd.f32 %v492, %v1035
      %v1037 = vpop.f32.mrb[0].mxu0
      %1038 = vmatprep.mubr.bf16.mxu0 %v711
      %1039 = vmatmul.mubr.bf16.gmra.mrb[0].mxu0 %v710
      %v1040 = vpop.f32.mrb[0].mxu0
      %v1041 = vadd.f32 %v492, %v1040
      %v1042 = vpop.f32.mrb[0].mxu0
      %v1043 = vpop.f32.mrb[0].mxu0
      %v1044 = vadd.f32 %v492, %v1043
      %v1045 = vpop.f32.mrb[0].mxu0
      %1046 = vmatprep.mubr.bf16.mxu0 %v713
      %1047 = vmatmul.mubr.bf16.gmra.mrb[0].mxu0 %v712
      %v1048 = vpop.f32.mrb[0].mxu0
      %v1049 = vadd.f32 %v492, %v1048
      %v1050 = vpop.f32.mrb[0].mxu0
      %v1051 = vpop.f32.mrb[0].mxu0
      %v1052 = vadd.f32 %v492, %v1051
      %v1053 = vpop.f32.mrb[0].mxu0
      %1054 = vmatprep.mubr.bf16.mxu0 %v715
      %1055 = vmatmul.mubr.bf16.gmra.mrb[0].mxu0 %v714
      %v1056 = vpop.f32.mrb[0].mxu0
      %v1057 = vadd.f32 %v492, %v1056
      %v1058 = vpop.f32.mrb[0].mxu0
      %v1059 = vpop.f32.mrb[0].mxu0
      %v1060 = vadd.f32 %v492, %v1059
      %v1061 = vpop.f32.mrb[0].mxu0
      %1062 = vmatprep.mubr.bf16.mxu0 %v717
      %1063 = vmatmul.mubr.bf16.gmra.mrb[0].mxu0 %v716
      %v1064 = vpop.f32.mrb[0].mxu0
      %v1065 = vadd.f32 %v492, %v1064
      %v1066 = vpop.f32.mrb[0].mxu0
      %v1067 = vpop.f32.mrb[0].mxu0
      %v1068 = vadd.f32 %v492, %v1067
      %v1069 = vpop.f32.mrb[0].mxu0
      %1070 = vmatprep.mubr.bf16.mxu0 %v719
      %1071 = vmatmul.mubr.bf16.gmra.mrb[0].mxu0 %v718
      %v1072 = vpop.f32.mrb[0].mxu0
      %v1073 = vadd.f32 %v492, %v1072
      %v1074 = vpop.f32.mrb[0].mxu0
      %v1075 = vpop.f32.mrb[0].mxu0
      %v1076 = vadd.f32 %v492, %v1075
      %v1077 = vpop.f32.mrb[0].mxu0
      %1078 = vmatprep.mubr.bf16.mxu0 %v721
      %1079 = vmatmul.mubr.bf16.gmra.mrb[0].mxu0 %v720
      %v1080 = vpop.f32.mrb[0].mxu0
      %v1081 = vadd.f32 %v492, %v1080
      %v1082 = vpop.f32.mrb[0].mxu0
      %v1083 = vpop.f32.mrb[0].mxu0
      %v1084 = vadd.f32 %v492, %v1083
      %v1085 = vpop.f32.mrb[0].mxu0
      %1086 = vmatprep.mubr.bf16.mxu0 %v723
      %1087 = vmatmul.mubr.bf16.gmra.mrb[0].mxu0 %v722
      %v1088 = vpop.f32.mrb[0].mxu0
      %v1089 = vadd.f32 %v492, %v1088
      %v1090 = vpop.f32.mrb[0].mxu0
      %v1091 = vpop.f32.mrb[0].mxu0
      %v1092 = vadd.f32 %v492, %v1091
      %v1093 = vpop.f32.mrb[0].mxu0
      %1094 = vmatprep.mubr.bf16.mxu0 %v725
      %1095 = vmatmul.mubr.bf16.gmra.mrb[0].mxu0 %v724
      %v1096 = vpop.f32.mrb[0].mxu0
      %v1097 = vadd.f32 %v492, %v1096
      %v1098 = vpop.f32.mrb[0].mxu0
      %v1099 = vpop.f32.mrb[0].mxu0
      %v1100 = vadd.f32 %v492, %v1099
      %v1101 = vpop.f32.mrb[0].mxu0
      %1102 = vmatprep.mubr.bf16.mxu0 %v727
      %1103 = vmatmul.mubr.bf16.gmra.mrb[0].mxu0 %v726
      %v1104 = vpop.f32.mrb[0].mxu0
      %v1105 = vadd.f32 %v492, %v1104
      %v1106 = vpop.f32.mrb[0].mxu0
      %v1107 = vpop.f32.mrb[0].mxu0
      %v1108 = vadd.f32 %v492, %v1107
      %v1109 = vpop.f32.mrb[0].mxu0
      %1110 = vmatprep.mubr.bf16.mxu0 %v729
      %1111 = vmatmul.mubr.bf16.gmra.mrb[0].mxu0 %v728
      %v1112 = vpop.f32.mrb[0].mxu0
      %v1113 = vadd.f32 %v492, %v1112
      %v1114 = vpop.f32.mrb[0].mxu0
      %v1115 = vpop.f32.mrb[0].mxu0
      %v1116 = vadd.f32 %v492, %v1115
      %v1117 = vpop.f32.mrb[0].mxu0
      %1118 = vmatprep.mubr.bf16.mxu0 %v731
      %1119 = vmatmul.mubr.bf16.gmra.mrb[0].mxu0 %v730
      %v1120 = vpop.f32.mrb[0].mxu0
      %v1121 = vadd.f32 %v492, %v1120
      %v1122 = vpop.f32.mrb[0].mxu0
      %v1123 = vpop.f32.mrb[0].mxu0
      %v1124 = vadd.f32 %v492, %v1123
      %v1125 = vpop.f32.mrb[0].mxu0
      %1126 = vmatprep.mubr.bf16.mxu0 %v733
      %1127 = vmatmul.mubr.bf16.gmra.mrb[0].mxu0 %v732
      %v1128 = vpop.f32.mrb[0].mxu0
      %v1129 = vadd.f32 %v492, %v1128
      %v1130 = vpop.f32.mrb[0].mxu0
      %v1131 = vpop.f32.mrb[0].mxu0
      %v1132 = vadd.f32 %v492, %v1131
      %v1133 = vpop.f32.mrb[0].mxu0
      %1134 = vmatprep.mubr.bf16.mxu0 %v735
      %1135 = vmatmul.mubr.bf16.gmra.mrb[0].mxu0 %v734
      %v1136 = vpop.f32.mrb[0].mxu0
      %v1137 = vadd.f32 %v492, %v1136
      %v1138 = vpop.f32.mrb[0].mxu0
      %v1139 = vpop.f32.mrb[0].mxu0
      %v1140 = vadd.f32 %v492, %v1139
      %v1141 = vpop.f32.mrb[0].mxu0
      %1142 = vmatprep.mubr.bf16.mxu0 %v737
      %1143 = vmatmul.mubr.bf16.gmra.mrb[0].mxu0 %v736
      %v1144 = vpop.f32.mrb[0].mxu0
      %v1145 = vadd.f32 %v492, %v1144
      %v1146 = vpop.f32.mrb[0].mxu0
      %v1147 = vpop.f32.mrb[0].mxu0
      %v1148 = vadd.f32 %v492, %v1147
      %v1149 = vpop.f32.mrb[0].mxu0
      %1150 = vmatprep.mubr.bf16.mxu0 %v739
      %1151 = vmatmul.mubr.bf16.gmra.mrb[0].mxu0 %v738
      %v1152 = vpop.f32.mrb[0].mxu0
      %v1153 = vadd.f32 %v492, %v1152
      %v1154 = vpop.f32.mrb[0].mxu0
      %v1155 = vpop.f32.mrb[0].mxu0
      %v1156 = vadd.f32 %v492, %v1155
      %v1157 = vpop.f32.mrb[0].mxu0
      %1158 = vmatprep.mubr.bf16.mxu0 %v741
      %1159 = vmatmul.mubr.bf16.gmra.mrb[0].mxu0 %v740
      %v1160 = vpop.f32.mrb[0].mxu0
      %v1161 = vadd.f32 %v492, %v1160
      %v1162 = vpop.f32.mrb[0].mxu0
      %v1163 = vpop.f32.mrb[0].mxu0
      %v1164 = vadd.f32 %v492, %v1163
      %v1165 = vpop.f32.mrb[0].mxu0
      %1166 = vmatprep.mubr.bf16.mxu0 %v743
      %1167 = vmatmul.mubr.bf16.gmra.mrb[0].mxu0 %v742
      %v1168 = vpop.f32.mrb[0].mxu0
      %v1169 = vadd.f32 %v492, %v1168
      %v1170 = vpop.f32.mrb[0].mxu0
      %v1171 = vpop.f32.mrb[0].mxu0
      %v1172 = vadd.f32 %v492, %v1171
      %v1173 = vpop.f32.mrb[0].mxu0
      %1174 = vmatprep.mubr.bf16.mxu0 %v745
      %1175 = vmatmul.mubr.bf16.gmra.mrb[0].mxu0 %v744
      %v1176 = vpop.f32.mrb[0].mxu0
      %v1177 = vadd.f32 %v492, %v1176
      %v1178 = vpop.f32.mrb[0].mxu0
      %v1179 = vpop.f32.mrb[0].mxu0
      %v1180 = vadd.f32 %v492, %v1179
      %v1181 = vpop.f32.mrb[0].mxu0
      %1182 = vmatprep.mubr.bf16.mxu0 %v747
      %1183 = vmatmul.mubr.bf16.gmra.mrb[0].mxu0 %v746
      %v1184 = vpop.f32.mrb[0].mxu0
      %v1185 = vadd.f32 %v492, %v1184
      %v1186 = vpop.f32.mrb[0].mxu0
      %v1187 = vpop.f32.mrb[0].mxu0
      %v1188 = vadd.f32 %v492, %v1187
      %v1189 = vpop.f32.mrb[0].mxu0
      %1190 = vmatprep.mubr.bf16.mxu0 %v749
      %1191 = vmatmul.mubr.bf16.gmra.mrb[0].mxu0 %v748
      %v1192 = vpop.f32.mrb[0].mxu0
      %v1193 = vadd.f32 %v492, %v1192
      %v1194 = vpop.f32.mrb[0].mxu0
      %v1195 = vpop.f32.mrb[0].mxu0
      %v1196 = vadd.f32 %v492, %v1195
      %v1197 = vpop.f32.mrb[0].mxu0
      %1198 = vdwg.mxu0
      %v1199 = vmul.f32 %v945, 0.01
      %v1200 = vmul.f32 %v948, 0.01
      %v1201 = vmul.f32 %v953, 0.01
      %v1202 = vmul.f32 %v956, 0.01
      %v1203 = vmul.f32 %v961, 0.01
      %v1204 = vmul.f32 %v964, 0.01
      %v1205 = vmul.f32 %v969, 0.01
      %v1206 = vmul.f32 %v972, 0.01
      %v1207 = vmul.f32 %v977, 0.01
      %v1208 = vmul.f32 %v980, 0.01
      %v1209 = vmul.f32 %v985, 0.01
      %v1210 = vmul.f32 %v988, 0.01
      %v1211 = vmul.f32 %v993, 0.01
      %v1212 = vmul.f32 %v996, 0.01
      %v1213 = vmul.f32 %v1001, 0.01
      %v1214 = vmul.f32 %v1004, 0.01
      %v1215 = vmul.f32 %v1009, 0.01
      %v1216 = vmul.f32 %v1012, 0.01
      %v1217 = vmul.f32 %v1017, 0.01
      %v1218 = vmul.f32 %v1020, 0.01
      %v1219 = vmul.f32 %v1025, 0.01
      %v1220 = vmul.f32 %v1028, 0.01
      %v1221 = vmul.f32 %v1033, 0.01
      %v1222 = vmul.f32 %v1036, 0.01
      %v1223 = vmul.f32 %v1041, 0.01
      %v1224 = vmul.f32 %v1044, 0.01
      %v1225 = vmul.f32 %v1049, 0.01
      %v1226 = vmul.f32 %v1052, 0.01
      %v1227 = vmul.f32 %v1057, 0.01
      %v1228 = vmul.f32 %v1060, 0.01
      %v1229 = vmul.f32 %v1065, 0.01
      %v1230 = vmul.f32 %v1068, 0.01
      %v1231 = vmul.f32 %v1073, 0.01
      %v1232 = vmul.f32 %v1076, 0.01
      %v1233 = vmul.f32 %v1081, 0.01
      %v1234 = vmul.f32 %v1084, 0.01
      %v1235 = vmul.f32 %v1089, 0.01
      %v1236 = vmul.f32 %v1092, 0.01
      %v1237 = vmul.f32 %v1097, 0.01
      %v1238 = vmul.f32 %v1100, 0.01
      %v1239 = vmul.f32 %v1105, 0.01
      %v1240 = vmul.f32 %v1108, 0.01
      %v1241 = vmul.f32 %v1113, 0.01
      %v1242 = vmul.f32 %v1116, 0.01
      %v1243 = vmul.f32 %v1121, 0.01
      %v1244 = vmul.f32 %v1124, 0.01
      %v1245 = vmul.f32 %v1129, 0.01
      %v1246 = vmul.f32 %v1132, 0.01
      %v1247 = vmul.f32 %v1137, 0.01
      %v1248 = vmul.f32 %v1140, 0.01
      %v1249 = vmul.f32 %v1145, 0.01
      %v1250 = vmul.f32 %v1148, 0.01
      %v1251 = vmul.f32 %v1153, 0.01
      %v1252 = vmul.f32 %v1156, 0.01
      %v1253 = vmul.f32 %v1161, 0.01
      %v1254 = vmul.f32 %v1164, 0.01
      %v1255 = vmul.f32 %v1169, 0.01
      %v1256 = vmul.f32 %v1172, 0.01
      %v1257 = vmul.f32 %v1177, 0.01
      %v1258 = vmul.f32 %v1180, 0.01
      %v1259 = vmul.f32 %v1185, 0.01
      %v1260 = vmul.f32 %v1188, 0.01
      %v1261 = vmul.f32 %v1193, 0.01
      %v1262 = vmul.f32 %v1196, 0.01
      %v1263 = vmax.f32 %v945, %v1199
      %v1264 = vmax.f32 %v948, %v1200
      %v1265 = vmax.f32 %v953, %v1201
      %v1266 = vmax.f32 %v956, %v1202
      %v1267 = vmax.f32 %v961, %v1203
      %v1268 = vmax.f32 %v964, %v1204
      %v1269 = vmax.f32 %v969, %v1205
      %v1270 = vmax.f32 %v972, %v1206
      %v1271 = vmax.f32 %v977, %v1207
      %v1272 = vmax.f32 %v980, %v1208
      %v1273 = vmax.f32 %v985, %v1209
      %v1274 = vmax.f32 %v988, %v1210
      %v1275 = vmax.f32 %v993, %v1211
      %v1276 = vmax.f32 %v996, %v1212
      %v1277 = vmax.f32 %v1001, %v1213
      %v1278 = vmax.f32 %v1004, %v1214
      %v1279 = vmax.f32 %v1009, %v1215
      %v1280 = vmax.f32 %v1012, %v1216
      %v1281 = vmax.f32 %v1017, %v1217
      %v1282 = vmax.f32 %v1020, %v1218
      %v1283 = vmax.f32 %v1025, %v1219
      %v1284 = vmax.f32 %v1028, %v1220
      %v1285 = vmax.f32 %v1033, %v1221
      %v1286 = vmax.f32 %v1036, %v1222
      %v1287 = vmax.f32 %v1041, %v1223
      %v1288 = vmax.f32 %v1044, %v1224
      %v1289 = vmax.f32 %v1049, %v1225
      %v1290 = vmax.f32 %v1052, %v1226
      %v1291 = vmax.f32 %v1057, %v1227
      %v1292 = vmax.f32 %v1060, %v1228
      %v1293 = vmax.f32 %v1065, %v1229
      %v1294 = vmax.f32 %v1068, %v1230
      %v1295 = vmax.f32 %v1073, %v1231
      %v1296 = vmax.f32 %v1076, %v1232
      %v1297 = vmax.f32 %v1081, %v1233
      %v1298 = vmax.f32 %v1084, %v1234
      %v1299 = vmax.f32 %v1089, %v1235
      %v1300 = vmax.f32 %v1092, %v1236
      %v1301 = vmax.f32 %v1097, %v1237
      %v1302 = vmax.f32 %v1100, %v1238
      %v1303 = vmax.f32 %v1105, %v1239
      %v1304 = vmax.f32 %v1108, %v1240
      %v1305 = vmax.f32 %v1113, %v1241
      %v1306 = vmax.f32 %v1116, %v1242
      %v1307 = vmax.f32 %v1121, %v1243
      %v1308 = vmax.f32 %v1124, %v1244
      %v1309 = vmax.f32 %v1129, %v1245
      %v1310 = vmax.f32 %v1132, %v1246
      %v1311 = vmax.f32 %v1137, %v1247
      %v1312 = vmax.f32 %v1140, %v1248
      %v1313 = vmax.f32 %v1145, %v1249
      %v1314 = vmax.f32 %v1148, %v1250
      %v1315 = vmax.f32 %v1153, %v1251
      %v1316 = vmax.f32 %v1156, %v1252
      %v1317 = vmax.f32 %v1161, %v1253
      %v1318 = vmax.f32 %v1164, %v1254
      %v1319 = vmax.f32 %v1169, %v1255
      %v1320 = vmax.f32 %v1172, %v1256
      %v1321 = vmax.f32 %v1177, %v1257
      %v1322 = vmax.f32 %v1180, %v1258
      %v1323 = vmax.f32 %v1185, %v1259
      %v1324 = vmax.f32 %v1188, %v1260
      %v1325 = vmax.f32 %v1193, %v1261
      %v1326 = vmax.f32 %v1196, %v1262
      %v1327 = vpack.c.bf16 %v1263, %v1263
      %v1328 = vpack.c.bf16 %v1264, %v1264
      %v1329 = vpack.c.bf16 %v1265, %v1265
      %v1330 = vpack.c.bf16 %v1266, %v1266
      %v1331 = vpack.c.bf16 %v1267, %v1267
      %v1332 = vpack.c.bf16 %v1268, %v1268
      %v1333 = vpack.c.bf16 %v1269, %v1269
      %v1334 = vpack.c.bf16 %v1270, %v1270
      %v1335 = vpack.c.bf16 %v1271, %v1271
      %v1336 = vpack.c.bf16 %v1272, %v1272
      %v1337 = vpack.c.bf16 %v1273, %v1273
      %v1338 = vpack.c.bf16 %v1274, %v1274
      %v1339 = vpack.c.bf16 %v1275, %v1275
      %v1340 = vpack.c.bf16 %v1276, %v1276
      %v1341 = vpack.c.bf16 %v1277, %v1277
      %v1342 = vpack.c.bf16 %v1278, %v1278
      %v1343 = vpack.c.bf16 %v1279, %v1279
      %v1344 = vpack.c.bf16 %v1280, %v1280
      %v1345 = vpack.c.bf16 %v1281, %v1281
      %v1346 = vpack.c.bf16 %v1282, %v1282
      %v1347 = vpack.c.bf16 %v1283, %v1283
      %v1348 = vpack.c.bf16 %v1284, %v1284
      %v1349 = vpack.c.bf16 %v1285, %v1285
      %v1350 = vpack.c.bf16 %v1286, %v1286
      %v1351 = vpack.c.bf16 %v1287, %v1287
      %v1352 = vpack.c.bf16 %v1288, %v1288
      %v1353 = vpack.c.bf16 %v1289, %v1289
      %v1354 = vpack.c.bf16 %v1290, %v1290
      %v1355 = vpack.c.bf16 %v1291, %v1291
      %v1356 = vpack.c.bf16 %v1292, %v1292
      %v1357 = vpack.c.bf16 %v1293, %v1293
      %v1358 = vpack.c.bf16 %v1294, %v1294
      %v1359 = vpack.c.bf16 %v1295, %v1295
      %v1360 = vpack.c.bf16 %v1296, %v1296
      %v1361 = vpack.c.bf16 %v1297, %v1297
      %v1362 = vpack.c.bf16 %v1298, %v1298
      %v1363 = vpack.c.bf16 %v1299, %v1299
      %v1364 = vpack.c.bf16 %v1300, %v1300
      %v1365 = vpack.c.bf16 %v1301, %v1301
      %v1366 = vpack.c.bf16 %v1302, %v1302
      %v1367 = vpack.c.bf16 %v1303, %v1303
      %v1368 = vpack.c.bf16 %v1304, %v1304
      %v1369 = vpack.c.bf16 %v1305, %v1305
      %v1370 = vpack.c.bf16 %v1306, %v1306
      %v1371 = vpack.c.bf16 %v1307, %v1307
      %v1372 = vpack.c.bf16 %v1308, %v1308
      %v1373 = vpack.c.bf16 %v1309, %v1309
      %v1374 = vpack.c.bf16 %v1310, %v1310
      %v1375 = vpack.c.bf16 %v1311, %v1311
      %v1376 = vpack.c.bf16 %v1312, %v1312
      %v1377 = vpack.c.bf16 %v1313, %v1313
      %v1378 = vpack.c.bf16 %v1314, %v1314
      %v1379 = vpack.c.bf16 %v1315, %v1315
      %v1380 = vpack.c.bf16 %v1316, %v1316
      %v1381 = vpack.c.bf16 %v1317, %v1317
      %v1382 = vpack.c.bf16 %v1318, %v1318
      %v1383 = vpack.c.bf16 %v1319, %v1319
      %v1384 = vpack.c.bf16 %v1320, %v1320
      %v1385 = vpack.c.bf16 %v1321, %v1321
      %v1386 = vpack.c.bf16 %v1322, %v1322
      %v1387 = vpack.c.bf16 %v1323, %v1323
      %v1388 = vpack.c.bf16 %v1324, %v1324
      %v1389 = vpack.c.bf16 %v1325, %v1325
      %v1390 = vpack.c.bf16 %v1326, %v1326
      %vm1391 = vcmask 257024
      %1392 = vst.msk [vmem:[#allocation2] sm:$0xf] %vm1391, %v1327
      %1393 = vst.msk [vmem:[#allocation2 + $0x8] sm:$0xf] %vm1391, %v1335
      %1394 = vst.msk [vmem:[#allocation2 + $0x10] sm:$0xf] %vm1391, %v1343
      %1395 = vst.msk [vmem:[#allocation2 + $0x18] sm:$0xf] %vm1391, %v1351
      %1396 = vst.msk [vmem:[#allocation2 + $0x20] sm:$0xf] %vm1391, %v1359
      %1397 = vst.msk [vmem:[#allocation2 + $0x28] sm:$0xf] %vm1391, %v1367
      %1398 = vst.msk [vmem:[#allocation2 + $0x30] sm:$0xf] %vm1391, %v1375
      %1399 = vst.msk [vmem:[#allocation2 + $0x38] sm:$0xf] %vm1391, %v1383
      %v1408 = vunpack.c.l.b16 %v1328
      %v1409 = vunpack.c.l.b16 %v1336
      %v1410 = vunpack.c.l.b16 %v1344
      %v1411 = vunpack.c.l.b16 %v1352
      %v1412 = vunpack.c.l.b16 %v1360
      %v1413 = vunpack.c.l.b16 %v1368
      %v1414 = vunpack.c.l.b16 %v1376
      %v1415 = vunpack.c.l.b16 %v1384
      %v1416 = vpack.c.b16 %v1408, %v1408
      %v1417 = vpack.c.b16 %v1409, %v1409
      %v1418 = vpack.c.b16 %v1410, %v1410
      %v1419 = vpack.c.b16 %v1411, %v1411
      %v1420 = vpack.c.b16 %v1412, %v1412
      %v1421 = vpack.c.b16 %v1413, %v1413
      %v1422 = vpack.c.b16 %v1414, %v1414
      %v1423 = vpack.c.b16 %v1415, %v1415
      %1424 = vrot.lane.b32.xlu0 %v1416, 32
      %v1425 = vpop.permute.xlu0 %1424
      %1426 = vrot.lane.b32.xlu0 %v1417, 32
      %v1427 = vpop.permute.xlu0 %1426
      %1428 = vrot.lane.b32.xlu0 %v1418, 32
      %v1429 = vpop.permute.xlu0 %1428
      %1430 = vrot.lane.b32.xlu0 %v1419, 32
      %v1431 = vpop.permute.xlu0 %1430
      %1432 = vrot.lane.b32.xlu0 %v1420, 32
      %v1433 = vpop.permute.xlu0 %1432
      %1434 = vrot.lane.b32.xlu0 %v1421, 32
      %v1435 = vpop.permute.xlu0 %1434
      %1436 = vrot.lane.b32.xlu0 %v1422, 32
      %v1437 = vpop.permute.xlu0 %1436
      %1438 = vrot.lane.b32.xlu0 %v1423, 32
      %v1439 = vpop.permute.xlu0 %1438
      %vm1448 = vcmask 519424
      %1449 = vst.msk [vmem:[#allocation2] sm:$0xf] %vm1448, %v1425
      %1450 = vst.msk [vmem:[#allocation2 + $0x8] sm:$0xf] %vm1448, %v1427
      %1451 = vst.msk [vmem:[#allocation2 + $0x10] sm:$0xf] %vm1448, %v1429
      %1452 = vst.msk [vmem:[#allocation2 + $0x18] sm:$0xf] %vm1448, %v1431
      %1453 = vst.msk [vmem:[#allocation2 + $0x20] sm:$0xf] %vm1448, %v1433
      %1454 = vst.msk [vmem:[#allocation2 + $0x28] sm:$0xf] %vm1448, %v1435
      %1455 = vst.msk [vmem:[#allocation2 + $0x30] sm:$0xf] %vm1448, %v1437
      %1456 = vst.msk [vmem:[#allocation2 + $0x38] sm:$0xf] %vm1448, %v1439
      %v1465 = vunpack.c.l.b16 %v1329
      %v1466 = vunpack.c.l.b16 %v1337
      %v1467 = vunpack.c.l.b16 %v1345
      %v1468 = vunpack.c.l.b16 %v1353
      %v1469 = vunpack.c.l.b16 %v1361
      %v1470 = vunpack.c.l.b16 %v1369
      %v1471 = vunpack.c.l.b16 %v1377
      %v1472 = vunpack.c.l.b16 %v1385
      %v1473 = vpack.c.b16 %v1465, %v1465
      %v1474 = vpack.c.b16 %v1466, %v1466
      %v1475 = vpack.c.b16 %v1467, %v1467
      %v1476 = vpack.c.b16 %v1468, %v1468
      %v1477 = vpack.c.b16 %v1469, %v1469
      %v1478 = vpack.c.b16 %v1470, %v1470
      %v1479 = vpack.c.b16 %v1471, %v1471
      %v1480 = vpack.c.b16 %v1472, %v1472
      %1481 = vrot.lane.b32.xlu0 %v1473, 64
      %v1482 = vpop.permute.xlu0 %1481
      %1483 = vrot.lane.b32.xlu0 %v1474, 64
      %v1484 = vpop.permute.xlu0 %1483
      %1485 = vrot.lane.b32.xlu0 %v1475, 64
      %v1486 = vpop.permute.xlu0 %1485
      %1487 = vrot.lane.b32.xlu0 %v1476, 64
      %v1488 = vpop.permute.xlu0 %1487
      %1489 = vrot.lane.b32.xlu0 %v1477, 64
      %v1490 = vpop.permute.xlu0 %1489
      %1491 = vrot.lane.b32.xlu0 %v1478, 64
      %v1492 = vpop.permute.xlu0 %1491
      %1493 = vrot.lane.b32.xlu0 %v1479, 64
      %v1494 = vpop.permute.xlu0 %1493
      %1495 = vrot.lane.b32.xlu0 %v1480, 64
      %v1496 = vpop.permute.xlu0 %1495
      %vm1505 = vcmask 781824
      %1506 = vst.msk [vmem:[#allocation2] sm:$0xf] %vm1505, %v1482
      %1507 = vst.msk [vmem:[#allocation2 + $0x8] sm:$0xf] %vm1505, %v1484
      %1508 = vst.msk [vmem:[#allocation2 + $0x10] sm:$0xf] %vm1505, %v1486
      %1509 = vst.msk [vmem:[#allocation2 + $0x18] sm:$0xf] %vm1505, %v1488
      %1510 = vst.msk [vmem:[#allocation2 + $0x20] sm:$0xf] %vm1505, %v1490
      %1511 = vst.msk [vmem:[#allocation2 + $0x28] sm:$0xf] %vm1505, %v1492
      %1512 = vst.msk [vmem:[#allocation2 + $0x30] sm:$0xf] %vm1505, %v1494
      %1513 = vst.msk [vmem:[#allocation2 + $0x38] sm:$0xf] %vm1505, %v1496
      %v1522 = vunpack.c.l.b16 %v1330
      %v1523 = vunpack.c.l.b16 %v1338
      %v1524 = vunpack.c.l.b16 %v1346
      %v1525 = vunpack.c.l.b16 %v1354
      %v1526 = vunpack.c.l.b16 %v1362
      %v1527 = vunpack.c.l.b16 %v1370
      %v1528 = vunpack.c.l.b16 %v1378
      %v1529 = vunpack.c.l.b16 %v1386
      %v1530 = vpack.c.b16 %v1522, %v1522
      %v1531 = vpack.c.b16 %v1523, %v1523
      %v1532 = vpack.c.b16 %v1524, %v1524
      %v1533 = vpack.c.b16 %v1525, %v1525
      %v1534 = vpack.c.b16 %v1526, %v1526
      %v1535 = vpack.c.b16 %v1527, %v1527
      %v1536 = vpack.c.b16 %v1528, %v1528
      %v1537 = vpack.c.b16 %v1529, %v1529
      %1538 = vrot.lane.b32.xlu0 %v1530, 96
      %v1539 = vpop.permute.xlu0 %1538
      %1540 = vrot.lane.b32.xlu0 %v1531, 96
      %v1541 = vpop.permute.xlu0 %1540
      %1542 = vrot.lane.b32.xlu0 %v1532, 96
      %v1543 = vpop.permute.xlu0 %1542
      %1544 = vrot.lane.b32.xlu0 %v1533, 96
      %v1545 = vpop.permute.xlu0 %1544
      %1546 = vrot.lane.b32.xlu0 %v1534, 96
      %v1547 = vpop.permute.xlu0 %1546
      %1548 = vrot.lane.b32.xlu0 %v1535, 96
      %v1549 = vpop.permute.xlu0 %1548
      %1550 = vrot.lane.b32.xlu0 %v1536, 96
      %v1551 = vpop.permute.xlu0 %1550
      %1552 = vrot.lane.b32.xlu0 %v1537, 96
      %v1553 = vpop.permute.xlu0 %1552
      %vm1562 = vcmask 1044224
      %1563 = vst.msk [vmem:[#allocation2] sm:$0xf] %vm1562, %v1539
      %1564 = vst.msk [vmem:[#allocation2 + $0x8] sm:$0xf] %vm1562, %v1541
      %1565 = vst.msk [vmem:[#allocation2 + $0x10] sm:$0xf] %vm1562, %v1543
      %1566 = vst.msk [vmem:[#allocation2 + $0x18] sm:$0xf] %vm1562, %v1545
      %1567 = vst.msk [vmem:[#allocation2 + $0x20] sm:$0xf] %vm1562, %v1547
      %1568 = vst.msk [vmem:[#allocation2 + $0x28] sm:$0xf] %vm1562, %v1549
      %1569 = vst.msk [vmem:[#allocation2 + $0x30] sm:$0xf] %vm1562, %v1551
      %1570 = vst.msk [vmem:[#allocation2 + $0x38] sm:$0xf] %vm1562, %v1553
      %1571 = vst.msk [vmem:[#allocation2 + $0x4] sm:$0xf] %vm1391, %v1331
      %1572 = vst.msk [vmem:[#allocation2 + $0xc] sm:$0xf] %vm1391, %v1339
      %1573 = vst.msk [vmem:[#allocation2 + $0x14] sm:$0xf] %vm1391, %v1347
      %1574 = vst.msk [vmem:[#allocation2 + $0x1c] sm:$0xf] %vm1391, %v1355
      %1575 = vst.msk [vmem:[#allocation2 + $0x24] sm:$0xf] %vm1391, %v1363
      %1576 = vst.msk [vmem:[#allocation2 + $0x2c] sm:$0xf] %vm1391, %v1371
      %1577 = vst.msk [vmem:[#allocation2 + $0x34] sm:$0xf] %vm1391, %v1379
      %1578 = vst.msk [vmem:[#allocation2 + $0x3c] sm:$0xf] %vm1391, %v1387
      %v1587 = vunpack.c.l.b16 %v1332
      %v1588 = vunpack.c.l.b16 %v1340
      %v1589 = vunpack.c.l.b16 %v1348
      %v1590 = vunpack.c.l.b16 %v1356
      %v1591 = vunpack.c.l.b16 %v1364
      %v1592 = vunpack.c.l.b16 %v1372
      %v1593 = vunpack.c.l.b16 %v1380
      %v1594 = vunpack.c.l.b16 %v1388
      %v1595 = vpack.c.b16 %v1587, %v1587
      %v1596 = vpack.c.b16 %v1588, %v1588
      %v1597 = vpack.c.b16 %v1589, %v1589
      %v1598 = vpack.c.b16 %v1590, %v1590
      %v1599 = vpack.c.b16 %v1591, %v1591
      %v1600 = vpack.c.b16 %v1592, %v1592
      %v1601 = vpack.c.b16 %v1593, %v1593
      %v1602 = vpack.c.b16 %v1594, %v1594
      %1603 = vrot.lane.b32.xlu0 %v1595, 32
      %v1604 = vpop.permute.xlu0 %1603
      %1605 = vrot.lane.b32.xlu0 %v1596, 32
      %v1606 = vpop.permute.xlu0 %1605
      %1607 = vrot.lane.b32.xlu0 %v1597, 32
      %v1608 = vpop.permute.xlu0 %1607
      %1609 = vrot.lane.b32.xlu0 %v1598, 32
      %v1610 = vpop.permute.xlu0 %1609
      %1611 = vrot.lane.b32.xlu0 %v1599, 32
      %v1612 = vpop.permute.xlu0 %1611
      %1613 = vrot.lane.b32.xlu0 %v1600, 32
      %v1614 = vpop.permute.xlu0 %1613
      %1615 = vrot.lane.b32.xlu0 %v1601, 32
      %v1616 = vpop.permute.xlu0 %1615
      %1617 = vrot.lane.b32.xlu0 %v1602, 32
      %v1618 = vpop.permute.xlu0 %1617
      %1627 = vst.msk [vmem:[#allocation2 + $0x4] sm:$0xf] %vm1448, %v1604
      %1628 = vst.msk [vmem:[#allocation2 + $0xc] sm:$0xf] %vm1448, %v1606
      %1629 = vst.msk [vmem:[#allocation2 + $0x14] sm:$0xf] %vm1448, %v1608
      %1630 = vst.msk [vmem:[#allocation2 + $0x1c] sm:$0xf] %vm1448, %v1610
      %1631 = vst.msk [vmem:[#allocation2 + $0x24] sm:$0xf] %vm1448, %v1612
      %1632 = vst.msk [vmem:[#allocation2 + $0x2c] sm:$0xf] %vm1448, %v1614
      %1633 = vst.msk [vmem:[#allocation2 + $0x34] sm:$0xf] %vm1448, %v1616
      %1634 = vst.msk [vmem:[#allocation2 + $0x3c] sm:$0xf] %vm1448, %v1618
      %v1643 = vunpack.c.l.b16 %v1333
      %v1644 = vunpack.c.l.b16 %v1341
      %v1645 = vunpack.c.l.b16 %v1349
      %v1646 = vunpack.c.l.b16 %v1357
      %v1647 = vunpack.c.l.b16 %v1365
      %v1648 = vunpack.c.l.b16 %v1373
      %v1649 = vunpack.c.l.b16 %v1381
      %v1650 = vunpack.c.l.b16 %v1389
      %v1651 = vpack.c.b16 %v1643, %v1643
      %v1652 = vpack.c.b16 %v1644, %v1644
      %v1653 = vpack.c.b16 %v1645, %v1645
      %v1654 = vpack.c.b16 %v1646, %v1646
      %v1655 = vpack.c.b16 %v1647, %v1647
      %v1656 = vpack.c.b16 %v1648, %v1648
      %v1657 = vpack.c.b16 %v1649, %v1649
      %v1658 = vpack.c.b16 %v1650, %v1650
      %1659 = vrot.lane.b32.xlu0 %v1651, 64
      %v1660 = vpop.permute.xlu0 %1659
      %1661 = vrot.lane.b32.xlu0 %v1652, 64
      %v1662 = vpop.permute.xlu0 %1661
      %1663 = vrot.lane.b32.xlu0 %v1653, 64
      %v1664 = vpop.permute.xlu0 %1663
      %1665 = vrot.lane.b32.xlu0 %v1654, 64
      %v1666 = vpop.permute.xlu0 %1665
      %1667 = vrot.lane.b32.xlu0 %v1655, 64
      %v1668 = vpop.permute.xlu0 %1667
      %1669 = vrot.lane.b32.xlu0 %v1656, 64
      %v1670 = vpop.permute.xlu0 %1669
      %1671 = vrot.lane.b32.xlu0 %v1657, 64
      %v1672 = vpop.permute.xlu0 %1671
      %1673 = vrot.lane.b32.xlu0 %v1658, 64
      %v1674 = vpop.permute.xlu0 %1673
      %1683 = vst.msk [vmem:[#allocation2 + $0x4] sm:$0xf] %vm1505, %v1660
      %1684 = vst.msk [vmem:[#allocation2 + $0xc] sm:$0xf] %vm1505, %v1662
      %1685 = vst.msk [vmem:[#allocation2 + $0x14] sm:$0xf] %vm1505, %v1664
      %1686 = vst.msk [vmem:[#allocation2 + $0x1c] sm:$0xf] %vm1505, %v1666
      %1687 = vst.msk [vmem:[#allocation2 + $0x24] sm:$0xf] %vm1505, %v1668
      %1688 = vst.msk [vmem:[#allocation2 + $0x2c] sm:$0xf] %vm1505, %v1670
      %1689 = vst.msk [vmem:[#allocation2 + $0x34] sm:$0xf] %vm1505, %v1672
      %1690 = vst.msk [vmem:[#allocation2 + $0x3c] sm:$0xf] %vm1505, %v1674
      %v1699 = vunpack.c.l.b16 %v1334
      %v1700 = vunpack.c.l.b16 %v1342
      %v1701 = vunpack.c.l.b16 %v1350
      %v1702 = vunpack.c.l.b16 %v1358
      %v1703 = vunpack.c.l.b16 %v1366
      %v1704 = vunpack.c.l.b16 %v1374
      %v1705 = vunpack.c.l.b16 %v1382
      %v1706 = vunpack.c.l.b16 %v1390
      %v1707 = vpack.c.b16 %v1699, %v1699
      %v1708 = vpack.c.b16 %v1700, %v1700
      %v1709 = vpack.c.b16 %v1701, %v1701
      %v1710 = vpack.c.b16 %v1702, %v1702
      %v1711 = vpack.c.b16 %v1703, %v1703
      %v1712 = vpack.c.b16 %v1704, %v1704
      %v1713 = vpack.c.b16 %v1705, %v1705
      %v1714 = vpack.c.b16 %v1706, %v1706
      %1715 = vrot.lane.b32.xlu0 %v1707, 96
      %v1716 = vpop.permute.xlu0 %1715
      %1717 = vrot.lane.b32.xlu0 %v1708, 96
      %v1718 = vpop.permute.xlu0 %1717
      %1719 = vrot.lane.b32.xlu0 %v1709, 96
      %v1720 = vpop.permute.xlu0 %1719
      %1721 = vrot.lane.b32.xlu0 %v1710, 96
      %v1722 = vpop.permute.xlu0 %1721
      %1723 = vrot.lane.b32.xlu0 %v1711, 96
      %v1724 = vpop.permute.xlu0 %1723
      %1725 = vrot.lane.b32.xlu0 %v1712, 96
      %v1726 = vpop.permute.xlu0 %1725
      %1727 = vrot.lane.b32.xlu0 %v1713, 96
      %v1728 = vpop.permute.xlu0 %1727
      %1729 = vrot.lane.b32.xlu0 %v1714, 96
      %v1730 = vpop.permute.xlu0 %1729
      %1739 = vst.msk [vmem:[#allocation2 + $0x4] sm:$0xf] %vm1562, %v1716
      %1740 = vst.msk [vmem:[#allocation2 + $0xc] sm:$0xf] %vm1562, %v1718
      %1741 = vst.msk [vmem:[#allocation2 + $0x14] sm:$0xf] %vm1562, %v1720
      %1742 = vst.msk [vmem:[#allocation2 + $0x1c] sm:$0xf] %vm1562, %v1722
      %1743 = vst.msk [vmem:[#allocation2 + $0x24] sm:$0xf] %vm1562, %v1724
      %1744 = vst.msk [vmem:[#allocation2 + $0x2c] sm:$0xf] %vm1562, %v1726
      %1745 = vst.msk [vmem:[#allocation2 + $0x34] sm:$0xf] %vm1562, %v1728
      %1746 = vst.msk [vmem:[#allocation2 + $0x3c] sm:$0xf] %vm1562, %v1730
      %v1747 = vld [vmem:[#allocation2] sm:$0xf]
      %1748 = vst [vmem:[#allocation4] sm:$0xf] %v1747
      %s1749 = scalar_lea.vmem [#allocation2], 8
      %v1750 = vld [vmem:[%s1749] sm:$0xf]
      %1751 = vst [vmem:[#allocation4 + $0x4] sm:$0xf] %v1750
      %s1752 = scalar_lea.vmem [#allocation2], 16
      %v1753 = vld [vmem:[%s1752] sm:$0xf]
      %1754 = vst [vmem:[#allocation4 + $0x8] sm:$0xf] %v1753
      %s1755 = scalar_lea.vmem [#allocation2], 24
      %v1756 = vld [vmem:[%s1755] sm:$0xf]
      %1757 = vst [vmem:[#allocation4 + $0xc] sm:$0xf] %v1756
      %v1758 = vld [vmem:[#allocation2] sm:$0xff]
      %1760 = vrot.lane.b32.xlu0 %v1758, 64
      %v1761 = vpop.permute.xlu0 %1760
      %v1762 = vrot.slane %v1761, 4
      %vm1763 = vcmask 523264
      %v1764 = vsel %vm1763, %v1761, %v1762
      %1766 = vst [vmem:[#allocation4 + $0x10] sm:$0xf] %v1764
      %v1767 = vld [vmem:[%s1749] sm:$0xff]
      %1769 = vrot.lane.b32.xlu0 %v1767, 64
      %v1770 = vpop.permute.xlu0 %1769
      %v1771 = vrot.slane %v1770, 4
      %v1772 = vsel %vm1763, %v1770, %v1771
      %1774 = vst [vmem:[#allocation4 + $0x14] sm:$0xf] %v1772
      %v1775 = vld [vmem:[%s1752] sm:$0xff]
      %1777 = vrot.lane.b32.xlu0 %v1775, 64
      %v1778 = vpop.permute.xlu0 %1777
      %v1779 = vrot.slane %v1778, 4
      %v1780 = vsel %vm1763, %v1778, %v1779
      %1782 = vst [vmem:[#allocation4 + $0x18] sm:$0xf] %v1780
      %v1783 = vld [vmem:[%s1755] sm:$0xff]
      %1785 = vrot.lane.b32.xlu0 %v1783, 64
      %v1786 = vpop.permute.xlu0 %1785
      %v1787 = vrot.slane %v1786, 4
      %v1788 = vsel %vm1763, %v1786, %v1787
      %1790 = vst [vmem:[#allocation4 + $0x1c] sm:$0xf] %v1788
      %v1791 = vld [vmem:[#allocation2 + $0x4] sm:$0xf]
      %1792 = vst [vmem:[#allocation4 + $0x20] sm:$0xf] %v1791
      %v1793 = vld [vmem:[%s1749 + $0x4] sm:$0xf]
      %1794 = vst [vmem:[#allocation4 + $0x24] sm:$0xf] %v1793
      %v1795 = vld [vmem:[%s1752 + $0x4] sm:$0xf]
      %1796 = vst [vmem:[#allocation4 + $0x28] sm:$0xf] %v1795
      %v1797 = vld [vmem:[%s1755 + $0x4] sm:$0xf]
      %1798 = vst [vmem:[#allocation4 + $0x2c] sm:$0xf] %v1797
      %v1799 = vld [vmem:[%s1752] sm:$0xf]
      %1800 = vst [vmem:[#allocation4 + $0x30] sm:$0xf] %v1799
      %v1801 = vld [vmem:[%s1755] sm:$0xf]
      %1802 = vst [vmem:[#allocation4 + $0x34] sm:$0xf] %v1801
      %s1803 = scalar_lea.vmem [#allocation2], 32
      %v1804 = vld [vmem:[%s1803] sm:$0xf]
      %1805 = vst [vmem:[#allocation4 + $0x38] sm:$0xf] %v1804
      %s1806 = scalar_lea.vmem [#allocation2], 40
      %v1807 = vld [vmem:[%s1806] sm:$0xf]
      %1808 = vst [vmem:[#allocation4 + $0x3c] sm:$0xf] %v1807
      %v1809 = vld [vmem:[%s1752] sm:$0xff]
      %1811 = vrot.lane.b32.xlu0 %v1809, 64
      %v1812 = vpop.permute.xlu0 %1811
      %v1813 = vrot.slane %v1812, 4
      %v1814 = vsel %vm1763, %v1812, %v1813
      %1816 = vst [vmem:[#allocation4 + $0x40] sm:$0xf] %v1814
      %v1817 = vld [vmem:[%s1755] sm:$0xff]
      %1819 = vrot.lane.b32.xlu0 %v1817, 64
      %v1820 = vpop.permute.xlu0 %1819
      %v1821 = vrot.slane %v1820, 4
      %v1822 = vsel %vm1763, %v1820, %v1821
      %1824 = vst [vmem:[#allocation4 + $0x44] sm:$0xf] %v1822
      %v1825 = vld [vmem:[%s1803] sm:$0xff]
      %1827 = vrot.lane.b32.xlu0 %v1825, 64
      %v1828 = vpop.permute.xlu0 %1827
      %v1829 = vrot.slane %v1828, 4
      %v1830 = vsel %vm1763, %v1828, %v1829
      %1832 = vst [vmem:[#allocation4 + $0x48] sm:$0xf] %v1830
      %v1833 = vld [vmem:[%s1806] sm:$0xff]
      %1835 = vrot.lane.b32.xlu0 %v1833, 64
      %v1836 = vpop.permute.xlu0 %1835
      %v1837 = vrot.slane %v1836, 4
      %v1838 = vsel %vm1763, %v1836, %v1837
      %1840 = vst [vmem:[#allocation4 + $0x4c] sm:$0xf] %v1838
      %v1841 = vld [vmem:[%s1752 + $0x4] sm:$0xf]
      %1842 = vst [vmem:[#allocation4 + $0x50] sm:$0xf] %v1841
      %v1843 = vld [vmem:[%s1755 + $0x4] sm:$0xf]
      %1844 = vst [vmem:[#allocation4 + $0x54] sm:$0xf] %v1843
      %v1845 = vld [vmem:[%s1803 + $0x4] sm:$0xf]
      %1846 = vst [vmem:[#allocation4 + $0x58] sm:$0xf] %v1845
      %v1847 = vld [vmem:[%s1806 + $0x4] sm:$0xf]
      %1848 = vst [vmem:[#allocation4 + $0x5c] sm:$0xf] %v1847
      %v1849 = vld [vmem:[%s1803] sm:$0xf]
      %1850 = vst [vmem:[#allocation4 + $0x60] sm:$0xf] %v1849
      %v1851 = vld [vmem:[%s1806] sm:$0xf]
      %1852 = vst [vmem:[#allocation4 + $0x64] sm:$0xf] %v1851
      %s1853 = scalar_lea.vmem [#allocation2], 48
      %v1854 = vld [vmem:[%s1853] sm:$0xf]
      %1855 = vst [vmem:[#allocation4 + $0x68] sm:$0xf] %v1854
      %s1856 = scalar_lea.vmem [#allocation2], 56
      %v1857 = vld [vmem:[%s1856] sm:$0xf]
      %1858 = vst [vmem:[#allocation4 + $0x6c] sm:$0xf] %v1857
      %v1859 = vld [vmem:[%s1803] sm:$0xff]
      %1861 = vrot.lane.b32.xlu0 %v1859, 64
      %v1862 = vpop.permute.xlu0 %1861
      %v1863 = vrot.slane %v1862, 4
      %v1864 = vsel %vm1763, %v1862, %v1863
      %1866 = vst [vmem:[#allocation4 + $0x70] sm:$0xf] %v1864
      %v1867 = vld [vmem:[%s1806] sm:$0xff]
      %1869 = vrot.lane.b32.xlu0 %v1867, 64
      %v1870 = vpop.permute.xlu0 %1869
      %v1871 = vrot.slane %v1870, 4
      %v1872 = vsel %vm1763, %v1870, %v1871
      %1874 = vst [vmem:[#allocation4 + $0x74] sm:$0xf] %v1872
      %v1875 = vld [vmem:[%s1853] sm:$0xff]
      %1877 = vrot.lane.b32.xlu0 %v1875, 64
      %v1878 = vpop.permute.xlu0 %1877
      %v1879 = vrot.slane %v1878, 4
      %v1880 = vsel %vm1763, %v1878, %v1879
      %1882 = vst [vmem:[#allocation4 + $0x78] sm:$0xf] %v1880
      %v1883 = vld [vmem:[%s1856] sm:$0xff]
      %1885 = vrot.lane.b32.xlu0 %v1883, 64
      %v1886 = vpop.permute.xlu0 %1885
      %v1887 = vrot.slane %v1886, 4
      %v1888 = vsel %vm1763, %v1886, %v1887
      %1890 = vst [vmem:[#allocation4 + $0x7c] sm:$0xf] %v1888
      %v1891 = vld [vmem:[%s1803 + $0x4] sm:$0xf]
      %1892 = vst [vmem:[#allocation4 + $0x80] sm:$0xf] %v1891
      %v1893 = vld [vmem:[%s1806 + $0x4] sm:$0xf]
      %1894 = vst [vmem:[#allocation4 + $0x84] sm:$0xf] %v1893
      %v1895 = vld [vmem:[%s1853 + $0x4] sm:$0xf]
      %1896 = vst [vmem:[#allocation4 + $0x88] sm:$0xf] %v1895
      %v1897 = vld [vmem:[%s1856 + $0x4] sm:$0xf]
      %1898 = vst [vmem:[#allocation4 + $0x8c] sm:$0xf] %v1897
      %v1899 = vld [vmem:[#allocation4] sm:$0xff]
      %v1900 = vld [vmem:[#allocation4 + $0x8] sm:$0xff]
      %v1901 = vld [vmem:[#allocation4 + $0x10] sm:$0xff]
      %v1902 = vld [vmem:[#allocation4 + $0x18] sm:$0xff]
      %v1903 = vld [vmem:[#allocation4 + $0x20] sm:$0xff]
      %v1904 = vld [vmem:[#allocation4 + $0x28] sm:$0xff]
      %v1905 = vld [vmem:[#allocation4 + $0x30] sm:$0xff]
      %v1906 = vld [vmem:[#allocation4 + $0x38] sm:$0xff]
      %v1907 = vld [vmem:[#allocation4 + $0x40] sm:$0xff]
      %v1908 = vld [vmem:[#allocation4 + $0x48] sm:$0xff]
      %v1909 = vld [vmem:[#allocation4 + $0x50] sm:$0xff]
      %v1910 = vld [vmem:[#allocation4 + $0x58] sm:$0xff]
      %v1911 = vld [vmem:[#allocation4 + $0x60] sm:$0xff]
      %v1912 = vld [vmem:[#allocation4 + $0x68] sm:$0xff]
      %v1913 = vld [vmem:[#allocation4 + $0x70] sm:$0xff]
      %v1914 = vld [vmem:[#allocation4 + $0x78] sm:$0xff]
      %v1915 = vld [vmem:[#allocation4 + $0x80] sm:$0xff]
      %v1916 = vld [vmem:[#allocation4 + $0x88] sm:$0xff]
      %v1917 = vld [vmem:[%s3] sm:$0xf]
      %v1918 = vld [vmem:[%s3 + $0x4] sm:$0xf]
      %v1919 = vld [vmem:[%s3 + $0x8] sm:$0xf]
      %v1920 = vld [vmem:[%s3 + $0xc] sm:$0xf]
      %v1921 = vld [vmem:[%s3 + $0x10] sm:$0xf]
      %v1922 = vld [vmem:[%s3 + $0x14] sm:$0xf]
      %v1923 = vld [vmem:[%s3 + $0x18] sm:$0xf]
      %v1924 = vld [vmem:[%s3 + $0x1c] sm:$0xf]
      %v1925 = vld [vmem:[%s3 + $0x20] sm:$0xf]
      %v1926 = vld [vmem:[%s3 + $0x24] sm:$0xf]
      %v1927 = vld [vmem:[%s3 + $0x28] sm:$0xf]
      %v1928 = vld [vmem:[%s3 + $0x2c] sm:$0xf]
      %v1929 = vld [vmem:[%s3 + $0x30] sm:$0xf]
      %v1930 = vld [vmem:[%s3 + $0x34] sm:$0xf]
      %v1931 = vld [vmem:[%s3 + $0x38] sm:$0xf]
      %v1932 = vld [vmem:[%s3 + $0x3c] sm:$0xf]
      %v1933 = vld [vmem:[%s3 + $0x40] sm:$0xf]
      %v1934 = vld [vmem:[%s3 + $0x44] sm:$0xf]
      %v1935 = vld [vmem:[%s3 + $0x48] sm:$0xf]
      %v1936 = vld [vmem:[%s3 + $0x4c] sm:$0xf]
      %v1937 = vld [vmem:[%s3 + $0x50] sm:$0xf]
      %v1938 = vld [vmem:[%s3 + $0x54] sm:$0xf]
      %v1939 = vld [vmem:[%s3 + $0x58] sm:$0xf]
      %v1940 = vld [vmem:[%s3 + $0x5c] sm:$0xf]
      %v1941 = vld [vmem:[%s3 + $0x60] sm:$0xf]
      %v1942 = vld [vmem:[%s3 + $0x64] sm:$0xf]
      %v1943 = vld [vmem:[%s3 + $0x68] sm:$0xf]
      %v1944 = vld [vmem:[%s3 + $0x6c] sm:$0xf]
      %v1945 = vld [vmem:[%s3 + $0x70] sm:$0xf]
      %v1946 = vld [vmem:[%s3 + $0x74] sm:$0xf]
      %v1947 = vld [vmem:[%s3 + $0x78] sm:$0xf]
      %v1948 = vld [vmem:[%s3 + $0x7c] sm:$0xf]
      %v1949 = vld [vmem:[%s3 + $0x80] sm:$0xf]
      %v1950 = vld [vmem:[%s3 + $0x84] sm:$0xf]
      %v1951 = vld [vmem:[%s3 + $0x88] sm:$0xf]
      %v1952 = vld [vmem:[%s3 + $0x8c] sm:$0xf]
      %v1953 = vld [vmem:[%s3 + $0x90] sm:$0xf]
      %v1954 = vld [vmem:[%s3 + $0x94] sm:$0xf]
      %v1955 = vld [vmem:[%s3 + $0x98] sm:$0xf]
      %v1956 = vld [vmem:[%s3 + $0x9c] sm:$0xf]
      %v1957 = vld [vmem:[%s3 + $0xa0] sm:$0xf]
      %v1958 = vld [vmem:[%s3 + $0xa4] sm:$0xf]
      %v1959 = vld [vmem:[%s3 + $0xa8] sm:$0xf]
      %v1960 = vld [vmem:[%s3 + $0xac] sm:$0xf]
      %v1961 = vld [vmem:[%s3 + $0xb0] sm:$0xf]
      %v1962 = vld [vmem:[%s3 + $0xb4] sm:$0xf]
      %v1963 = vld [vmem:[%s3 + $0xb8] sm:$0xf]
      %v1964 = vld [vmem:[%s3 + $0xbc] sm:$0xf]
      %v1965 = vld [vmem:[%s3 + $0xc0] sm:$0xf]
      %v1966 = vld [vmem:[%s3 + $0xc4] sm:$0xf]
      %v1967 = vld [vmem:[%s3 + $0xc8] sm:$0xf]
      %v1968 = vld [vmem:[%s3 + $0xcc] sm:$0xf]
      %v1969 = vld [vmem:[%s3 + $0xd0] sm:$0xf]
      %v1970 = vld [vmem:[%s3 + $0xd4] sm:$0xf]
      %v1971 = vld [vmem:[%s3 + $0xd8] sm:$0xf]
      %v1972 = vld [vmem:[%s3 + $0xdc] sm:$0xf]
      %v1973 = vld [vmem:[%s3 + $0xe0] sm:$0xf]
      %v1974 = vld [vmem:[%s3 + $0xe4] sm:$0xf]
      %v1975 = vld [vmem:[%s3 + $0xe8] sm:$0xf]
      %v1976 = vld [vmem:[%s3 + $0xec] sm:$0xf]
      %v1977 = vld [vmem:[%s3 + $0xf0] sm:$0xf]
      %v1978 = vld [vmem:[%s3 + $0xf4] sm:$0xf]
      %v1979 = vld [vmem:[%s3 + $0xf8] sm:$0xf]
      %v1980 = vld [vmem:[%s3 + $0xfc] sm:$0xf]
      %v1981 = vld [vmem:[%s4] sm:$0x1]
      %v1983 = vlaneseq
      %v1984 = vshrl.u32 %v1983, 7
      %v1985 = vsub.s32 0, %v1984
      %v1986 = vrot.slane %v1981, %v1985
      %v2006 = vunpack.c.l.b16 %v1899
      %v2007 = vunpack.c.h.b16 %v1899
      %v2008 = vunpack.c.l.b16 %v1900
      %v2009 = vunpack.c.h.b16 %v1900
      %v2010 = vunpack.c.l.b16 %v1901
      %v2011 = vunpack.c.h.b16 %v1901
      %v2012 = vunpack.c.l.b16 %v1902
      %v2013 = vunpack.c.h.b16 %v1902
      %v2014 = vunpack.c.l.b16 %v1903
      %v2015 = vunpack.c.h.b16 %v1903
      %v2016 = vunpack.c.l.b16 %v1904
      %v2017 = vunpack.c.h.b16 %v1904
      %v2018 = vunpack.c.l.b16 %v1905
      %v2019 = vunpack.c.h.b16 %v1905
      %v2020 = vunpack.c.l.b16 %v1906
      %v2021 = vunpack.c.h.b16 %v1906
      %v2022 = vunpack.c.l.b16 %v1907
      %v2023 = vunpack.c.h.b16 %v1907
      %v2024 = vunpack.c.l.b16 %v1908
      %v2025 = vunpack.c.h.b16 %v1908
      %v2026 = vunpack.c.l.b16 %v1909
      %v2027 = vunpack.c.h.b16 %v1909
      %v2028 = vunpack.c.l.b16 %v1910
      %v2029 = vunpack.c.h.b16 %v1910
      %v2030 = vunpack.c.l.b16 %v1911
      %v2031 = vunpack.c.h.b16 %v1911
      %v2032 = vunpack.c.l.b16 %v1912
      %v2033 = vunpack.c.h.b16 %v1912
      %v2034 = vunpack.c.l.b16 %v1913
      %v2035 = vunpack.c.h.b16 %v1913
      %v2036 = vunpack.c.l.b16 %v1914
      %v2037 = vunpack.c.h.b16 %v1914
      %v2038 = vunpack.c.l.b16 %v1915
      %v2039 = vunpack.c.h.b16 %v1915
      %v2040 = vunpack.c.l.b16 %v1916
      %v2041 = vunpack.c.h.b16 %v1916
      %v2042 = vpack.c.b16 %v2010, %v2006
      %v2043 = vpack.c.b16 %v2011, %v2007
      %v2044 = vpack.c.b16 %v2012, %v2008
      %v2045 = vpack.c.b16 %v2013, %v2009
      %v2046 = vpack.c.b16 %v2018, %v2014
      %v2047 = vpack.c.b16 %v2019, %v2015
      %v2048 = vpack.c.b16 %v2020, %v2016
      %v2049 = vpack.c.b16 %v2021, %v2017
      %v2050 = vpack.c.b16 %v2026, %v2022
      %v2051 = vpack.c.b16 %v2027, %v2023
      %v2052 = vpack.c.b16 %v2028, %v2024
      %v2053 = vpack.c.b16 %v2029, %v2025
      %v2054 = vpack.c.b16 %v2034, %v2030
      %v2055 = vpack.c.b16 %v2035, %v2031
      %v2056 = vpack.c.b16 %v2036, %v2032
      %v2057 = vpack.c.b16 %v2037, %v2033
      %v2058 = vpack.c.b16 %v2038, %v2038
      %v2059 = vpack.c.b16 %v2039, %v2039
      %v2060 = vpack.c.b16 %v2040, %v2040
      %v2061 = vpack.c.b16 %v2041, %v2041
      %v2146 = vunpack.c.l.b16 %v1917
      %v2147 = vunpack.c.l.b16 %v1918
      %v2148 = vunpack.c.l.b16 %v1919
      %v2149 = vunpack.c.l.b16 %v1920
      %v2150 = vunpack.c.l.b16 %v1921
      %v2151 = vunpack.c.l.b16 %v1922
      %v2152 = vunpack.c.l.b16 %v1923
      %v2153 = vunpack.c.l.b16 %v1924
      %v2154 = vunpack.c.l.b16 %v1925
      %v2155 = vunpack.c.l.b16 %v1926
      %v2156 = vunpack.c.l.b16 %v1927
      %v2157 = vunpack.c.l.b16 %v1928
      %v2158 = vunpack.c.l.b16 %v1929
      %v2159 = vunpack.c.l.b16 %v1930
      %v2160 = vunpack.c.l.b16 %v1931
      %v2161 = vunpack.c.l.b16 %v1932
      %v2162 = vunpack.c.l.b16 %v1933
      %v2163 = vunpack.c.l.b16 %v1934
      %v2164 = vunpack.c.l.b16 %v1935
      %v2165 = vunpack.c.l.b16 %v1936
      %v2166 = vunpack.c.l.b16 %v1937
      %v2167 = vunpack.c.l.b16 %v1938
      %v2168 = vunpack.c.l.b16 %v1939
      %v2169 = vunpack.c.l.b16 %v1940
      %v2170 = vunpack.c.l.b16 %v1941
      %v2171 = vunpack.c.l.b16 %v1942
      %v2172 = vunpack.c.l.b16 %v1943
      %v2173 = vunpack.c.l.b16 %v1944
      %v2174 = vunpack.c.l.b16 %v1945
      %v2175 = vunpack.c.l.b16 %v1946
      %v2176 = vunpack.c.l.b16 %v1947
      %v2177 = vunpack.c.l.b16 %v1948
      %v2178 = vunpack.c.l.b16 %v1949
      %v2179 = vunpack.c.l.b16 %v1950
      %v2180 = vunpack.c.l.b16 %v1951
      %v2181 = vunpack.c.l.b16 %v1952
      %v2182 = vunpack.c.l.b16 %v1953
      %v2183 = vunpack.c.l.b16 %v1954
      %v2184 = vunpack.c.l.b16 %v1955
      %v2185 = vunpack.c.l.b16 %v1956
      %v2186 = vunpack.c.l.b16 %v1957
      %v2187 = vunpack.c.l.b16 %v1958
      %v2188 = vunpack.c.l.b16 %v1959
      %v2189 = vunpack.c.l.b16 %v1960
      %v2190 = vunpack.c.l.b16 %v1961
      %v2191 = vunpack.c.l.b16 %v1962
      %v2192 = vunpack.c.l.b16 %v1963
      %v2193 = vunpack.c.l.b16 %v1964
      %v2194 = vunpack.c.l.b16 %v1965
      %v2195 = vunpack.c.l.b16 %v1966
      %v2196 = vunpack.c.l.b16 %v1967
      %v2197 = vunpack.c.l.b16 %v1968
      %v2198 = vunpack.c.l.b16 %v1969
      %v2199 = vunpack.c.l.b16 %v1970
      %v2200 = vunpack.c.l.b16 %v1971
      %v2201 = vunpack.c.l.b16 %v1972
      %v2202 = vunpack.c.l.b16 %v1973
      %v2203 = vunpack.c.l.b16 %v1974
      %v2204 = vunpack.c.l.b16 %v1975
      %v2205 = vunpack.c.l.b16 %v1976
      %v2206 = vunpack.c.l.b16 %v1977
      %v2207 = vunpack.c.l.b16 %v1978
      %v2208 = vunpack.c.l.b16 %v1979
      %v2209 = vunpack.c.l.b16 %v1980
      %v2210 = vpack.c.b16 %v2147, %v2146
      %v2211 = vpack.c.b16 %v2149, %v2148
      %v2212 = vpack.c.b16 %v2151, %v2150
      %v2213 = vpack.c.b16 %v2153, %v2152
      %v2214 = vpack.c.b16 %v2155, %v2154
      %v2215 = vpack.c.b16 %v2157, %v2156
      %v2216 = vpack.c.b16 %v2159, %v2158
      %v2217 = vpack.c.b16 %v2161, %v2160
      %v2218 = vpack.c.b16 %v2163, %v2162
      %v2219 = vpack.c.b16 %v2165, %v2164
      %v2220 = vpack.c.b16 %v2167, %v2166
      %v2221 = vpack.c.b16 %v2169, %v2168
      %v2222 = vpack.c.b16 %v2171, %v2170
      %v2223 = vpack.c.b16 %v2173, %v2172
      %v2224 = vpack.c.b16 %v2175, %v2174
      %v2225 = vpack.c.b16 %v2177, %v2176
      %v2226 = vpack.c.b16 %v2179, %v2178
      %v2227 = vpack.c.b16 %v2181, %v2180
      %v2228 = vpack.c.b16 %v2183, %v2182
      %v2229 = vpack.c.b16 %v2185, %v2184
      %v2230 = vpack.c.b16 %v2187, %v2186
      %v2231 = vpack.c.b16 %v2189, %v2188
      %v2232 = vpack.c.b16 %v2191, %v2190
      %v2233 = vpack.c.b16 %v2193, %v2192
      %v2234 = vpack.c.b16 %v2195, %v2194
      %v2235 = vpack.c.b16 %v2197, %v2196
      %v2236 = vpack.c.b16 %v2199, %v2198
      %v2237 = vpack.c.b16 %v2201, %v2200
      %v2238 = vpack.c.b16 %v2203, %v2202
      %v2239 = vpack.c.b16 %v2205, %v2204
      %v2240 = vpack.c.b16 %v2207, %v2206
      %v2241 = vpack.c.b16 %v2209, %v2208
      %2274 = vmatprep.subr.bf16.mxu0 0
      %2275 = vmatpush1.bf16.msra.mxu0 %v2210
      %2276 = vmatprep.subr.bf16.mxu0 0
      %2277 = vmatpush1.bf16.msra.mxu0 %v2211
      %2278 = vmatprep.subr.bf16.mxu0 0
      %2279 = vmatpush1.bf16.msra.mxu0 %v2212
      %2280 = vmatprep.subr.bf16.mxu0 0
      %2281 = vmatpush1.bf16.msra.mxu0 %v2213
      %2282 = vmatprep.subr.bf16.mxu0 0
      %2283 = vmatpush1.bf16.msra.mxu0 %v2214
      %2284 = vmatprep.subr.bf16.mxu0 0
      %2285 = vmatpush1.bf16.msra.mxu0 %v2215
      %2286 = vmatprep.subr.bf16.mxu0 0
      %2287 = vmatpush1.bf16.msra.mxu0 %v2216
      %2288 = vmatprep.subr.bf16.mxu0 0
      %2289 = vmatpush1.bf16.msra.mxu0 %v2217
      %2290 = vmatprep.subr.bf16.mxu0 0
      %2291 = vmatpush1.bf16.msra.mxu0 %v2218
      %2292 = vmatprep.subr.bf16.mxu0 0
      %2293 = vmatpush1.bf16.msra.mxu0 %v2219
      %2294 = vmatprep.subr.bf16.mxu0 0
      %2295 = vmatpush1.bf16.msra.mxu0 %v2220
      %2296 = vmatprep.subr.bf16.mxu0 0
      %2297 = vmatpush1.bf16.msra.mxu0 %v2221
      %2298 = vmatprep.subr.bf16.mxu0 0
      %2299 = vmatpush1.bf16.msra.mxu0 %v2222
      %2300 = vmatprep.subr.bf16.mxu0 0
      %2301 = vmatpush1.bf16.msra.mxu0 %v2223
      %2302 = vmatprep.subr.bf16.mxu0 0
      %2303 = vmatpush1.bf16.msra.mxu0 %v2224
      %2304 = vmatprep.subr.bf16.mxu0 0
      %2305 = vmatpush1.bf16.msra.mxu0 %v2225
      %2306 = vmatprep.mubr.bf16.mxu0 %v2043
      %2307 = vmatmul.mubr.bf16.gmra.mrb[0].mxu0 %v2042
      %v2308 = vpop.f32.mrb[0].mxu0
      %v2309 = vadd.f32 %v1986, %v2308
      %v2310 = vpop.f32.mrb[0].mxu0
      %v2311 = vpop.f32.mrb[0].mxu0
      %v2312 = vadd.f32 %v1986, %v2311
      %v2313 = vpop.f32.mrb[0].mxu0
      %2314 = vmatprep.mubr.bf16.mxu0 %v2047
      %2315 = vmatmul.mubr.bf16.gmra.mrb[0].mxu0 %v2046
      %v2316 = vpop.f32.mrb[0].mxu0
      %v2317 = vadd.f32 %v1986, %v2316
      %v2318 = vpop.f32.mrb[0].mxu0
      %v2319 = vpop.f32.mrb[0].mxu0
      %v2320 = vadd.f32 %v1986, %v2319
      %v2321 = vpop.f32.mrb[0].mxu0
      %2322 = vmatprep.mubr.bf16.mxu0 %v2051
      %2323 = vmatmul.mubr.bf16.gmra.mrb[0].mxu0 %v2050
      %v2324 = vpop.f32.mrb[0].mxu0
      %v2325 = vadd.f32 %v1986, %v2324
      %v2326 = vpop.f32.mrb[0].mxu0
      %v2327 = vpop.f32.mrb[0].mxu0
      %v2328 = vadd.f32 %v1986, %v2327
      %v2329 = vpop.f32.mrb[0].mxu0
      %2330 = vmatprep.mubr.bf16.mxu0 %v2055
      %2331 = vmatmul.mubr.bf16.gmra.mrb[0].mxu0 %v2054
      %v2332 = vpop.f32.mrb[0].mxu0
      %v2333 = vadd.f32 %v1986, %v2332
      %v2334 = vpop.f32.mrb[0].mxu0
      %v2335 = vpop.f32.mrb[0].mxu0
      %v2336 = vadd.f32 %v1986, %v2335
      %v2337 = vpop.f32.mrb[0].mxu0
      %2338 = vmatprep.mubr.bf16.mxu0 %v2059
      %2339 = vmatmul.mubr.bf16.gmra.mrb[0].mxu0 %v2058
      %v2340 = vpop.f32.mrb[0].mxu0
      %v2341 = vadd.f32 %v1986, %v2340
      %v2342 = vpop.f32.mrb[0].mxu0
      %v2343 = vpop.f32.mrb[0].mxu0
      %v2344 = vpop.f32.mrb[0].mxu0
      %2345 = vdwg.mxu0
      %2346 = vmatprep.subr.bf16.mxu0 0
      %2347 = vmatpush1.bf16.msra.mxu0 %v2226
      %2348 = vmatprep.subr.bf16.mxu0 0
      %2349 = vmatpush1.bf16.msra.mxu0 %v2227
      %2350 = vmatprep.subr.bf16.mxu0 0
      %2351 = vmatpush1.bf16.msra.mxu0 %v2228
      %2352 = vmatprep.subr.bf16.mxu0 0
      %2353 = vmatpush1.bf16.msra.mxu0 %v2229
      %2354 = vmatprep.subr.bf16.mxu0 0
      %2355 = vmatpush1.bf16.msra.mxu0 %v2230
      %2356 = vmatprep.subr.bf16.mxu0 0
      %2357 = vmatpush1.bf16.msra.mxu0 %v2231
      %2358 = vmatprep.subr.bf16.mxu0 0
      %2359 = vmatpush1.bf16.msra.mxu0 %v2232
      %2360 = vmatprep.subr.bf16.mxu0 0
      %2361 = vmatpush1.bf16.msra.mxu0 %v2233
      %2362 = vmatprep.subr.bf16.mxu0 0
      %2363 = vmatpush1.bf16.msra.mxu0 %v2234
      %2364 = vmatprep.subr.bf16.mxu0 0
      %2365 = vmatpush1.bf16.msra.mxu0 %v2235
      %2366 = vmatprep.subr.bf16.mxu0 0
      %2367 = vmatpush1.bf16.msra.mxu0 %v2236
      %2368 = vmatprep.subr.bf16.mxu0 0
      %2369 = vmatpush1.bf16.msra.mxu0 %v2237
      %2370 = vmatprep.subr.bf16.mxu0 0
      %2371 = vmatpush1.bf16.msra.mxu0 %v2238
      %2372 = vmatprep.subr.bf16.mxu0 0
      %2373 = vmatpush1.bf16.msra.mxu0 %v2239
      %2374 = vmatprep.subr.bf16.mxu0 0
      %2375 = vmatpush1.bf16.msra.mxu0 %v2240
      %2376 = vmatprep.subr.bf16.mxu0 0
      %2377 = vmatpush1.bf16.msra.mxu0 %v2241
      %2378 = vmatprep.mubr.bf16.mxu0 %v2045
      %2379 = vmatmul.mubr.bf16.gmra.mrb[0].mxu0 %v2044
      %v2380 = vpop.f32.mrb[0].mxu0
      %v2381 = vadd.f32 %v2309, %v2380
      %v2382 = vpop.f32.mrb[0].mxu0
      %v2383 = vpop.f32.mrb[0].mxu0
      %v2384 = vadd.f32 %v2312, %v2383
      %v2385 = vpop.f32.mrb[0].mxu0
      %2386 = vmatprep.mubr.bf16.mxu0 %v2049
      %2387 = vmatmul.mubr.bf16.gmra.mrb[0].mxu0 %v2048
      %v2388 = vpop.f32.mrb[0].mxu0
      %v2389 = vadd.f32 %v2317, %v2388
      %v2390 = vpop.f32.mrb[0].mxu0
      %v2391 = vpop.f32.mrb[0].mxu0
      %v2392 = vadd.f32 %v2320, %v2391
      %v2393 = vpop.f32.mrb[0].mxu0
      %2394 = vmatprep.mubr.bf16.mxu0 %v2053
      %2395 = vmatmul.mubr.bf16.gmra.mrb[0].mxu0 %v2052
      %v2396 = vpop.f32.mrb[0].mxu0
      %v2397 = vadd.f32 %v2325, %v2396
      %v2398 = vpop.f32.mrb[0].mxu0
      %v2399 = vpop.f32.mrb[0].mxu0
      %v2400 = vadd.f32 %v2328, %v2399
      %v2401 = vpop.f32.mrb[0].mxu0
      %2402 = vmatprep.mubr.bf16.mxu0 %v2057
      %2403 = vmatmul.mubr.bf16.gmra.mrb[0].mxu0 %v2056
      %v2404 = vpop.f32.mrb[0].mxu0
      %v2405 = vadd.f32 %v2333, %v2404
      %v2406 = vpop.f32.mrb[0].mxu0
      %v2407 = vpop.f32.mrb[0].mxu0
      %v2408 = vadd.f32 %v2336, %v2407
      %v2409 = vpop.f32.mrb[0].mxu0
      %2410 = vmatprep.mubr.bf16.mxu0 %v2061
      %2411 = vmatmul.mubr.bf16.gmra.mrb[0].mxu0 %v2060
      %v2412 = vpop.f32.mrb[0].mxu0
      %v2413 = vadd.f32 %v2341, %v2412
      %v2414 = vpop.f32.mrb[0].mxu0
      %v2415 = vpop.f32.mrb[0].mxu0
      %v2416 = vpop.f32.mrb[0].mxu0
      %2417 = vdwg.mxu0
      %v2418 = vmul.f32 %v2381, 0.01
      %v2419 = vmul.f32 %v2384, 0.01
      %v2420 = vmul.f32 %v2389, 0.01
      %v2421 = vmul.f32 %v2392, 0.01
      %v2422 = vmul.f32 %v2397, 0.01
      %v2423 = vmul.f32 %v2400, 0.01
      %v2424 = vmul.f32 %v2405, 0.01
      %v2425 = vmul.f32 %v2408, 0.01
      %v2426 = vmul.f32 %v2413, 0.01
      %v2427 = vmax.f32 %v2381, %v2418
      %v2428 = vmax.f32 %v2384, %v2419
      %v2429 = vmax.f32 %v2389, %v2420
      %v2430 = vmax.f32 %v2392, %v2421
      %v2431 = vmax.f32 %v2397, %v2422
      %v2432 = vmax.f32 %v2400, %v2423
      %v2433 = vmax.f32 %v2405, %v2424
      %v2434 = vmax.f32 %v2408, %v2425
      %v2435 = vmax.f32 %v2413, %v2426
      %v2436 = vpack.c.bf16 %v2427, %v2427
      %v2437 = vpack.c.bf16 %v2428, %v2428
      %v2438 = vpack.c.bf16 %v2429, %v2429
      %v2439 = vpack.c.bf16 %v2430, %v2430
      %v2440 = vpack.c.bf16 %v2431, %v2431
      %v2441 = vpack.c.bf16 %v2432, %v2432
      %v2442 = vpack.c.bf16 %v2433, %v2433
      %v2443 = vpack.c.bf16 %v2434, %v2434
      %v2444 = vpack.c.bf16 %v2435, %v2435
      %vm2445 = vcmask 519168
      %2446 = vst.msk [vmem:[#allocation3] sm:$0xf] %vm2445, %v2436
      %v2448 = vunpack.c.l.b16 %v2437
      %v2449 = vpack.c.b16 %v2448, %v2448
      %2450 = vrot.lane.b32.xlu0 %v2449, 64
      %v2451 = vpop.permute.xlu0 %2450
      %vm2453 = vcmask 1043968
      %2454 = vst.msk [vmem:[#allocation3] sm:$0xf] %vm2453, %v2451
      %2455 = vst.msk [vmem:[#allocation3 + $0x4] sm:$0xf] %vm2445, %v2438
      %s2456 = scalar_lea.vmem [#allocation3], 8
      %2457 = vst.msk [vmem:[%s2456] sm:$0xf] %vm2445, %v2439
      %v2459 = vunpack.c.l.b16 %v2440
      %v2460 = vpack.c.b16 %v2459, %v2459
      %2461 = vrot.lane.b32.xlu0 %v2460, 64
      %v2462 = vpop.permute.xlu0 %2461
      %2464 = vst.msk [vmem:[%s2456] sm:$0xf] %vm2453, %v2462
      %2465 = vst.msk [vmem:[%s2456 + $0x4] sm:$0xf] %vm2445, %v2441
      %s2466 = scalar_lea.vmem [#allocation3], 16
      %2467 = vst.msk [vmem:[%s2466] sm:$0xf] %vm2445, %v2442
      %v2469 = vunpack.c.l.b16 %v2443
      %v2470 = vpack.c.b16 %v2469, %v2469
      %2471 = vrot.lane.b32.xlu0 %v2470, 64
      %v2472 = vpop.permute.xlu0 %2471
      %2474 = vst.msk [vmem:[%s2466] sm:$0xf] %vm2453, %v2472
      %2475 = vst.msk [vmem:[%s2466 + $0x4] sm:$0xf] %vm2445, %v2444
      %v2476 = vld [vmem:[#allocation3] sm:$0xff]
      %vm2477 = vcmask 1043456
      %vm2478 = vcmask 523268
      %vm2479 = vmor %vm2478, %vm2477
      %2480 = vst.msk [vmem:[#allocation5] sm:$0xff] %vm2479, %v2476
      %v2481 = vld [vmem:[%s2456] sm:$0xff]
      %2483 = vrot.lane.b32.xlu0 %v2481, 64
      %v2484 = vpop.permute.xlu0 %2483
      %v2485 = vrot.slane %v2484, 4
      %v2486 = vsel %vm1763, %v2485, %v2484
      %vm2488 = vcmask 1047556
      %vm2489 = vmor %vm2488, %vm2453
      %2490 = vst.msk [vmem:[#allocation5 + $0x4] sm:$0xff] %vm2489, %v2486
      %v2491 = vld [vmem:[%s2466] sm:$0xff]
      %2492 = vst.msk [vmem:[#allocation5 + $0xc] sm:$0xff] %vm2479, %v2491
      %v2493 = vld [vmem:[#allocation5] sm:$0xff]
      %v2494 = vld [vmem:[#allocation5 + $0x8] sm:$0xff]
      %v2495 = vld [vmem:[#allocation5 + $0x10] sm:$0xf]
      %v2496 = vld [vmem:[%s5] sm:$0xf]
      %v2497 = vld [vmem:[%s5 + $0x4] sm:$0xf]
      %v2498 = vld [vmem:[%s5 + $0x8] sm:$0xf]
      %v2499 = vld [vmem:[%s5 + $0xc] sm:$0xf]
      %v2500 = vld [vmem:[%s5 + $0x10] sm:$0xf]
      %v2501 = vld [vmem:[%s5 + $0x14] sm:$0xf]
      %v2502 = vld [vmem:[%s5 + $0x18] sm:$0xf]
      %v2503 = vld [vmem:[%s5 + $0x1c] sm:$0xf]
      %v2504 = vld [vmem:[%s5 + $0x20] sm:$0xf]
      %v2505 = vld [vmem:[%s5 + $0x24] sm:$0xf]
      %v2506 = vld [vmem:[%s5 + $0x28] sm:$0xf]
      %v2507 = vld [vmem:[%s5 + $0x2c] sm:$0xf]
      %v2508 = vld [vmem:[%s5 + $0x30] sm:$0xf]
      %v2509 = vld [vmem:[%s5 + $0x34] sm:$0xf]
      %v2510 = vld [vmem:[%s5 + $0x38] sm:$0xf]
      %v2511 = vld [vmem:[%s5 + $0x3c] sm:$0xf]
      %v2512 = vld [vmem:[%s5 + $0x40] sm:$0xf]
      %v2513 = vld [vmem:[%s5 + $0x44] sm:$0xf]
      %v2514 = vld [vmem:[%s5 + $0x48] sm:$0xf]
      %v2515 = vld [vmem:[%s5 + $0x4c] sm:$0xf]
      %v2516 = vld [vmem:[%s5 + $0x50] sm:$0xf]
      %v2517 = vld [vmem:[%s5 + $0x54] sm:$0xf]
      %v2518 = vld [vmem:[%s5 + $0x58] sm:$0xf]
      %v2519 = vld [vmem:[%s5 + $0x5c] sm:$0xf]
      %v2520 = vld [vmem:[%s5 + $0x60] sm:$0xf]
      %v2521 = vld [vmem:[%s5 + $0x64] sm:$0xf]
      %v2522 = vld [vmem:[%s5 + $0x68] sm:$0xf]
      %v2523 = vld [vmem:[%s5 + $0x6c] sm:$0xf]
      %v2524 = vld [vmem:[%s5 + $0x70] sm:$0xf]
      %v2525 = vld [vmem:[%s5 + $0x74] sm:$0xf]
      %v2526 = vld [vmem:[%s5 + $0x78] sm:$0xf]
      %v2527 = vld [vmem:[%s5 + $0x7c] sm:$0xf]
      %v2528 = vld [vmem:[%s5 + $0x80] sm:$0xf]
      %v2529 = vld [vmem:[%s5 + $0x84] sm:$0xf]
      %v2530 = vld [vmem:[%s5 + $0x88] sm:$0xf]
      %v2531 = vld [vmem:[%s5 + $0x8c] sm:$0xf]
      %v2532 = vld [vmem:[%s5 + $0x90] sm:$0xf]
      %v2533 = vld [vmem:[%s5 + $0x94] sm:$0xf]
      %v2534 = vld [vmem:[%s5 + $0x98] sm:$0xf]
      %v2535 = vld [vmem:[%s5 + $0x9c] sm:$0xf]
      %v2536 = vld [vmem:[%s5 + $0xa0] sm:$0xf]
      %v2537 = vld [vmem:[%s5 + $0xa4] sm:$0xf]
      %v2538 = vld [vmem:[%s5 + $0xa8] sm:$0xf]
      %v2539 = vld [vmem:[%s5 + $0xac] sm:$0xf]
      %v2540 = vld [vmem:[%s5 + $0xb0] sm:$0xf]
      %v2541 = vld [vmem:[%s5 + $0xb4] sm:$0xf]
      %v2542 = vld [vmem:[%s5 + $0xb8] sm:$0xf]
      %v2543 = vld [vmem:[%s5 + $0xbc] sm:$0xf]
      %v2544 = vld [vmem:[%s5 + $0xc0] sm:$0xf]
      %v2545 = vld [vmem:[%s5 + $0xc4] sm:$0xf]
      %v2546 = vld [vmem:[%s5 + $0xc8] sm:$0xf]
      %v2547 = vld [vmem:[%s5 + $0xcc] sm:$0xf]
      %v2548 = vld [vmem:[%s5 + $0xd0] sm:$0xf]
      %v2549 = vld [vmem:[%s5 + $0xd4] sm:$0xf]
      %v2550 = vld [vmem:[%s5 + $0xd8] sm:$0xf]
      %v2551 = vld [vmem:[%s5 + $0xdc] sm:$0xf]
      %v2552 = vld [vmem:[%s5 + $0xe0] sm:$0xf]
      %v2553 = vld [vmem:[%s5 + $0xe4] sm:$0xf]
      %v2554 = vld [vmem:[%s5 + $0xe8] sm:$0xf]
      %v2555 = vld [vmem:[%s5 + $0xec] sm:$0xf]
      %v2556 = vld [vmem:[%s5 + $0xf0] sm:$0xf]
      %v2557 = vld [vmem:[%s5 + $0xf4] sm:$0xf]
      %v2558 = vld [vmem:[%s5 + $0xf8] sm:$0xf]
      %v2559 = vld [vmem:[%s5 + $0xfc] sm:$0xf]
      %v2560 = vld [vmem:[%s5 + $0x100] sm:$0xf]
      %v2561 = vld [vmem:[%s5 + $0x104] sm:$0xf]
      %v2562 = vld [vmem:[%s5 + $0x108] sm:$0xf]
      %v2563 = vld [vmem:[%s5 + $0x10c] sm:$0xf]
      %v2564 = vld [vmem:[%s5 + $0x110] sm:$0xf]
      %v2565 = vld [vmem:[%s5 + $0x114] sm:$0xf]
      %v2566 = vld [vmem:[%s5 + $0x118] sm:$0xf]
      %v2567 = vld [vmem:[%s5 + $0x11c] sm:$0xf]
      %v2568 = vld [vmem:[%s6] sm:$0x1]
      %v2570 = vlaneseq
      %v2571 = vshrl.u32 %v2570, 7
      %v2572 = vsub.s32 0, %v2571
      %v2573 = vrot.slane %v2568, %v2572
      %v2578 = vunpack.c.l.b16 %v2493
      %v2579 = vunpack.c.h.b16 %v2493
      %v2580 = vunpack.c.l.b16 %v2494
      %v2581 = vunpack.c.h.b16 %v2494
      %v2582 = vunpack.c.l.b16 %v2495
      %v2583 = vpack.c.b16 %v2578, %v2578
      %v2584 = vpack.c.b16 %v2579, %v2579
      %v2585 = vpack.c.b16 %v2580, %v2580
      %v2586 = vpack.c.b16 %v2581, %v2581
      %v2587 = vpack.c.b16 %v2582, %v2582
      %v2664 = vunpack.c.l.b16 %v2496
      %v2665 = vunpack.c.l.b16 %v2497
      %v2666 = vunpack.c.l.b16 %v2498
      %v2667 = vunpack.c.l.b16 %v2499
      %v2668 = vunpack.c.l.b16 %v2500
      %v2669 = vunpack.c.l.b16 %v2501
      %v2670 = vunpack.c.l.b16 %v2502
      %v2671 = vunpack.c.l.b16 %v2503
      %v2672 = vunpack.c.l.b16 %v2504
      %v2673 = vunpack.c.l.b16 %v2505
      %v2674 = vunpack.c.l.b16 %v2506
      %v2675 = vunpack.c.l.b16 %v2507
      %v2676 = vunpack.c.l.b16 %v2508
      %v2677 = vunpack.c.l.b16 %v2509
      %v2678 = vunpack.c.l.b16 %v2510
      %v2679 = vunpack.c.l.b16 %v2511
      %v2680 = vunpack.c.l.b16 %v2512
      %v2681 = vunpack.c.l.b16 %v2513
      %v2682 = vunpack.c.l.b16 %v2514
      %v2683 = vunpack.c.l.b16 %v2515
      %v2684 = vunpack.c.l.b16 %v2516
      %v2685 = vunpack.c.l.b16 %v2517
      %v2686 = vunpack.c.l.b16 %v2518
      %v2687 = vunpack.c.l.b16 %v2519
      %v2688 = vunpack.c.l.b16 %v2520
      %v2689 = vunpack.c.l.b16 %v2521
      %v2690 = vunpack.c.l.b16 %v2522
      %v2691 = vunpack.c.l.b16 %v2523
      %v2692 = vunpack.c.l.b16 %v2524
      %v2693 = vunpack.c.l.b16 %v2525
      %v2694 = vunpack.c.l.b16 %v2526
      %v2695 = vunpack.c.l.b16 %v2527
      %v2696 = vunpack.c.l.b16 %v2528
      %v2697 = vunpack.c.l.b16 %v2529
      %v2698 = vunpack.c.l.b16 %v2530
      %v2699 = vunpack.c.l.b16 %v2531
      %v2700 = vunpack.c.l.b16 %v2532
      %v2701 = vunpack.c.l.b16 %v2533
      %v2702 = vunpack.c.l.b16 %v2534
      %v2703 = vunpack.c.l.b16 %v2535
      %v2704 = vunpack.c.l.b16 %v2536
      %v2705 = vunpack.c.l.b16 %v2537
      %v2706 = vunpack.c.l.b16 %v2538
      %v2707 = vunpack.c.l.b16 %v2539
      %v2708 = vunpack.c.l.b16 %v2540
      %v2709 = vunpack.c.l.b16 %v2541
      %v2710 = vunpack.c.l.b16 %v2542
      %v2711 = vunpack.c.l.b16 %v2543
      %v2712 = vunpack.c.l.b16 %v2544
      %v2713 = vunpack.c.l.b16 %v2545
      %v2714 = vunpack.c.l.b16 %v2546
      %v2715 = vunpack.c.l.b16 %v2547
      %v2716 = vunpack.c.l.b16 %v2548
      %v2717 = vunpack.c.l.b16 %v2549
      %v2718 = vunpack.c.l.b16 %v2550
      %v2719 = vunpack.c.l.b16 %v2551
      %v2720 = vunpack.c.l.b16 %v2552
      %v2721 = vunpack.c.l.b16 %v2553
      %v2722 = vunpack.c.l.b16 %v2554
      %v2723 = vunpack.c.l.b16 %v2555
      %v2724 = vunpack.c.l.b16 %v2556
      %v2725 = vunpack.c.l.b16 %v2557
      %v2726 = vunpack.c.l.b16 %v2558
      %v2727 = vunpack.c.l.b16 %v2559
      %v2728 = vunpack.c.l.b16 %v2560
      %v2729 = vunpack.c.l.b16 %v2561
      %v2730 = vunpack.c.l.b16 %v2562
      %v2731 = vunpack.c.l.b16 %v2563
      %v2732 = vunpack.c.l.b16 %v2564
      %v2733 = vunpack.c.l.b16 %v2565
      %v2734 = vunpack.c.l.b16 %v2566
      %v2735 = vunpack.c.l.b16 %v2567
      %v2736 = vpack.c.b16 %v2665, %v2664
      %v2737 = vpack.c.b16 %v2667, %v2666
      %v2738 = vpack.c.b16 %v2669, %v2668
      %v2739 = vpack.c.b16 %v2671, %v2670
      %v2740 = vpack.c.b16 %v2673, %v2672
      %v2741 = vpack.c.b16 %v2675, %v2674
      %v2742 = vpack.c.b16 %v2677, %v2676
      %v2743 = vpack.c.b16 %v2679, %v2678
      %v2744 = vpack.c.b16 %v2681, %v2680
      %v2745 = vpack.c.b16 %v2683, %v2682
      %v2746 = vpack.c.b16 %v2685, %v2684
      %v2747 = vpack.c.b16 %v2687, %v2686
      %v2748 = vpack.c.b16 %v2689, %v2688
      %v2749 = vpack.c.b16 %v2691, %v2690
      %v2750 = vpack.c.b16 %v2693, %v2692
      %v2751 = vpack.c.b16 %v2695, %v2694
      %v2752 = vpack.c.b16 %v2697, %v2696
      %v2753 = vpack.c.b16 %v2699, %v2698
      %v2754 = vpack.c.b16 %v2701, %v2700
      %v2755 = vpack.c.b16 %v2703, %v2702
      %v2756 = vpack.c.b16 %v2705, %v2704
      %v2757 = vpack.c.b16 %v2707, %v2706
      %v2758 = vpack.c.b16 %v2709, %v2708
      %v2759 = vpack.c.b16 %v2711, %v2710
      %v2760 = vpack.c.b16 %v2713, %v2712
      %v2761 = vpack.c.b16 %v2715, %v2714
      %v2762 = vpack.c.b16 %v2717, %v2716
      %v2763 = vpack.c.b16 %v2719, %v2718
      %v2764 = vpack.c.b16 %v2721, %v2720
      %v2765 = vpack.c.b16 %v2723, %v2722
      %v2766 = vpack.c.b16 %v2725, %v2724
      %v2767 = vpack.c.b16 %v2727, %v2726
      %v2768 = vpack.c.b16 %v2729, %v2728
      %v2769 = vpack.c.b16 %v2731, %v2730
      %v2770 = vpack.c.b16 %v2733, %v2732
      %v2771 = vpack.c.b16 %v2735, %v2734
      %vm2808 = vcmask 523264
      %v2810 = vsel %vm2808, %v2587, 0
      %2812 = vmatprep.subr.bf16.mxu0 0
      %2813 = vmatpush1.bf16.msra.mxu0 %v2736
      %2814 = vmatprep.subr.bf16.mxu0 0
      %2815 = vmatpush1.bf16.msra.mxu0 %v2737
      %2816 = vmatprep.subr.bf16.mxu0 0
      %2817 = vmatpush1.bf16.msra.mxu0 %v2738
      %2818 = vmatprep.subr.bf16.mxu0 0
      %2819 = vmatpush1.bf16.msra.mxu0 %v2739
      %2820 = vmatprep.subr.bf16.mxu0 0
      %2821 = vmatpush1.bf16.msra.mxu0 %v2740
      %2822 = vmatprep.subr.bf16.mxu0 0
      %2823 = vmatpush1.bf16.msra.mxu0 %v2741
      %2824 = vmatprep.subr.bf16.mxu0 0
      %2825 = vmatpush1.bf16.msra.mxu0 %v2742
      %2826 = vmatprep.subr.bf16.mxu0 0
      %2827 = vmatpush1.bf16.msra.mxu0 %v2743
      %2828 = vmatprep.subr.bf16.mxu0 0
      %2829 = vmatpush1.bf16.msra.mxu0 %v2744
      %2830 = vmatprep.subr.bf16.mxu0 0
      %2831 = vmatpush1.bf16.msra.mxu0 %v2745
      %2832 = vmatprep.subr.bf16.mxu0 0
      %2833 = vmatpush1.bf16.msra.mxu0 %v2746
      %2834 = vmatprep.subr.bf16.mxu0 0
      %2835 = vmatpush1.bf16.msra.mxu0 %v2747
      %2836 = vmatprep.subr.bf16.mxu0 0
      %2837 = vmatpush1.bf16.msra.mxu0 %v2748
      %2838 = vmatprep.subr.bf16.mxu0 0
      %2839 = vmatpush1.bf16.msra.mxu0 %v2749
      %2840 = vmatprep.subr.bf16.mxu0 0
      %2841 = vmatpush1.bf16.msra.mxu0 %v2750
      %2842 = vmatprep.subr.bf16.mxu0 0
      %2843 = vmatpush1.bf16.msra.mxu0 %v2751
      %2844 = vmatprep.mubr.bf16.mxu0 %v2584
      %2845 = vmatmul.mubr.bf16.gmra.mrb[0].mxu0 %v2583
      %v2846 = vpop.f32.mrb[0].mxu0
      %v2847 = vadd.f32 %v2573, %v2846
      %v2848 = vpop.f32.mrb[0].mxu0
      %v2849 = vpop.f32.mrb[0].mxu0
      %v2850 = vpop.f32.mrb[0].mxu0
      %2851 = vdwg.mxu0
      %2852 = vmatprep.subr.bf16.mxu0 0
      %2853 = vmatpush1.bf16.msra.mxu0 %v2752
      %2854 = vmatprep.subr.bf16.mxu0 0
      %2855 = vmatpush1.bf16.msra.mxu0 %v2753
      %2856 = vmatprep.subr.bf16.mxu0 0
      %2857 = vmatpush1.bf16.msra.mxu0 %v2754
      %2858 = vmatprep.subr.bf16.mxu0 0
      %2859 = vmatpush1.bf16.msra.mxu0 %v2755
      %2860 = vmatprep.subr.bf16.mxu0 0
      %2861 = vmatpush1.bf16.msra.mxu0 %v2756
      %2862 = vmatprep.subr.bf16.mxu0 0
      %2863 = vmatpush1.bf16.msra.mxu0 %v2757
      %2864 = vmatprep.subr.bf16.mxu0 0
      %2865 = vmatpush1.bf16.msra.mxu0 %v2758
      %2866 = vmatprep.subr.bf16.mxu0 0
      %2867 = vmatpush1.bf16.msra.mxu0 %v2759
      %2868 = vmatprep.subr.bf16.mxu0 0
      %2869 = vmatpush1.bf16.msra.mxu0 %v2760
      %2870 = vmatprep.subr.bf16.mxu0 0
      %2871 = vmatpush1.bf16.msra.mxu0 %v2761
      %2872 = vmatprep.subr.bf16.mxu0 0
      %2873 = vmatpush1.bf16.msra.mxu0 %v2762
      %2874 = vmatprep.subr.bf16.mxu0 0
      %2875 = vmatpush1.bf16.msra.mxu0 %v2763
      %2876 = vmatprep.subr.bf16.mxu0 0
      %2877 = vmatpush1.bf16.msra.mxu0 %v2764
      %2878 = vmatprep.subr.bf16.mxu0 0
      %2879 = vmatpush1.bf16.msra.mxu0 %v2765
      %2880 = vmatprep.subr.bf16.mxu0 0
      %2881 = vmatpush1.bf16.msra.mxu0 %v2766
      %2882 = vmatprep.subr.bf16.mxu0 0
      %2883 = vmatpush1.bf16.msra.mxu0 %v2767
      %2884 = vmatprep.mubr.bf16.mxu0 %v2586
      %2885 = vmatmul.mubr.bf16.gmra.mrb[0].mxu0 %v2585
      %v2886 = vpop.f32.mrb[0].mxu0
      %v2887 = vadd.f32 %v2847, %v2886
      %v2888 = vpop.f32.mrb[0].mxu0
      %v2889 = vpop.f32.mrb[0].mxu0
      %v2890 = vpop.f32.mrb[0].mxu0
      %2891 = vdwg.mxu0
      %2892 = vmatprep.subr.bf16.mxu0 0
      %2893 = vmatpush1.bf16.msra.mxu0 %v2768
      %2894 = vmatprep.subr.bf16.mxu0 0
      %2895 = vmatpush1.bf16.msra.mxu0 %v2769
      %2896 = vmatprep.subr.bf16.mxu0 0
      %2897 = vmatpush1.bf16.msra.mxu0 %v2770
      %2898 = vmatprep.subr.bf16.mxu0 0
      %2899 = vmatpush1.bf16.msra.mxu0 %v2771
      %2900 = vmatprep.subr.bf16.mxu0 0
      %2901 = vmatpush1.bf16.msra.mxu0 0
      %2902 = vmatprep.subr.bf16.mxu0 0
      %2903 = vmatpush1.bf16.msra.mxu0 0
      %2904 = vmatprep.subr.bf16.mxu0 0
      %2905 = vmatpush1.bf16.msra.mxu0 0
      %2906 = vmatprep.subr.bf16.mxu0 0
      %2907 = vmatpush1.bf16.msra.mxu0 0
      %2908 = vmatprep.subr.bf16.mxu0 0
      %2909 = vmatpush1.bf16.msra.mxu0 0
      %2910 = vmatprep.subr.bf16.mxu0 0
      %2911 = vmatpush1.bf16.msra.mxu0 0
      %2912 = vmatprep.subr.bf16.mxu0 0
      %2913 = vmatpush1.bf16.msra.mxu0 0
      %2914 = vmatprep.subr.bf16.mxu0 0
      %2915 = vmatpush1.bf16.msra.mxu0 0
      %2916 = vmatprep.subr.bf16.mxu0 0
      %2917 = vmatpush1.bf16.msra.mxu0 0
      %2918 = vmatprep.subr.bf16.mxu0 0
      %2919 = vmatpush1.bf16.msra.mxu0 0
      %2920 = vmatprep.subr.bf16.mxu0 0
      %2921 = vmatpush1.bf16.msra.mxu0 0
      %2922 = vmatprep.subr.bf16.mxu0 0
      %2923 = vmatpush1.bf16.msra.mxu0 0
      %2924 = vmatprep.mubr.bf16.mxu0 0
      %2925 = vmatmul.mubr.bf16.gmra.mrb[0].mxu0 %v2810
      %v2926 = vpop.f32.mrb[0].mxu0
      %v2927 = vadd.f32 %v2887, %v2926
      %v2928 = vpop.f32.mrb[0].mxu0
      %v2929 = vpop.f32.mrb[0].mxu0
      %v2930 = vpop.f32.mrb[0].mxu0
      %2931 = vdwg.mxu0
      %v2932 = vmul.f32 %v2927, 0.01
      %v2933 = vmax.f32 %v2927, %v2932
      %v2934 = vpack.c.bf16 %v2933, %v2933
      %2935 = vst.msk [vmem:[#allocation6] sm:$0xf] %vm2445, %v2934
      %v2936 = vld [vmem:[#allocation6] sm:$0xf]
      %v2937 = vld [vmem:[%s7] sm:$0xff]
      %v2938 = vld [vmem:[%s7 + $0x8] sm:$0xff]
      %v2939 = vld [vmem:[%s7 + $0x10] sm:$0xff]
      %v2940 = vld [vmem:[%s7 + $0x18] sm:$0xff]
      %v2941 = vld [vmem:[%s7 + $0x20] sm:$0xff]
      %v2942 = vld [vmem:[%s7 + $0x28] sm:$0xff]
      %v2943 = vld [vmem:[%s7 + $0x30] sm:$0xff]
      %v2944 = vld [vmem:[%s7 + $0x38] sm:$0xff]
      %v2945 = vld [vmem:[%s7 + $0x40] sm:$0xff]
      %v2946 = vld [vmem:[%s7 + $0x48] sm:$0xff]
      %v2947 = vld [vmem:[%s7 + $0x50] sm:$0xff]
      %v2948 = vld [vmem:[%s7 + $0x58] sm:$0xff]
      %v2949 = vld [vmem:[%s7 + $0x60] sm:$0xff]
      %v2950 = vld [vmem:[%s7 + $0x68] sm:$0xff]
      %v2951 = vld [vmem:[%s7 + $0x70] sm:$0xff]
      %v2952 = vld [vmem:[%s7 + $0x78] sm:$0xff]
      %v2953 = vld [vmem:[%s8] sm:$0xf]
      %v2955 = vlaneseq
      %v2956 = vshrl.u32 %v2955, 7
      %v2957 = vsub.s32 0, %v2956
      %v2958 = vrot.slane %v2953, %v2957
      %v2959 = vlaneseq
      %v2960 = vshrl.u32 %v2959, 7
      %v2961 = vsub.s32 1, %v2960
      %v2962 = vrot.slane %v2953, %v2961
      %v2963 = vlaneseq
      %v2964 = vshrl.u32 %v2963, 7
      %v2965 = vsub.s32 2, %v2964
      %v2966 = vrot.slane %v2953, %v2965
      %v2967 = vlaneseq
      %v2968 = vshrl.u32 %v2967, 7
      %v2969 = vsub.s32 3, %v2968
      %v2970 = vrot.slane %v2953, %v2969
      %v2991 = vunpack.c.l.b16 %v2937
      %v2992 = vunpack.c.h.b16 %v2937
      %v2993 = vunpack.c.l.b16 %v2938
      %v2994 = vunpack.c.h.b16 %v2938
      %v2995 = vunpack.c.l.b16 %v2939
      %v2996 = vunpack.c.h.b16 %v2939
      %v2997 = vunpack.c.l.b16 %v2940
      %v2998 = vunpack.c.h.b16 %v2940
      %v2999 = vunpack.c.l.b16 %v2941
      %v3000 = vunpack.c.h.b16 %v2941
      %v3001 = vunpack.c.l.b16 %v2942
      %v3002 = vunpack.c.h.b16 %v2942
      %v3003 = vunpack.c.l.b16 %v2943
      %v3004 = vunpack.c.h.b16 %v2943
      %v3005 = vunpack.c.l.b16 %v2944
      %v3006 = vunpack.c.h.b16 %v2944
      %v3007 = vunpack.c.l.b16 %v2945
      %v3008 = vunpack.c.h.b16 %v2945
      %v3009 = vunpack.c.l.b16 %v2946
      %v3010 = vunpack.c.h.b16 %v2946
      %v3011 = vunpack.c.l.b16 %v2947
      %v3012 = vunpack.c.h.b16 %v2947
      %v3013 = vunpack.c.l.b16 %v2948
      %v3014 = vunpack.c.h.b16 %v2948
      %v3015 = vunpack.c.l.b16 %v2949
      %v3016 = vunpack.c.h.b16 %v2949
      %v3017 = vunpack.c.l.b16 %v2950
      %v3018 = vunpack.c.h.b16 %v2950
      %v3019 = vunpack.c.l.b16 %v2951
      %v3020 = vunpack.c.h.b16 %v2951
      %v3021 = vunpack.c.l.b16 %v2952
      %v3022 = vunpack.c.h.b16 %v2952
      %v3023 = vpack.c.b16 %v2995, %v2991
      %v3024 = vpack.c.b16 %v2996, %v2992
      %v3025 = vpack.c.b16 %v2997, %v2993
      %v3026 = vpack.c.b16 %v2998, %v2994
      %v3027 = vpack.c.b16 %v3003, %v2999
      %v3028 = vpack.c.b16 %v3004, %v3000
      %v3029 = vpack.c.b16 %v3005, %v3001
      %v3030 = vpack.c.b16 %v3006, %v3002
      %v3031 = vpack.c.b16 %v3011, %v3007
      %v3032 = vpack.c.b16 %v3012, %v3008
      %v3033 = vpack.c.b16 %v3013, %v3009
      %v3034 = vpack.c.b16 %v3014, %v3010
      %v3035 = vpack.c.b16 %v3019, %v3015
      %v3036 = vpack.c.b16 %v3020, %v3016
      %v3037 = vpack.c.b16 %v3021, %v3017
      %v3038 = vpack.c.b16 %v3022, %v3018
      %v3056 = vsel %vm2808, %v2936, 0
      %3058 = vmatprep.subr.bf16.mxu0 %v3024
      %3059 = vmatpush1.bf16.msra.mxu0 %v3023
      %3060 = vmatprep.subr.bf16.mxu0 %v3028
      %3061 = vmatpush1.bf16.msra.mxu0 %v3027
      %3062 = vmatprep.subr.bf16.mxu0 %v3032
      %3063 = vmatpush1.bf16.msra.mxu0 %v3031
      %3064 = vmatprep.subr.bf16.mxu0 %v3036
      %3065 = vmatpush1.bf16.msra.mxu0 %v3035
      %3066 = vmatprep.subr.bf16.mxu0 0
      %3067 = vmatpush1.bf16.msra.mxu0 0
      %3068 = vmatprep.subr.bf16.mxu0 0
      %3069 = vmatpush1.bf16.msra.mxu0 0
      %3070 = vmatprep.subr.bf16.mxu0 0
      %3071 = vmatpush1.bf16.msra.mxu0 0
      %3072 = vmatprep.subr.bf16.mxu0 0
      %3073 = vmatpush1.bf16.msra.mxu0 0
      %3074 = vmatprep.subr.bf16.mxu0 0
      %3075 = vmatpush1.bf16.msra.mxu0 0
      %3076 = vmatprep.subr.bf16.mxu0 0
      %3077 = vmatpush1.bf16.msra.mxu0 0
      %3078 = vmatprep.subr.bf16.mxu0 0
      %3079 = vmatpush1.bf16.msra.mxu0 0
      %3080 = vmatprep.subr.bf16.mxu0 0
      %3081 = vmatpush1.bf16.msra.mxu0 0
      %3082 = vmatprep.subr.bf16.mxu0 0
      %3083 = vmatpush1.bf16.msra.mxu0 0
      %3084 = vmatprep.subr.bf16.mxu0 0
      %3085 = vmatpush1.bf16.msra.mxu0 0
      %3086 = vmatprep.subr.bf16.mxu0 0
      %3087 = vmatpush1.bf16.msra.mxu0 0
      %3088 = vmatprep.subr.bf16.mxu0 0
      %3089 = vmatpush1.bf16.msra.mxu0 0
      %3090 = vmatprep.mubr.bf16.mxu0 0
      %3091 = vmatmul.mubr.bf16.gmra.mrb[0].mxu0 %v3056
      %v3092 = vpop.f32.mrb[0].mxu0
      %v3093 = vadd.f32 %v2958, %v3092
      %v3094 = vpop.f32.mrb[0].mxu0
      %v3095 = vadd.f32 %v2962, %v3094
      %v3096 = vpop.f32.mrb[0].mxu0
      %v3097 = vpop.f32.mrb[0].mxu0
      %3098 = vdwg.mxu0
      %3099 = vmatprep.subr.bf16.mxu0 %v3026
      %3100 = vmatpush1.bf16.msra.mxu0 %v3025
      %3101 = vmatprep.subr.bf16.mxu0 %v3030
      %3102 = vmatpush1.bf16.msra.mxu0 %v3029
      %3103 = vmatprep.subr.bf16.mxu0 %v3034
      %3104 = vmatpush1.bf16.msra.mxu0 %v3033
      %3105 = vmatprep.subr.bf16.mxu0 %v3038
      %3106 = vmatpush1.bf16.msra.mxu0 %v3037
      %3107 = vmatprep.subr.bf16.mxu0 0
      %3108 = vmatpush1.bf16.msra.mxu0 0
      %3109 = vmatprep.subr.bf16.mxu0 0
      %3110 = vmatpush1.bf16.msra.mxu0 0
      %3111 = vmatprep.subr.bf16.mxu0 0
      %3112 = vmatpush1.bf16.msra.mxu0 0
      %3113 = vmatprep.subr.bf16.mxu0 0
      %3114 = vmatpush1.bf16.msra.mxu0 0
      %3115 = vmatprep.subr.bf16.mxu0 0
      %3116 = vmatpush1.bf16.msra.mxu0 0
      %3117 = vmatprep.subr.bf16.mxu0 0
      %3118 = vmatpush1.bf16.msra.mxu0 0
      %3119 = vmatprep.subr.bf16.mxu0 0
      %3120 = vmatpush1.bf16.msra.mxu0 0
      %3121 = vmatprep.subr.bf16.mxu0 0
      %3122 = vmatpush1.bf16.msra.mxu0 0
      %3123 = vmatprep.subr.bf16.mxu0 0
      %3124 = vmatpush1.bf16.msra.mxu0 0
      %3125 = vmatprep.subr.bf16.mxu0 0
      %3126 = vmatpush1.bf16.msra.mxu0 0
      %3127 = vmatprep.subr.bf16.mxu0 0
      %3128 = vmatpush1.bf16.msra.mxu0 0
      %3129 = vmatprep.subr.bf16.mxu0 0
      %3130 = vmatpush1.bf16.msra.mxu0 0
      %3131 = vmatprep.mubr.bf16.mxu0 0
      %3132 = vmatmul.mubr.bf16.gmra.mrb[0].mxu0 %v3056
      %v3133 = vpop.f32.mrb[0].mxu0
      %v3134 = vadd.f32 %v2966, %v3133
      %v3135 = vpop.f32.mrb[0].mxu0
      %v3136 = vadd.f32 %v2970, %v3135
      %v3137 = vpop.f32.mrb[0].mxu0
      %v3138 = vpop.f32.mrb[0].mxu0
      %3139 = vdwg.mxu0
      %v3140 = vmul.f32 %v3093, 0.01
      %v3141 = vmul.f32 %v3095, 0.01
      %v3142 = vmul.f32 %v3134, 0.01
      %v3143 = vmul.f32 %v3136, 0.01
      %v3144 = vmax.f32 %v3093, %v3140
      %v3145 = vmax.f32 %v3095, %v3141
      %v3146 = vmax.f32 %v3134, %v3142
      %v3147 = vmax.f32 %v3136, %v3143
      %v3148 = vpack.c.bf16 %v3144, %v3144
      %v3149 = vpack.c.bf16 %v3145, %v3145
      %v3150 = vpack.c.bf16 %v3146, %v3146
      %v3151 = vpack.c.bf16 %v3147, %v3147
      %v3152 = vld [vmem:[%s9] sm:$0xf]
      %v3153 = vld [vmem:[%s9 + $0x4] sm:$0xf]
      %v3154 = vld [vmem:[%s9 + $0x8] sm:$0xf]
      %v3155 = vld [vmem:[%s9 + $0xc] sm:$0xf]
      %v3156 = vld [vmem:[%s9 + $0x10] sm:$0xf]
      %v3157 = vld [vmem:[%s9 + $0x14] sm:$0xf]
      %v3158 = vld [vmem:[%s9 + $0x18] sm:$0xf]
      %v3159 = vld [vmem:[%s9 + $0x1c] sm:$0xf]
      %v3160 = vld [vmem:[%s9 + $0x20] sm:$0xf]
      %v3161 = vld [vmem:[%s9 + $0x24] sm:$0xf]
      %v3162 = vld [vmem:[%s9 + $0x28] sm:$0xf]
      %v3163 = vld [vmem:[%s9 + $0x2c] sm:$0xf]
      %v3164 = vld [vmem:[%s9 + $0x30] sm:$0xf]
      %v3165 = vld [vmem:[%s9 + $0x34] sm:$0xf]
      %v3166 = vld [vmem:[%s9 + $0x38] sm:$0xf]
      %v3167 = vld [vmem:[%s9 + $0x3c] sm:$0xf]
      %v3168 = vld [vmem:[%s9 + $0x40] sm:$0xf]
      %v3169 = vld [vmem:[%s9 + $0x44] sm:$0xf]
      %v3170 = vld [vmem:[%s9 + $0x48] sm:$0xf]
      %v3171 = vld [vmem:[%s9 + $0x4c] sm:$0xf]
      %v3172 = vld [vmem:[%s9 + $0x50] sm:$0xf]
      %v3173 = vld [vmem:[%s9 + $0x54] sm:$0xf]
      %v3174 = vld [vmem:[%s9 + $0x58] sm:$0xf]
      %v3175 = vld [vmem:[%s9 + $0x5c] sm:$0xf]
      %v3176 = vld [vmem:[%s9 + $0x60] sm:$0xf]
      %v3177 = vld [vmem:[%s9 + $0x64] sm:$0xf]
      %v3178 = vld [vmem:[%s9 + $0x68] sm:$0xf]
      %v3179 = vld [vmem:[%s9 + $0x6c] sm:$0xf]
      %v3180 = vld [vmem:[%s9 + $0x70] sm:$0xf]
      %v3181 = vld [vmem:[%s9 + $0x74] sm:$0xf]
      %v3182 = vld [vmem:[%s9 + $0x78] sm:$0xf]
      %v3183 = vld [vmem:[%s9 + $0x7c] sm:$0xf]
      %v3184 = vld [vmem:[%s9 + $0x80] sm:$0xf]
      %v3185 = vld [vmem:[%s9 + $0x84] sm:$0xf]
      %v3186 = vld [vmem:[%s9 + $0x88] sm:$0xf]
      %v3187 = vld [vmem:[%s9 + $0x8c] sm:$0xf]
      %v3188 = vld [vmem:[%s9 + $0x90] sm:$0xf]
      %v3189 = vld [vmem:[%s9 + $0x94] sm:$0xf]
      %v3190 = vld [vmem:[%s9 + $0x98] sm:$0xf]
      %v3191 = vld [vmem:[%s9 + $0x9c] sm:$0xf]
      %v3192 = vld [vmem:[%s9 + $0xa0] sm:$0xf]
      %v3193 = vld [vmem:[%s9 + $0xa4] sm:$0xf]
      %v3194 = vld [vmem:[%s9 + $0xa8] sm:$0xf]
      %v3195 = vld [vmem:[%s9 + $0xac] sm:$0xf]
      %v3196 = vld [vmem:[%s9 + $0xb0] sm:$0xf]
      %v3197 = vld [vmem:[%s9 + $0xb4] sm:$0xf]
      %v3198 = vld [vmem:[%s9 + $0xb8] sm:$0xf]
      %v3199 = vld [vmem:[%s9 + $0xbc] sm:$0xf]
      %v3200 = vld [vmem:[%s9 + $0xc0] sm:$0xf]
      %v3201 = vld [vmem:[%s9 + $0xc4] sm:$0xf]
      %v3202 = vld [vmem:[%s9 + $0xc8] sm:$0xf]
      %v3203 = vld [vmem:[%s9 + $0xcc] sm:$0xf]
      %v3204 = vld [vmem:[%s9 + $0xd0] sm:$0xf]
      %v3205 = vld [vmem:[%s9 + $0xd4] sm:$0xf]
      %v3206 = vld [vmem:[%s9 + $0xd8] sm:$0xf]
      %v3207 = vld [vmem:[%s9 + $0xdc] sm:$0xf]
      %v3208 = vld [vmem:[%s9 + $0xe0] sm:$0xf]
      %v3209 = vld [vmem:[%s9 + $0xe4] sm:$0xf]
      %v3210 = vld [vmem:[%s9 + $0xe8] sm:$0xf]
      %v3211 = vld [vmem:[%s9 + $0xec] sm:$0xf]
      %v3212 = vld [vmem:[%s9 + $0xf0] sm:$0xf]
      %v3213 = vld [vmem:[%s9 + $0xf4] sm:$0xf]
      %v3214 = vld [vmem:[%s9 + $0xf8] sm:$0xf]
      %v3215 = vld [vmem:[%s9 + $0xfc] sm:$0xf]
      %v3216 = vld [vmem:[%s10] sm:$0x1]
      %v3218 = vlaneseq
      %v3219 = vshrl.u32 %v3218, 7
      %v3220 = vsub.s32 0, %v3219
      %v3221 = vrot.slane %v3216, %v3220
      %v3287 = vunpack.c.l.b16 %v3152
      %v3288 = vunpack.c.l.b16 %v3153
      %v3289 = vunpack.c.l.b16 %v3154
      %v3290 = vunpack.c.l.b16 %v3155
      %v3291 = vunpack.c.l.b16 %v3156
      %v3292 = vunpack.c.l.b16 %v3157
      %v3293 = vunpack.c.l.b16 %v3158
      %v3294 = vunpack.c.l.b16 %v3159
      %v3295 = vunpack.c.l.b16 %v3160
      %v3296 = vunpack.c.l.b16 %v3161
      %v3297 = vunpack.c.l.b16 %v3162
      %v3298 = vunpack.c.l.b16 %v3163
      %v3299 = vunpack.c.l.b16 %v3164
      %v3300 = vunpack.c.l.b16 %v3165
      %v3301 = vunpack.c.l.b16 %v3166
      %v3302 = vunpack.c.l.b16 %v3167
      %v3303 = vunpack.c.l.b16 %v3168
      %v3304 = vunpack.c.l.b16 %v3169
      %v3305 = vunpack.c.l.b16 %v3170
      %v3306 = vunpack.c.l.b16 %v3171
      %v3307 = vunpack.c.l.b16 %v3172
      %v3308 = vunpack.c.l.b16 %v3173
      %v3309 = vunpack.c.l.b16 %v3174
      %v3310 = vunpack.c.l.b16 %v3175
      %v3311 = vunpack.c.l.b16 %v3176
      %v3312 = vunpack.c.l.b16 %v3177
      %v3313 = vunpack.c.l.b16 %v3178
      %v3314 = vunpack.c.l.b16 %v3179
      %v3315 = vunpack.c.l.b16 %v3180
      %v3316 = vunpack.c.l.b16 %v3181
      %v3317 = vunpack.c.l.b16 %v3182
      %v3318 = vunpack.c.l.b16 %v3183
      %v3319 = vunpack.c.l.b16 %v3184
      %v3320 = vunpack.c.l.b16 %v3185
      %v3321 = vunpack.c.l.b16 %v3186
      %v3322 = vunpack.c.l.b16 %v3187
      %v3323 = vunpack.c.l.b16 %v3188
      %v3324 = vunpack.c.l.b16 %v3189
      %v3325 = vunpack.c.l.b16 %v3190
      %v3326 = vunpack.c.l.b16 %v3191
      %v3327 = vunpack.c.l.b16 %v3192
      %v3328 = vunpack.c.l.b16 %v3193
      %v3329 = vunpack.c.l.b16 %v3194
      %v3330 = vunpack.c.l.b16 %v3195
      %v3331 = vunpack.c.l.b16 %v3196
      %v3332 = vunpack.c.l.b16 %v3197
      %v3333 = vunpack.c.l.b16 %v3198
      %v3334 = vunpack.c.l.b16 %v3199
      %v3335 = vunpack.c.l.b16 %v3200
      %v3336 = vunpack.c.l.b16 %v3201
      %v3337 = vunpack.c.l.b16 %v3202
      %v3338 = vunpack.c.l.b16 %v3203
      %v3339 = vunpack.c.l.b16 %v3204
      %v3340 = vunpack.c.l.b16 %v3205
      %v3341 = vunpack.c.l.b16 %v3206
      %v3342 = vunpack.c.l.b16 %v3207
      %v3343 = vunpack.c.l.b16 %v3208
      %v3344 = vunpack.c.l.b16 %v3209
      %v3345 = vunpack.c.l.b16 %v3210
      %v3346 = vunpack.c.l.b16 %v3211
      %v3347 = vunpack.c.l.b16 %v3212
      %v3348 = vunpack.c.l.b16 %v3213
      %v3349 = vunpack.c.l.b16 %v3214
      %v3350 = vunpack.c.l.b16 %v3215
      %v3351 = vpack.c.b16 %v3288, %v3287
      %v3352 = vpack.c.b16 %v3290, %v3289
      %v3353 = vpack.c.b16 %v3292, %v3291
      %v3354 = vpack.c.b16 %v3294, %v3293
      %v3355 = vpack.c.b16 %v3296, %v3295
      %v3356 = vpack.c.b16 %v3298, %v3297
      %v3357 = vpack.c.b16 %v3300, %v3299
      %v3358 = vpack.c.b16 %v3302, %v3301
      %v3359 = vpack.c.b16 %v3304, %v3303
      %v3360 = vpack.c.b16 %v3306, %v3305
      %v3361 = vpack.c.b16 %v3308, %v3307
      %v3362 = vpack.c.b16 %v3310, %v3309
      %v3363 = vpack.c.b16 %v3312, %v3311
      %v3364 = vpack.c.b16 %v3314, %v3313
      %v3365 = vpack.c.b16 %v3316, %v3315
      %v3366 = vpack.c.b16 %v3318, %v3317
      %v3367 = vpack.c.b16 %v3320, %v3319
      %v3368 = vpack.c.b16 %v3322, %v3321
      %v3369 = vpack.c.b16 %v3324, %v3323
      %v3370 = vpack.c.b16 %v3326, %v3325
      %v3371 = vpack.c.b16 %v3328, %v3327
      %v3372 = vpack.c.b16 %v3330, %v3329
      %v3373 = vpack.c.b16 %v3332, %v3331
      %v3374 = vpack.c.b16 %v3334, %v3333
      %v3375 = vpack.c.b16 %v3336, %v3335
      %v3376 = vpack.c.b16 %v3338, %v3337
      %v3377 = vpack.c.b16 %v3340, %v3339
      %v3378 = vpack.c.b16 %v3342, %v3341
      %v3379 = vpack.c.b16 %v3344, %v3343
      %v3380 = vpack.c.b16 %v3346, %v3345
      %v3381 = vpack.c.b16 %v3348, %v3347
      %v3382 = vpack.c.b16 %v3350, %v3349
      %3415 = vmatprep.subr.bf16.mxu0 0
      %3416 = vmatpush1.bf16.msra.mxu0 %v3351
      %3417 = vmatprep.subr.bf16.mxu0 0
      %3418 = vmatpush1.bf16.msra.mxu0 %v3352
      %3419 = vmatprep.subr.bf16.mxu0 0
      %3420 = vmatpush1.bf16.msra.mxu0 %v3353
      %3421 = vmatprep.subr.bf16.mxu0 0
      %3422 = vmatpush1.bf16.msra.mxu0 %v3354
      %3423 = vmatprep.subr.bf16.mxu0 0
      %3424 = vmatpush1.bf16.msra.mxu0 %v3355
      %3425 = vmatprep.subr.bf16.mxu0 0
      %3426 = vmatpush1.bf16.msra.mxu0 %v3356
      %3427 = vmatprep.subr.bf16.mxu0 0
      %3428 = vmatpush1.bf16.msra.mxu0 %v3357
      %3429 = vmatprep.subr.bf16.mxu0 0
      %3430 = vmatpush1.bf16.msra.mxu0 %v3358
      %3431 = vmatprep.subr.bf16.mxu0 0
      %3432 = vmatpush1.bf16.msra.mxu0 %v3359
      %3433 = vmatprep.subr.bf16.mxu0 0
      %3434 = vmatpush1.bf16.msra.mxu0 %v3360
      %3435 = vmatprep.subr.bf16.mxu0 0
      %3436 = vmatpush1.bf16.msra.mxu0 %v3361
      %3437 = vmatprep.subr.bf16.mxu0 0
      %3438 = vmatpush1.bf16.msra.mxu0 %v3362
      %3439 = vmatprep.subr.bf16.mxu0 0
      %3440 = vmatpush1.bf16.msra.mxu0 %v3363
      %3441 = vmatprep.subr.bf16.mxu0 0
      %3442 = vmatpush1.bf16.msra.mxu0 %v3364
      %3443 = vmatprep.subr.bf16.mxu0 0
      %3444 = vmatpush1.bf16.msra.mxu0 %v3365
      %3445 = vmatprep.subr.bf16.mxu0 0
      %3446 = vmatpush1.bf16.msra.mxu0 %v3366
      %3447 = vmatprep.mubr.bf16.mxu0 %v3149
      %3448 = vmatmul.mubr.bf16.gmra.mrb[0].mxu0 %v3148
      %v3449 = vpop.f32.mrb[0].mxu0
      %v3450 = vadd.f32 %v3221, %v3449
      %v3451 = vpop.f32.mrb[0].mxu0
      %v3452 = vpop.f32.mrb[0].mxu0
      %v3453 = vpop.f32.mrb[0].mxu0
      %3454 = vdwg.mxu0
      %3455 = vmatprep.subr.bf16.mxu0 0
      %3456 = vmatpush1.bf16.msra.mxu0 %v3367
      %3457 = vmatprep.subr.bf16.mxu0 0
      %3458 = vmatpush1.bf16.msra.mxu0 %v3368
      %3459 = vmatprep.subr.bf16.mxu0 0
      %3460 = vmatpush1.bf16.msra.mxu0 %v3369
      %3461 = vmatprep.subr.bf16.mxu0 0
      %3462 = vmatpush1.bf16.msra.mxu0 %v3370
      %3463 = vmatprep.subr.bf16.mxu0 0
      %3464 = vmatpush1.bf16.msra.mxu0 %v3371
      %3465 = vmatprep.subr.bf16.mxu0 0
      %3466 = vmatpush1.bf16.msra.mxu0 %v3372
      %3467 = vmatprep.subr.bf16.mxu0 0
      %3468 = vmatpush1.bf16.msra.mxu0 %v3373
      %3469 = vmatprep.subr.bf16.mxu0 0
      %3470 = vmatpush1.bf16.msra.mxu0 %v3374
      %3471 = vmatprep.subr.bf16.mxu0 0
      %3472 = vmatpush1.bf16.msra.mxu0 %v3375
      %3473 = vmatprep.subr.bf16.mxu0 0
      %3474 = vmatpush1.bf16.msra.mxu0 %v3376
      %3475 = vmatprep.subr.bf16.mxu0 0
      %3476 = vmatpush1.bf16.msra.mxu0 %v3377
      %3477 = vmatprep.subr.bf16.mxu0 0
      %3478 = vmatpush1.bf16.msra.mxu0 %v3378
      %3479 = vmatprep.subr.bf16.mxu0 0
      %3480 = vmatpush1.bf16.msra.mxu0 %v3379
      %3481 = vmatprep.subr.bf16.mxu0 0
      %3482 = vmatpush1.bf16.msra.mxu0 %v3380
      %3483 = vmatprep.subr.bf16.mxu0 0
      %3484 = vmatpush1.bf16.msra.mxu0 %v3381
      %3485 = vmatprep.subr.bf16.mxu0 0
      %3486 = vmatpush1.bf16.msra.mxu0 %v3382
      %3487 = vmatprep.mubr.bf16.mxu0 %v3151
      %3488 = vmatmul.mubr.bf16.gmra.mrb[0].mxu0 %v3150
      %v3489 = vpop.f32.mrb[0].mxu0
      %v3490 = vadd.f32 %v3450, %v3489
      %v3491 = vpop.f32.mrb[0].mxu0
      %v3492 = vpop.f32.mrb[0].mxu0
      %v3493 = vpop.f32.mrb[0].mxu0
      %3494 = vdwg.mxu0
      %3495 = vst [vmem:[%s389] sm:$0xff] %v3490
      %p3496 = scmp.lt.s32.totalorder %s22, 1
      %s3497 = scalar_select %p3496, %s22, 1
      %s3498 = smul.addr %s3497, 8
      %s3499 = scalar_lea.vmem %s11, %s3498
      // Predicated region
      $region65: #{a_call__.1} parent=63 // pred_check
        %p3500 = pneg %p276
      $region66: #{a_call__.1} parent=63 // pred_check_branch
        %3502 = sbr.rel (%p3500) target = $region68
      $region67: #{a_call__.1} parent=63 // pred_region
        _
      $region68: #{a_call__.1} parent=63 // pred_fallthru
        _
    $region64: #{a_call__.1} parent=5 // pred_fallthru
      _
    %p3503 = scmp.le.s32.totalorder 2, %s17
    // Predicated region
    $region69: #{a_call__.1} parent=5 // pred_check
      %p3504 = pneg %p3503
    $region70: #{a_call__.1} parent=5 // pred_check_branch
      %3506 = sbr.rel (%p3504) target = $region72
    $region71: #{a_call__.1} parent=5 // pred_region
      %s3507 = ssub.s32 %s17, 2
      // Predicated region
      $region73: #{a_call__.1} parent=71 // pred_check
        %p3508 = pneg %p282
      $region74: #{a_call__.1} parent=71 // pred_check_branch
        %3510 = sbr.rel (%p3508) target = $region76
      $region75: #{a_call__.1} parent=71 // pred_region
        %p3511 = scmp.lt.s32.totalorder %s23, 1
        %s3512 = scalar_select %p3511, %s23, 1
        %s3513 = smul.addr %s3512, 8
        %s3514 = scalar_lea.vmem %s11, %s3513
      $region76: #{a_call__.1} parent=71 // pred_fallthru
        _
    $region72: #{a_call__.1} parent=5 // pred_fallthru
      _
  $region6: #{a_call__.1} parent=0 // loop_footer
    %s21 = sadd.s32 1, %s17
  $region7: #{a_call__.1} parent=0 // loop_footer_branch
    %16 = sbr.rel target = $region3
  $region8: #{a_call__.1} parent=0 // loop_exit
    _

</llo_original>
